<compile_context>
chip_gen: v7x
topology: tpu7x:2x2x1
jax: 0.10.0
libtpu: 0.0.40
codegen_flags: <defaults>
</compile_context>

<pallas_src>
import jax
import jax.numpy as jnp
import numpy as np
from jax import lax
from jax.experimental import pallas as pl
from jax.experimental.pallas import tpu as pltpu

jax.config.update("jax_default_matmul_precision", "highest")  # affects the f32 reference

INIT_SCALE = 0.01
_EPS = 1e-30
_EXP_CLAMP = 40.0  # exp(x) and exp(x)^2 both stay finite in f32


# ----------------------------- kernel helpers -----------------------------
def _bf16(x):
    return x.astype(jnp.bfloat16)


def _mm(a, b):
    # 2-D matmul, bf16 operands, f32 accumulation (explicit DEFAULT precision so the
    # global "highest" setting never forces multi-pass emulation inside the kernel).
    return jnp.dot(a, b, preferred_element_type=jnp.float32,
                   precision=lax.Precision.DEFAULT)


def _bmm_nt(a, b):
    # batched a @ b^T over leading dim: (G, M, K), (G, N, K) -> (G, M, N)
    return lax.dot_general(a, b, (((2,), (2,)), ((0,), (0,))),
                           preferred_element_type=jnp.float32,
                           precision=lax.Precision.DEFAULT)


def _bmm_nn(a, b):
    # batched a @ b over leading dim: (G, M, K), (G, K, N) -> (G, M, N)
    return lax.dot_general(a, b, (((2,), (1,)), ((0,), (0,))),
                           preferred_element_type=jnp.float32,
                           precision=lax.Precision.DEFAULT)


# ------------------------------ Pallas kernel ------------------------------
def _make_kernel(BT, C, W, H):
    hw = W // H
    R = BT * C          # rows per grid step
    G = H * BT          # fused (head, batch) group count for the retention core

    def kernel(lat_re_ref, lat_im_ref, wqkv_ref, th_re_ref, th_im_ref, d2_ref,
               wg_ref, wo_ref, w1_ref, w2_ref, out_re_ref, out_im_ref):
        lr = lat_re_ref[...].reshape(R, W)
        li = lat_im_ref[...].reshape(R, W)

        # ---- pre-norm 1: latent / ||latent|| (complex 2-norm over last dim) ----
        inv_n0 = lax.rsqrt(jnp.sum(lr * lr + li * li, axis=-1, keepdims=True) + _EPS)
        xr = lr * inv_n0
        xi = li * inv_n0

        # ---- block-diagonal Q/K/V projections, real/imag rows stacked (2R x W) ----
        X = _bf16(jnp.concatenate([xr, xi], axis=0))                  # (2R, W)
        PQ = _mm(X, wqkv_ref[0])                                      # (2R, W) f32
        PK = _mm(X, wqkv_ref[1])
        PV = _mm(X, wqkv_ref[2])

        # Theta broadcast in-kernel (wrapper passes it once, untiled).
        thr = jnp.tile(th_re_ref[...], (BT, 1))                       # (R, W) cos(c*theta)
        thi = jnp.tile(th_im_ref[...], (BT, 1))                       # (R, W) sin(c*theta)

        pq_r, pq_i = PQ[:R], PQ[R:]
        pk_r, pk_i = PK[:R], PK[R:]
        v_r, v_i = PV[:R], PV[R:]

        q_r = pq_r * thr - pq_i * thi                                 # Q = proj * Theta
        q_i = pq_r * thi + pq_i * thr
        k_r = pk_r * thr + pk_i * thi                                 # K = proj * conj(Theta)
        k_i = pk_i * thr - pk_r * thi

        def to_heads(a):
            # (R, W) -> (G, C, hw) with group index g = h*BT + b.  Implemented with
            # static slices + a single concat/reshape (Mosaic-safe; no 4-D transpose).
            parts = [a[:, h * hw:(h + 1) * hw] for h in range(H)]
            return jnp.concatenate(parts, axis=0).reshape(G, C, hw)

        Qr, Qi = to_heads(q_r), to_heads(q_i)
        Kr, Ki = to_heads(k_r), to_heads(k_i)
        Vr, Vi = to_heads(v_r), to_heads(v_i)

        # ---- retention core: 2 batched complex-concat matmuls over all (b, h) ----
        A = _bf16(jnp.concatenate([Qr, Qi], axis=2))                  # (G, C, 2hw)
        Bk = _bf16(jnp.concatenate(
            [jnp.concatenate([Kr, -Ki], axis=2),
             jnp.concatenate([Ki, Kr], axis=2)], axis=1))             # (G, 2C, 2hw)
        QK = _bmm_nt(A, Bk)                                           # (G, C, 2C) [re | im]

        # decay / qk_scale, duplicated along the last axis for the [re | im] layout
        d2 = jnp.broadcast_to(d2_ref[...][:, None],
                              (H, BT, C, 2 * C)).reshape(G, C, 2 * C)
        QKD = QK * d2

        VB = _bf16(jnp.concatenate(
            [jnp.concatenate([Vr, Vi], axis=2),
             jnp.concatenate([-Vi, Vr], axis=2)], axis=1))            # (G, 2C, 2hw)
        OH = _bmm_nn(_bf16(QKD), VB)                                  # (G, C, 2hw) [re | im]

        # per-(b, h, c) complex norm: |z|^2 is the plain sum over the [re|im] concat
        inv_nrm = lax.rsqrt(jnp.sum(OH * OH, axis=-1, keepdims=True) + _EPS)
        OHn = OH * inv_nrm

        def from_heads(a):
            # (G, C, hw) -> (R, W): per-head lane concat (inverse of to_heads)
            a2 = a.reshape(H, R, hw)
            return jnp.concatenate([a2[h] for h in range(H)], axis=1)

        ohr = from_heads(OHn[..., :hw])                               # (R, W)
        ohi = from_heads(OHn[..., hw:])
        # NOTE: torch's target_norm einsum result is immediately overwritten -> omitted.

        # ---- gating: g = oh @ W_G ; oh *= g / (1 + exp(-2g)) ----
        OH2 = _bf16(jnp.concatenate([ohr, ohi], axis=0))              # (2R, W)
        Gm = _mm(OH2, wg_ref[...])                                    # (2R, W) f32
        gr, gi = Gm[:R], Gm[R:]
        m = jnp.exp(jnp.minimum(-2.0 * gr, _EXP_CLAMP))
        c2 = jnp.cos(2.0 * gi)
        s2 = jnp.sin(2.0 * gi)
        dr = 1.0 + m * c2                                             # real(1 + exp(-2g))
        di = -(m * s2)                                                # imag(1 + exp(-2g))
        inv_d2 = pl.reciprocal(1.0 + 2.0 * m * c2 + m * m, approx=True)  # |1+exp(-2g)|^-2
        fr = (gr * dr + gi * di) * inv_d2                             # g / (1 + exp(-2g))
        fi = (gi * dr - gr * di) * inv_d2
        o2r = ohr * fr - ohi * fi
        o2i = ohr * fi + ohi * fr

        # ---- output projection + residual ----
        O2 = _bf16(jnp.concatenate([o2r, o2i], axis=0))               # (2R, W)
        RES = _mm(O2, wo_ref[...])                                    # (2R, W)
        l1r = lr + RES[:R]
        l1i = li + RES[R:]

        # ---- pre-norm 2 + complex "SiLU" MLP + residual ----
        inv_n1 = lax.rsqrt(jnp.sum(l1r * l1r + l1i * l1i, axis=-1, keepdims=True) + _EPS)
        Mx = _bf16(jnp.concatenate([l1r * inv_n1, l1i * inv_n1], axis=0))  # (2R, W)
        Hh = _mm(Mx, w1_ref[...])                                     # (2R, 4W) f32
        h_r, h_i = Hh[:R], Hh[R:]
        e = jnp.exp(jnp.minimum(-h_r, _EXP_CLAMP))
        cc = jnp.cos(h_i)
        ss = jnp.sin(h_i)
        sdr = 1.0 + e * cc                                            # real(1 + exp(-x))
        sdi = -(e * ss)                                               # imag(1 + exp(-x))
        inv_sd2 = pl.reciprocal(1.0 + 2.0 * e * cc + e * e, approx=True)
        x2r = (h_r * sdr + h_i * sdi) * inv_sd2                       # x / (1 + exp(-x))
        x2i = (h_i * sdr - h_r * sdi) * inv_sd2

        X2 = _bf16(jnp.concatenate([x2r, x2i], axis=0))               # (2R, W)
        Y = _mm(X2, w2_ref[...])                                      # (2R, W)
        out_re_ref[...] = (l1r + Y[:R]).reshape(out_re_ref.shape)
        out_im_ref[...] = (l1i + Y[R:]).reshape(out_im_ref.shape)

    return kernel


# ------------------------------ wrapper (glue) ------------------------------
def _pick_block_batch(B, block_batch):
    bt = max(1, min(block_batch, B))
    while B % bt:
        bt -= 1
    # prefer >= 2 grid steps so the "parallel" axis can shard across v7x's two TCs
    if B // bt < 2:
        for cand in range(bt, 0, -1):
            if B % cand == 0 and B // cand >= 2:
                return cand
    return bt


def retnet_layer_forward(lat_re, lat_im, params, block_batch=8):
    B, C, W = lat_re.shape
    H, hw, _ = params["W_Q"].shape
    assert W == H * hw
    BT = _pick_block_batch(B, block_batch)
    R = BT * C
    qk_scale = float(hw) ** 0.5

    # decay D[h,c,d] = gamma_h^(c-d) for c>=d else 0 (stable exp/log form), duplicated
    # along the last axis for the [re | im] QK column layout, pre-divided by qk_scale.
    idx = jnp.arange(C, dtype=jnp.float32)
    delta = idx[:, None] - idx[None, :]
    mask = (delta >= 0)[None]
    log_g = jnp.log(params["gamma"].astype(jnp.float32))[:, None, None]
    D = jnp.where(mask, jnp.exp(jnp.where(mask, delta[None], 0.0) * log_g), 0.0)
    D2 = (jnp.concatenate([D, D], axis=-1) / qk_scale).astype(jnp.float32)  # (H, C, 2C)

    # rotation Theta as (C, W): column h*hw + j holds cos/sin(c * theta[h, j])
    theta_flat = params["theta"].reshape(W)
    ang = idx[:, None] * theta_flat[None, :]
    th_re = jnp.cos(ang).astype(jnp.float32)
    th_im = jnp.sin(ang).astype(jnp.float32)

    def blockdiag(w):                                        # (H, hw, hw) -> (W, W)
        eye = jnp.eye(H, dtype=w.dtype)
        return jnp.einsum('hg,hij->higj', eye, w).reshape(W, W)

    wqkv = jnp.stack([blockdiag(params["W_Q"]),
                      blockdiag(params["W_K"]),
                      blockdiag(params["W_V"])], axis=0).astype(jnp.bfloat16)  # (3, W, W)
    wg = params["W_G"].reshape(W, W).astype(jnp.bfloat16)
    wo = params["W_O"].reshape(W, W).astype(jnp.bfloat16)
    w1 = params["linear1"].astype(jnp.bfloat16)
    w2 = params["linear2"].astype(jnp.bfloat16)

    kernel = _make_kernel(BT, C, W, H)

    # advisory cost for XLA's scheduler around the fused call
    Rt = B * C
    cost = pl.CostEstimate(
        flops=int(52 * Rt * W * W + 16 * B * C * C * W),
        transcendentals=int(15 * Rt * W),
        bytes_accessed=int(16 * Rt * W + 26 * W * W
                           + 4 * (2 * C * W + 2 * H * C * C)))

    # explicit VMEM budget, capped per detected chip (v7x has only 64 MiB physical)
    try:
        vmem_cap = int(pltpu.get_tpu_info().vmem_capacity_bytes)
    except Exception:
        vmem_cap = 64 * 1024 * 1024
    vmem_est = 4 * (200 * R * W + 40 * R * 4 * W) + 2 * 13 * W * W + 16 * BT * C * W * 4
    vmem_limit = int(min(max(2 * vmem_est, 32 * 1024 * 1024), int(0.75 * vmem_cap)))

    def run(lane_dense, single_buffer_weights):
        if lane_dense:
            io_shape = (B, 1, C * W)        # lane-dense: last dim is a multiple of 128
            blk = (BT, 1, C * W)
        else:
            io_shape = (B, C, W)            # conservative fallback layout
            blk = (BT, C, W)
        lat_spec = pl.BlockSpec(blk, lambda b: (b, 0, 0))

        def const_spec(shape):
            n = len(shape)
            idx_map = lambda b, _n=n: (0,) * _n
            if single_buffer_weights:
                # constant index map -> double buffering only wastes VMEM
                return pl.BlockSpec(shape, idx_map, pipeline_mode=pl.Buffered(1))
            return pl.BlockSpec(shape, idx_map)

        grid_spec = pltpu.PrefetchScalarGridSpec(
            num_scalar_prefetch=0,
            grid=(B // BT,),
            in_specs=[
                lat_spec, lat_spec,
                const_spec((3, W, W)),
                const_spec((C, W)), const_spec((C, W)),
                const_spec((H, C, 2 * C)),
                const_spec((W, W)), const_spec((W, W)),
                const_spec((W, 4 * W)), const_spec((4 * W, W)),
            ],
            out_specs=[lat_spec, lat_spec],
            scratch_shapes=[],
        )
        fn = pl.pallas_call(
            kernel,
            grid_spec=grid_spec,
            out_shape=[jax.ShapeDtypeStruct(io_shape, jnp.float32),
                       jax.ShapeDtypeStruct(io_shape, jnp.float32)],
            compiler_params=pltpu.CompilerParams(
                dimension_semantics=("parallel",),
                vmem_limit_bytes=vmem_limit),
            cost_estimate=cost,
        )
        o_re, o_im = fn(lat_re.reshape(io_shape), lat_im.reshape(io_shape),
                        wqkv, th_re, th_im, D2, wg, wo, w1, w2)
        return o_re.reshape(B, C, W), o_im.reshape(B, C, W)

    # Preferred config first; fall back if a given Mosaic build rejects the lane-dense
    # edge reshape or Buffered(1) (keeps the kernel runnable everywhere).
    attempts = [(True, True), (True, False), (False, False)]
    last_err = None
    for lane_dense, single_buf in attempts:
        try:
            out = run(lane_dense, single_buf)
            jax.block_until_ready(out)
            return out
        except Exception as e:      # lowering/compile rejection -> try next config
            last_err = e
    raise last_err


# ------------------------- deterministic parameter init -------------------------
def init_params(key, head_width, num_heads):
    W = head_width * num_heads
    ks = jax.random.split(key, 8)
    rnd = lambda k, s: jax.random.normal(k, s, jnp.float32) * INIT_SCALE
    p = {
        "W_Q": rnd(ks[0], (num_heads, head_width, head_width)),
        "W_K": rnd(ks[1], (num_heads, head_width, head_width)),
        "W_V": rnd(ks[2], (num_heads, head_width, head_width)),
        "theta": rnd(ks[3], (num_heads, head_width)),
        "W_O": rnd(ks[4], (num_heads, head_width, W)),
        "W_G": rnd(ks[5], (num_heads, head_width, num_heads, head_width)),
        "linear1": rnd(ks[6], (W, 4 * W)),
        "linear2": rnd(ks[7], (4 * W, W)),
    }
    if num_heads == 1:
        gamma = jnp.array([1.0 - 10.0 ** -6], jnp.float32)
    else:
        log_range = jnp.arange(num_heads, dtype=jnp.float32) / (num_heads - 1)
        inv_pow = -6.0 + 4.0 * log_range
        gamma = 1.0 - 10.0 ** inv_pow
    p["gamma"] = gamma.astype(jnp.float32)
    return p


# ------------------------------ pure-JAX reference ------------------------------
def reference_forward(lat_re, lat_im, params):
    lat = lat_re.astype(jnp.complex64) + 1j * lat_im.astype(jnp.complex64)
    B, C, W = lat.shape
    H, hw, _ = params["W_Q"].shape
    qk_scale = jnp.float32(hw) ** 0.5
    c64 = lambda a: a.astype(jnp.complex64)

    def retention(x):
        idx = jnp.arange(C, dtype=jnp.float32)
        power = idx[:, None] - idx[None, :]
        mask = power >= 0
        D = jnp.where(mask[None],
                      jnp.power(params["gamma"][:, None, None], power[None]), 0.0)
        Theta = jnp.exp(1j * idx[None, :, None] * c64(params["theta"])[:, None, :])
        x_head = x.reshape(B, C, H, hw)
        Q = jnp.einsum('hij,bchi->bhcj', c64(params["W_Q"]), x_head) * Theta
        K = jnp.einsum('hij,bchi->bhcj', c64(params["W_K"]), x_head) * jnp.conj(Theta)
        V = jnp.einsum('hij,bchi->bhcj', c64(params["W_V"]), x_head)
        QK = jnp.einsum('bhci,bhdi->bhcd', Q, K) / qk_scale
        QKD = QK * D.astype(jnp.complex64)
        oh = jnp.einsum('bhcd,bhdi->bchi', QKD, V)
        oh = oh / jnp.linalg.norm(oh, axis=-1, keepdims=True)
        gating = jnp.einsum('bchi,hijk->bcjk', oh, c64(params["W_G"]))
        oh = oh * gating / (1 + jnp.exp(-2 * gating))
        return jnp.einsum('bchi,hik->bck', oh, c64(params["W_O"]))

    normed = lat / jnp.linalg.norm(lat, axis=-1, keepdims=True)
    lat = lat + retention(normed)
    normed = lat / jnp.linalg.norm(lat, axis=-1, keepdims=True)
    h = normed @ c64(params["linear1"])
    h = h / (1 + jnp.exp(-h))
    return lat + h @ c64(params["linear2"])


# ------------------------------------ main ------------------------------------
if __name__ == "__main__":
    head_width, num_heads = 16, 2
    B, C = 2, 8
    W = head_width * num_heads

    key = jax.random.PRNGKey(0)
    kp, kr, ki = jax.random.split(key, 3)
    params = init_params(kp, head_width, num_heads)
    lat_re = jax.random.normal(kr, (B, C, W), jnp.float32)
    lat_im = jax.random.normal(ki, (B, C, W), jnp.float32)

    out_re, out_im = retnet_layer_forward(lat_re, lat_im, params)
    jax.block_until_ready((out_re, out_im))

    ref = jax.block_until_ready(reference_forward(lat_re, lat_im, params))
    # bf16 MXU operands + approx reciprocals -> loosened tolerances vs. f32 reference
    np.testing.assert_allclose(np.asarray(out_re), np.real(np.asarray(ref)),
                               rtol=1e-2, atol=1e-3)
    np.testing.assert_allclose(np.asarray(out_im), np.imag(np.asarray(ref)),
                               rtol=1e-2, atol=1e-3)
    print("KERNEL_OK")
</pallas_src>

<mosaic_0001>
module attributes {stable_mosaic.version = 11 : i64} {
  func.func @kernel(%arg0: i32, %arg1: memref<1x1x256xf32, #tpu.memory_space<vmem>>, %arg2: memref<1x1x256xf32, #tpu.memory_space<vmem>>, %arg3: memref<3x32x32xbf16, #tpu.memory_space<vmem>>, %arg4: memref<8x32xf32, #tpu.memory_space<vmem>>, %arg5: memref<8x32xf32, #tpu.memory_space<vmem>>, %arg6: memref<2x8x16xf32, #tpu.memory_space<vmem>>, %arg7: memref<32x32xbf16, #tpu.memory_space<vmem>>, %arg8: memref<32x32xbf16, #tpu.memory_space<vmem>>, %arg9: memref<32x128xbf16, #tpu.memory_space<vmem>>, %arg10: memref<128x32xbf16, #tpu.memory_space<vmem>>, %arg11: memref<1x1x256xf32, #tpu.memory_space<vmem>>, %arg12: memref<1x1x256xf32, #tpu.memory_space<vmem>>) attributes {dimension_semantics = [#tpu.dimension_semantics<parallel>], iteration_bounds = array<i64: 2>, scalar_prefetch = 0 : i64, scratch_operands = 0 : i64, tpu.core_type = #tpu.core_type<tc>, window_params = [{transform_indices = @transform_0, window_bounds = array<i64: 1, 1, 256>}, {transform_indices = @transform_1, window_bounds = array<i64: 1, 1, 256>}, {pipeline_mode = #tpu.pipeline_mode<synchronous>, transform_indices = @transform_2, window_bounds = array<i64: 3, 32, 32>}, {pipeline_mode = #tpu.pipeline_mode<synchronous>, transform_indices = @transform_3, window_bounds = array<i64: 8, 32>}, {pipeline_mode = #tpu.pipeline_mode<synchronous>, transform_indices = @transform_4, window_bounds = array<i64: 8, 32>}, {pipeline_mode = #tpu.pipeline_mode<synchronous>, transform_indices = @transform_5, window_bounds = array<i64: 2, 8, 16>}, {pipeline_mode = #tpu.pipeline_mode<synchronous>, transform_indices = @transform_6, window_bounds = array<i64: 32, 32>}, {pipeline_mode = #tpu.pipeline_mode<synchronous>, transform_indices = @transform_7, window_bounds = array<i64: 32, 32>}, {pipeline_mode = #tpu.pipeline_mode<synchronous>, transform_indices = @transform_8, window_bounds = array<i64: 32, 128>}, {pipeline_mode = #tpu.pipeline_mode<synchronous>, transform_indices = @transform_9, window_bounds = array<i64: 128, 32>}, {transform_indices = @transform_10, window_bounds = array<i64: 1, 1, 256>}, {transform_indices = @transform_11, window_bounds = array<i64: 1, 1, 256>}]} {
    %c0 = arith.constant 0 : index
    %c0_0 = arith.constant 0 : index
    %c0_1 = arith.constant 0 : index
    %0 = vector.load %arg1[%c0, %c0_0, %c0_1] : memref<1x1x256xf32, #tpu.memory_space<vmem>>, vector<1x1x256xf32>
    %1 = vector.shape_cast %0 : vector<1x1x256xf32> to vector<8x32xf32>
    %c0_2 = arith.constant 0 : index
    %c0_3 = arith.constant 0 : index
    %c0_4 = arith.constant 0 : index
    %2 = vector.load %arg2[%c0_2, %c0_3, %c0_4] : memref<1x1x256xf32, #tpu.memory_space<vmem>>, vector<1x1x256xf32>
    %3 = vector.shape_cast %2 : vector<1x1x256xf32> to vector<8x32xf32>
    %4 = arith.mulf %1, %1 : vector<8x32xf32>
    %5 = arith.mulf %3, %3 : vector<8x32xf32>
    %6 = arith.addf %4, %5 : vector<8x32xf32>
    %cst = arith.constant dense<0.000000e+00> : vector<8xf32>
    %7 = vector.multi_reduction <add>, %6, %cst [1] : vector<8x32xf32> to vector<8xf32>
    %8 = vector.shape_cast %7 : vector<8xf32> to vector<8x1xf32>
    %cst_5 = arith.constant 1.000000e-30 : f32
    %9 = vector.broadcast %cst_5 : f32 to vector<8x1xf32>
    %10 = arith.addf %8, %9 : vector<8x1xf32>
    %11 = math.rsqrt %10 : vector<8x1xf32>
    %12 = vector.broadcast %11 : vector<8x1xf32> to vector<8x32xf32>
    %13 = arith.mulf %1, %12 : vector<8x32xf32>
    %14 = vector.broadcast %11 : vector<8x1xf32> to vector<8x32xf32>
    %15 = arith.mulf %3, %14 : vector<8x32xf32>
    %16 = tpu.concatenate %13, %15 in 0 : vector<8x32xf32>, vector<8x32xf32> -> vector<16x32xf32>
    %17 = arith.truncf %16 : vector<16x32xf32> to vector<16x32xbf16>
    %c0_6 = arith.constant 0 : index
    %c0_7 = arith.constant 0 : index
    %c0_8 = arith.constant 0 : index
    %18 = vector.load %arg3[%c0_6, %c0_7, %c0_8] : memref<3x32x32xbf16, #tpu.memory_space<vmem>>, vector<1x32x32xbf16>
    %19 = vector.shape_cast %18 : vector<1x32x32xbf16> to vector<32x32xbf16>
    %cst_9 = arith.constant dense<0.000000e+00> : vector<16x32xf32>
    %20 = tpu.matmul %17, %19, %cst_9 {dimension_numbers = #tpu.dot_dimension_numbers<[1], [0], [0], [1], [0, 0, 1, 1], [], []>} : vector<16x32xbf16>, vector<32x32xbf16>, vector<16x32xf32> -> vector<16x32xf32>
    %c1 = arith.constant 1 : index
    %c0_10 = arith.constant 0 : index
    %c0_11 = arith.constant 0 : index
    %21 = vector.load %arg3[%c1, %c0_10, %c0_11] : memref<3x32x32xbf16, #tpu.memory_space<vmem>>, vector<1x32x32xbf16>
    %22 = vector.shape_cast %21 : vector<1x32x32xbf16> to vector<32x32xbf16>
    %cst_12 = arith.constant dense<0.000000e+00> : vector<16x32xf32>
    %23 = tpu.matmul %17, %22, %cst_12 {dimension_numbers = #tpu.dot_dimension_numbers<[1], [0], [0], [1], [0, 0, 1, 1], [], []>} : vector<16x32xbf16>, vector<32x32xbf16>, vector<16x32xf32> -> vector<16x32xf32>
    %c2 = arith.constant 2 : index
    %c0_13 = arith.constant 0 : index
    %c0_14 = arith.constant 0 : index
    %24 = vector.load %arg3[%c2, %c0_13, %c0_14] : memref<3x32x32xbf16, #tpu.memory_space<vmem>>, vector<1x32x32xbf16>
    %25 = vector.shape_cast %24 : vector<1x32x32xbf16> to vector<32x32xbf16>
    %cst_15 = arith.constant dense<0.000000e+00> : vector<16x32xf32>
    %26 = tpu.matmul %17, %25, %cst_15 {dimension_numbers = #tpu.dot_dimension_numbers<[1], [0], [0], [1], [0, 0, 1, 1], [], []>} : vector<16x32xbf16>, vector<32x32xbf16>, vector<16x32xf32> -> vector<16x32xf32>
    %c0_16 = arith.constant 0 : index
    %c0_17 = arith.constant 0 : index
    %27 = vector.load %arg4[%c0_16, %c0_17] : memref<8x32xf32, #tpu.memory_space<vmem>>, vector<8x32xf32>
    %c0_18 = arith.constant 0 : index
    %c0_19 = arith.constant 0 : index
    %28 = vector.load %arg5[%c0_18, %c0_19] : memref<8x32xf32, #tpu.memory_space<vmem>>, vector<8x32xf32>
    %29 = vector.extract_strided_slice %20 {offsets = [0, 0], sizes = [8, 32], strides = [1, 1]} : vector<16x32xf32> to vector<8x32xf32>
    %30 = vector.extract_strided_slice %20 {offsets = [8, 0], sizes = [8, 32], strides = [1, 1]} : vector<16x32xf32> to vector<8x32xf32>
    %31 = vector.extract_strided_slice %23 {offsets = [0, 0], sizes = [8, 32], strides = [1, 1]} : vector<16x32xf32> to vector<8x32xf32>
    %32 = vector.extract_strided_slice %23 {offsets = [8, 0], sizes = [8, 32], strides = [1, 1]} : vector<16x32xf32> to vector<8x32xf32>
    %33 = vector.extract_strided_slice %26 {offsets = [0, 0], sizes = [8, 32], strides = [1, 1]} : vector<16x32xf32> to vector<8x32xf32>
    %34 = vector.extract_strided_slice %26 {offsets = [8, 0], sizes = [8, 32], strides = [1, 1]} : vector<16x32xf32> to vector<8x32xf32>
    %35 = arith.mulf %29, %27 : vector<8x32xf32>
    %36 = arith.mulf %30, %28 : vector<8x32xf32>
    %37 = arith.subf %35, %36 : vector<8x32xf32>
    %38 = arith.mulf %29, %28 : vector<8x32xf32>
    %39 = arith.mulf %30, %27 : vector<8x32xf32>
    %40 = arith.addf %38, %39 : vector<8x32xf32>
    %41 = arith.mulf %31, %27 : vector<8x32xf32>
    %42 = arith.mulf %32, %28 : vector<8x32xf32>
    %43 = arith.addf %41, %42 : vector<8x32xf32>
    %44 = arith.mulf %32, %27 : vector<8x32xf32>
    %45 = arith.mulf %31, %28 : vector<8x32xf32>
    %46 = arith.subf %44, %45 : vector<8x32xf32>
    %47 = vector.extract_strided_slice %37 {offsets = [0, 0], sizes = [8, 16], strides = [1, 1]} : vector<8x32xf32> to vector<8x16xf32>
    %48 = vector.extract_strided_slice %37 {offsets = [0, 16], sizes = [8, 16], strides = [1, 1]} : vector<8x32xf32> to vector<8x16xf32>
    %49 = tpu.concatenate %47, %48 in 0 : vector<8x16xf32>, vector<8x16xf32> -> vector<16x16xf32>
    %50 = vector.shape_cast %49 : vector<16x16xf32> to vector<2x8x16xf32>
    %51 = vector.extract_strided_slice %40 {offsets = [0, 0], sizes = [8, 16], strides = [1, 1]} : vector<8x32xf32> to vector<8x16xf32>
    %52 = vector.extract_strided_slice %40 {offsets = [0, 16], sizes = [8, 16], strides = [1, 1]} : vector<8x32xf32> to vector<8x16xf32>
    %53 = tpu.concatenate %51, %52 in 0 : vector<8x16xf32>, vector<8x16xf32> -> vector<16x16xf32>
    %54 = vector.shape_cast %53 : vector<16x16xf32> to vector<2x8x16xf32>
    %55 = vector.extract_strided_slice %43 {offsets = [0, 0], sizes = [8, 16], strides = [1, 1]} : vector<8x32xf32> to vector<8x16xf32>
    %56 = vector.extract_strided_slice %43 {offsets = [0, 16], sizes = [8, 16], strides = [1, 1]} : vector<8x32xf32> to vector<8x16xf32>
    %57 = tpu.concatenate %55, %56 in 0 : vector<8x16xf32>, vector<8x16xf32> -> vector<16x16xf32>
    %58 = vector.shape_cast %57 : vector<16x16xf32> to vector<2x8x16xf32>
    %59 = vector.extract_strided_slice %46 {offsets = [0, 0], sizes = [8, 16], strides = [1, 1]} : vector<8x32xf32> to vector<8x16xf32>
    %60 = vector.extract_strided_slice %46 {offsets = [0, 16], sizes = [8, 16], strides = [1, 1]} : vector<8x32xf32> to vector<8x16xf32>
    %61 = tpu.concatenate %59, %60 in 0 : vector<8x16xf32>, vector<8x16xf32> -> vector<16x16xf32>
    %62 = vector.shape_cast %61 : vector<16x16xf32> to vector<2x8x16xf32>
    %63 = vector.extract_strided_slice %33 {offsets = [0, 0], sizes = [8, 16], strides = [1, 1]} : vector<8x32xf32> to vector<8x16xf32>
    %64 = vector.extract_strided_slice %33 {offsets = [0, 16], sizes = [8, 16], strides = [1, 1]} : vector<8x32xf32> to vector<8x16xf32>
    %65 = tpu.concatenate %63, %64 in 0 : vector<8x16xf32>, vector<8x16xf32> -> vector<16x16xf32>
    %66 = vector.shape_cast %65 : vector<16x16xf32> to vector<2x8x16xf32>
    %67 = vector.extract_strided_slice %34 {offsets = [0, 0], sizes = [8, 16], strides = [1, 1]} : vector<8x32xf32> to vector<8x16xf32>
    %68 = vector.extract_strided_slice %34 {offsets = [0, 16], sizes = [8, 16], strides = [1, 1]} : vector<8x32xf32> to vector<8x16xf32>
    %69 = tpu.concatenate %67, %68 in 0 : vector<8x16xf32>, vector<8x16xf32> -> vector<16x16xf32>
    %70 = vector.shape_cast %69 : vector<16x16xf32> to vector<2x8x16xf32>
    %71 = tpu.concatenate %50, %54 in 2 : vector<2x8x16xf32>, vector<2x8x16xf32> -> vector<2x8x32xf32>
    %72 = arith.truncf %71 : vector<2x8x32xf32> to vector<2x8x32xbf16>
    %cst_20 = arith.constant 0.000000e+00 : f32
    %73 = vector.broadcast %cst_20 : f32 to vector<2x8x16xf32>
    %74 = arith.subf %73, %62 : vector<2x8x16xf32>
    %75 = tpu.concatenate %58, %74 in 2 : vector<2x8x16xf32>, vector<2x8x16xf32> -> vector<2x8x32xf32>
    %76 = tpu.concatenate %62, %58 in 2 : vector<2x8x16xf32>, vector<2x8x16xf32> -> vector<2x8x32xf32>
    %77 = tpu.concatenate %75, %76 in 1 : vector<2x8x32xf32>, vector<2x8x32xf32> -> vector<2x16x32xf32>
    %78 = arith.truncf %77 : vector<2x16x32xf32> to vector<2x16x32xbf16>
    %cst_21 = arith.constant dense<0.000000e+00> : vector<2x8x16xf32>
    %79 = tpu.matmul %72, %78, %cst_21 {dimension_numbers = #tpu.dot_dimension_numbers<[2], [2], [1], [1], [0, 0, 0, 1, 1, 1], [0], [0]>} : vector<2x8x32xbf16>, vector<2x16x32xbf16>, vector<2x8x16xf32> -> vector<2x8x16xf32>
    %c0_22 = arith.constant 0 : index
    %c0_23 = arith.constant 0 : index
    %c0_24 = arith.constant 0 : index
    %80 = vector.load %arg6[%c0_22, %c0_23, %c0_24] : memref<2x8x16xf32, #tpu.memory_space<vmem>>, vector<2x8x16xf32>
    %81 = vector.shape_cast %80 : vector<2x8x16xf32> to vector<2x1x8x16xf32>
    %82 = vector.shape_cast %81 : vector<2x1x8x16xf32> to vector<2x8x16xf32>
    %83 = arith.mulf %79, %82 : vector<2x8x16xf32>
    %84 = tpu.concatenate %66, %70 in 2 : vector<2x8x16xf32>, vector<2x8x16xf32> -> vector<2x8x32xf32>
    %cst_25 = arith.constant 0.000000e+00 : f32
    %85 = vector.broadcast %cst_25 : f32 to vector<2x8x16xf32>
    %86 = arith.subf %85, %70 : vector<2x8x16xf32>
    %87 = tpu.concatenate %86, %66 in 2 : vector<2x8x16xf32>, vector<2x8x16xf32> -> vector<2x8x32xf32>
    %88 = tpu.concatenate %84, %87 in 1 : vector<2x8x32xf32>, vector<2x8x32xf32> -> vector<2x16x32xf32>
    %89 = arith.truncf %88 : vector<2x16x32xf32> to vector<2x16x32xbf16>
    %90 = arith.truncf %83 : vector<2x8x16xf32> to vector<2x8x16xbf16>
    %cst_26 = arith.constant dense<0.000000e+00> : vector<2x8x32xf32>
    %91 = tpu.matmul %90, %89, %cst_26 {dimension_numbers = #tpu.dot_dimension_numbers<[2], [1], [1], [2], [0, 0, 0, 1, 1, 2], [0], [0]>} : vector<2x8x16xbf16>, vector<2x16x32xbf16>, vector<2x8x32xf32> -> vector<2x8x32xf32>
    %92 = arith.mulf %91, %91 : vector<2x8x32xf32>
    %cst_27 = arith.constant dense<0.000000e+00> : vector<2x8xf32>
    %93 = vector.multi_reduction <add>, %92, %cst_27 [2] : vector<2x8x32xf32> to vector<2x8xf32>
    %94 = vector.shape_cast %93 : vector<2x8xf32> to vector<2x8x1xf32>
    %cst_28 = arith.constant 1.000000e-30 : f32
    %95 = vector.broadcast %cst_28 : f32 to vector<2x8x1xf32>
    %96 = arith.addf %94, %95 : vector<2x8x1xf32>
    %97 = math.rsqrt %96 : vector<2x8x1xf32>
    %98 = vector.broadcast %97 : vector<2x8x1xf32> to vector<2x8x32xf32>
    %99 = arith.mulf %91, %98 : vector<2x8x32xf32>
    %100 = vector.extract_strided_slice %99 {offsets = [0, 0, 0], sizes = [2, 8, 16], strides = [1, 1, 1]} : vector<2x8x32xf32> to vector<2x8x16xf32>
    %101 = vector.extract_strided_slice %100 {offsets = [0, 0, 0], sizes = [1, 8, 16], strides = [1, 1, 1]} : vector<2x8x16xf32> to vector<1x8x16xf32>
    %102 = vector.shape_cast %101 : vector<1x8x16xf32> to vector<8x16xf32>
    %103 = vector.extract_strided_slice %100 {offsets = [1, 0, 0], sizes = [1, 8, 16], strides = [1, 1, 1]} : vector<2x8x16xf32> to vector<1x8x16xf32>
    %104 = vector.shape_cast %103 : vector<1x8x16xf32> to vector<8x16xf32>
    %105 = tpu.concatenate %102, %104 in 1 : vector<8x16xf32>, vector<8x16xf32> -> vector<8x32xf32>
    %106 = vector.extract_strided_slice %99 {offsets = [0, 0, 16], sizes = [2, 8, 16], strides = [1, 1, 1]} : vector<2x8x32xf32> to vector<2x8x16xf32>
    %107 = vector.extract_strided_slice %106 {offsets = [0, 0, 0], sizes = [1, 8, 16], strides = [1, 1, 1]} : vector<2x8x16xf32> to vector<1x8x16xf32>
    %108 = vector.shape_cast %107 : vector<1x8x16xf32> to vector<8x16xf32>
    %109 = vector.extract_strided_slice %106 {offsets = [1, 0, 0], sizes = [1, 8, 16], strides = [1, 1, 1]} : vector<2x8x16xf32> to vector<1x8x16xf32>
    %110 = vector.shape_cast %109 : vector<1x8x16xf32> to vector<8x16xf32>
    %111 = tpu.concatenate %108, %110 in 1 : vector<8x16xf32>, vector<8x16xf32> -> vector<8x32xf32>
    %112 = tpu.concatenate %105, %111 in 0 : vector<8x32xf32>, vector<8x32xf32> -> vector<16x32xf32>
    %113 = arith.truncf %112 : vector<16x32xf32> to vector<16x32xbf16>
    %c0_29 = arith.constant 0 : index
    %c0_30 = arith.constant 0 : index
    %114 = vector.load %arg7[%c0_29, %c0_30] : memref<32x32xbf16, #tpu.memory_space<vmem>>, vector<32x32xbf16>
    %cst_31 = arith.constant dense<0.000000e+00> : vector<16x32xf32>
    %115 = tpu.matmul %113, %114, %cst_31 {dimension_numbers = #tpu.dot_dimension_numbers<[1], [0], [0], [1], [0, 0, 1, 1], [], []>} : vector<16x32xbf16>, vector<32x32xbf16>, vector<16x32xf32> -> vector<16x32xf32>
    %116 = vector.extract_strided_slice %115 {offsets = [0, 0], sizes = [8, 32], strides = [1, 1]} : vector<16x32xf32> to vector<8x32xf32>
    %117 = vector.extract_strided_slice %115 {offsets = [8, 0], sizes = [8, 32], strides = [1, 1]} : vector<16x32xf32> to vector<8x32xf32>
    %cst_32 = arith.constant -2.000000e+00 : f32
    %118 = vector.broadcast %cst_32 : f32 to vector<8x32xf32>
    %119 = arith.mulf %118, %116 : vector<8x32xf32>
    %cst_33 = arith.constant 4.000000e+01 : f32
    %120 = vector.broadcast %cst_33 : f32 to vector<8x32xf32>
    %121 = arith.minimumf %119, %120 : vector<8x32xf32>
    %122 = math.exp %121 : vector<8x32xf32>
    %cst_34 = arith.constant 2.000000e+00 : f32
    %123 = vector.broadcast %cst_34 : f32 to vector<8x32xf32>
    %124 = arith.mulf %123, %117 : vector<8x32xf32>
    %125 = math.cos %124 : vector<8x32xf32>
    %cst_35 = arith.constant 2.000000e+00 : f32
    %126 = vector.broadcast %cst_35 : f32 to vector<8x32xf32>
    %127 = arith.mulf %126, %117 : vector<8x32xf32>
    %128 = math.sin %127 : vector<8x32xf32>
    %129 = arith.mulf %122, %125 : vector<8x32xf32>
    %cst_36 = arith.constant 1.000000e+00 : f32
    %130 = vector.broadcast %cst_36 : f32 to vector<8x32xf32>
    %131 = arith.addf %130, %129 : vector<8x32xf32>
    %132 = arith.mulf %122, %128 : vector<8x32xf32>
    %cst_37 = arith.constant 0.000000e+00 : f32
    %133 = vector.broadcast %cst_37 : f32 to vector<8x32xf32>
    %134 = arith.subf %133, %132 : vector<8x32xf32>
    %cst_38 = arith.constant 2.000000e+00 : f32
    %135 = vector.broadcast %cst_38 : f32 to vector<8x32xf32>
    %136 = arith.mulf %135, %122 : vector<8x32xf32>
    %137 = arith.mulf %136, %125 : vector<8x32xf32>
    %cst_39 = arith.constant 1.000000e+00 : f32
    %138 = vector.broadcast %cst_39 : f32 to vector<8x32xf32>
    %139 = arith.addf %138, %137 : vector<8x32xf32>
    %140 = arith.mulf %122, %122 : vector<8x32xf32>
    %141 = arith.addf %139, %140 : vector<8x32xf32>
    %142 = tpu.reciprocal %141 {approx = true} : vector<8x32xf32> -> vector<8x32xf32>
    %143 = arith.mulf %116, %131 : vector<8x32xf32>
    %144 = arith.mulf %117, %134 : vector<8x32xf32>
    %145 = arith.addf %143, %144 : vector<8x32xf32>
    %146 = arith.mulf %145, %142 : vector<8x32xf32>
    %147 = arith.mulf %117, %131 : vector<8x32xf32>
    %148 = arith.mulf %116, %134 : vector<8x32xf32>
    %149 = arith.subf %147, %148 : vector<8x32xf32>
    %150 = arith.mulf %149, %142 : vector<8x32xf32>
    %151 = arith.mulf %105, %146 : vector<8x32xf32>
    %152 = arith.mulf %111, %150 : vector<8x32xf32>
    %153 = arith.subf %151, %152 : vector<8x32xf32>
    %154 = arith.mulf %105, %150 : vector<8x32xf32>
    %155 = arith.mulf %111, %146 : vector<8x32xf32>
    %156 = arith.addf %154, %155 : vector<8x32xf32>
    %157 = tpu.concatenate %153, %156 in 0 : vector<8x32xf32>, vector<8x32xf32> -> vector<16x32xf32>
    %158 = arith.truncf %157 : vector<16x32xf32> to vector<16x32xbf16>
    %c0_40 = arith.constant 0 : index
    %c0_41 = arith.constant 0 : index
    %159 = vector.load %arg8[%c0_40, %c0_41] : memref<32x32xbf16, #tpu.memory_space<vmem>>, vector<32x32xbf16>
    %cst_42 = arith.constant dense<0.000000e+00> : vector<16x32xf32>
    %160 = tpu.matmul %158, %159, %cst_42 {dimension_numbers = #tpu.dot_dimension_numbers<[1], [0], [0], [1], [0, 0, 1, 1], [], []>} : vector<16x32xbf16>, vector<32x32xbf16>, vector<16x32xf32> -> vector<16x32xf32>
    %161 = vector.extract_strided_slice %160 {offsets = [0, 0], sizes = [8, 32], strides = [1, 1]} : vector<16x32xf32> to vector<8x32xf32>
    %162 = arith.addf %1, %161 : vector<8x32xf32>
    %163 = vector.extract_strided_slice %160 {offsets = [8, 0], sizes = [8, 32], strides = [1, 1]} : vector<16x32xf32> to vector<8x32xf32>
    %164 = arith.addf %3, %163 : vector<8x32xf32>
    %165 = arith.mulf %162, %162 : vector<8x32xf32>
    %166 = arith.mulf %164, %164 : vector<8x32xf32>
    %167 = arith.addf %165, %166 : vector<8x32xf32>
    %cst_43 = arith.constant dense<0.000000e+00> : vector<8xf32>
    %168 = vector.multi_reduction <add>, %167, %cst_43 [1] : vector<8x32xf32> to vector<8xf32>
    %169 = vector.shape_cast %168 : vector<8xf32> to vector<8x1xf32>
    %cst_44 = arith.constant 1.000000e-30 : f32
    %170 = vector.broadcast %cst_44 : f32 to vector<8x1xf32>
    %171 = arith.addf %169, %170 : vector<8x1xf32>
    %172 = math.rsqrt %171 : vector<8x1xf32>
    %173 = vector.broadcast %172 : vector<8x1xf32> to vector<8x32xf32>
    %174 = arith.mulf %162, %173 : vector<8x32xf32>
    %175 = vector.broadcast %172 : vector<8x1xf32> to vector<8x32xf32>
    %176 = arith.mulf %164, %175 : vector<8x32xf32>
    %177 = tpu.concatenate %174, %176 in 0 : vector<8x32xf32>, vector<8x32xf32> -> vector<16x32xf32>
    %178 = arith.truncf %177 : vector<16x32xf32> to vector<16x32xbf16>
    %c0_45 = arith.constant 0 : index
    %c0_46 = arith.constant 0 : index
    %179 = vector.load %arg9[%c0_45, %c0_46] : memref<32x128xbf16, #tpu.memory_space<vmem>>, vector<32x128xbf16>
    %cst_47 = arith.constant dense<0.000000e+00> : vector<16x128xf32>
    %180 = tpu.matmul %178, %179, %cst_47 {dimension_numbers = #tpu.dot_dimension_numbers<[1], [0], [0], [1], [0, 0, 1, 1], [], []>} : vector<16x32xbf16>, vector<32x128xbf16>, vector<16x128xf32> -> vector<16x128xf32>
    %181 = vector.extract_strided_slice %180 {offsets = [0, 0], sizes = [8, 128], strides = [1, 1]} : vector<16x128xf32> to vector<8x128xf32>
    %182 = vector.extract_strided_slice %180 {offsets = [8, 0], sizes = [8, 128], strides = [1, 1]} : vector<16x128xf32> to vector<8x128xf32>
    %cst_48 = arith.constant 0.000000e+00 : f32
    %183 = vector.broadcast %cst_48 : f32 to vector<8x128xf32>
    %184 = arith.subf %183, %181 : vector<8x128xf32>
    %cst_49 = arith.constant 4.000000e+01 : f32
    %185 = vector.broadcast %cst_49 : f32 to vector<8x128xf32>
    %186 = arith.minimumf %184, %185 : vector<8x128xf32>
    %187 = math.exp %186 : vector<8x128xf32>
    %188 = math.cos %182 : vector<8x128xf32>
    %189 = math.sin %182 : vector<8x128xf32>
    %190 = arith.mulf %187, %188 : vector<8x128xf32>
    %cst_50 = arith.constant 1.000000e+00 : f32
    %191 = vector.broadcast %cst_50 : f32 to vector<8x128xf32>
    %192 = arith.addf %191, %190 : vector<8x128xf32>
    %193 = arith.mulf %187, %189 : vector<8x128xf32>
    %cst_51 = arith.constant 0.000000e+00 : f32
    %194 = vector.broadcast %cst_51 : f32 to vector<8x128xf32>
    %195 = arith.subf %194, %193 : vector<8x128xf32>
    %cst_52 = arith.constant 2.000000e+00 : f32
    %196 = vector.broadcast %cst_52 : f32 to vector<8x128xf32>
    %197 = arith.mulf %196, %187 : vector<8x128xf32>
    %198 = arith.mulf %197, %188 : vector<8x128xf32>
    %cst_53 = arith.constant 1.000000e+00 : f32
    %199 = vector.broadcast %cst_53 : f32 to vector<8x128xf32>
    %200 = arith.addf %199, %198 : vector<8x128xf32>
    %201 = arith.mulf %187, %187 : vector<8x128xf32>
    %202 = arith.addf %200, %201 : vector<8x128xf32>
    %203 = tpu.reciprocal %202 {approx = true} : vector<8x128xf32> -> vector<8x128xf32>
    %204 = arith.mulf %181, %192 : vector<8x128xf32>
    %205 = arith.mulf %182, %195 : vector<8x128xf32>
    %206 = arith.addf %204, %205 : vector<8x128xf32>
    %207 = arith.mulf %206, %203 : vector<8x128xf32>
    %208 = arith.mulf %182, %192 : vector<8x128xf32>
    %209 = arith.mulf %181, %195 : vector<8x128xf32>
    %210 = arith.subf %208, %209 : vector<8x128xf32>
    %211 = arith.mulf %210, %203 : vector<8x128xf32>
    %212 = tpu.concatenate %207, %211 in 0 : vector<8x128xf32>, vector<8x128xf32> -> vector<16x128xf32>
    %213 = arith.truncf %212 : vector<16x128xf32> to vector<16x128xbf16>
    %c0_54 = arith.constant 0 : index
    %c0_55 = arith.constant 0 : index
    %214 = vector.load %arg10[%c0_54, %c0_55] : memref<128x32xbf16, #tpu.memory_space<vmem>>, vector<128x32xbf16>
    %cst_56 = arith.constant dense<0.000000e+00> : vector<16x32xf32>
    %215 = tpu.matmul %213, %214, %cst_56 {dimension_numbers = #tpu.dot_dimension_numbers<[1], [0], [0], [1], [0, 0, 1, 1], [], []>} : vector<16x128xbf16>, vector<128x32xbf16>, vector<16x32xf32> -> vector<16x32xf32>
    %216 = vector.extract_strided_slice %215 {offsets = [0, 0], sizes = [8, 32], strides = [1, 1]} : vector<16x32xf32> to vector<8x32xf32>
    %217 = arith.addf %162, %216 : vector<8x32xf32>
    %218 = vector.shape_cast %217 : vector<8x32xf32> to vector<1x1x256xf32>
    %c0_57 = arith.constant 0 : index
    %c0_58 = arith.constant 0 : index
    %c0_59 = arith.constant 0 : index
    %219 = vector.load %arg11[%c0_57, %c0_58, %c0_59] : memref<1x1x256xf32, #tpu.memory_space<vmem>>, vector<1x1x256xf32>
    tpu.vector_store %arg11[%c0_57, %c0_58, %c0_59], %218 {strides = array<i32>} : memref<1x1x256xf32, #tpu.memory_space<vmem>>, vector<1x1x256xf32>,
    %220 = vector.extract_strided_slice %215 {offsets = [8, 0], sizes = [8, 32], strides = [1, 1]} : vector<16x32xf32> to vector<8x32xf32>
    %221 = arith.addf %164, %220 : vector<8x32xf32>
    %222 = vector.shape_cast %221 : vector<8x32xf32> to vector<1x1x256xf32>
    %c0_60 = arith.constant 0 : index
    %c0_61 = arith.constant 0 : index
    %c0_62 = arith.constant 0 : index
    %223 = vector.load %arg12[%c0_60, %c0_61, %c0_62] : memref<1x1x256xf32, #tpu.memory_space<vmem>>, vector<1x1x256xf32>
    tpu.vector_store %arg12[%c0_60, %c0_61, %c0_62], %222 {strides = array<i32>} : memref<1x1x256xf32, #tpu.memory_space<vmem>>, vector<1x1x256xf32>,
    return
  }
  func.func @transform_0(%arg0: i32) -> (i32, i32, i32) {
    %c0_i32 = arith.constant 0 : i32
    %c0_i32_0 = arith.constant 0 : i32
    %c0_i32_1 = arith.constant 0 : i32
    return %arg0, %c0_i32, %c0_i32_0 : i32, i32, i32
  }
  func.func @transform_1(%arg0: i32) -> (i32, i32, i32) {
    %c0_i32 = arith.constant 0 : i32
    %c0_i32_0 = arith.constant 0 : i32
    %c0_i32_1 = arith.constant 0 : i32
    return %arg0, %c0_i32, %c0_i32_0 : i32, i32, i32
  }
  func.func @transform_2(%arg0: i32) -> (i32, i32, i32) {
    %c0_i32 = arith.constant 0 : i32
    %c0_i32_0 = arith.constant 0 : i32
    %c0_i32_1 = arith.constant 0 : i32
    %c0_i32_2 = arith.constant 0 : i32
    return %c0_i32, %c0_i32_0, %c0_i32_1 : i32, i32, i32
  }
  func.func @transform_3(%arg0: i32) -> (i32, i32) {
    %c0_i32 = arith.constant 0 : i32
    %c0_i32_0 = arith.constant 0 : i32
    %c0_i32_1 = arith.constant 0 : i32
    return %c0_i32, %c0_i32_0 : i32, i32
  }
  func.func @transform_4(%arg0: i32) -> (i32, i32) {
    %c0_i32 = arith.constant 0 : i32
    %c0_i32_0 = arith.constant 0 : i32
    %c0_i32_1 = arith.constant 0 : i32
    return %c0_i32, %c0_i32_0 : i32, i32
  }
  func.func @transform_5(%arg0: i32) -> (i32, i32, i32) {
    %c0_i32 = arith.constant 0 : i32
    %c0_i32_0 = arith.constant 0 : i32
    %c0_i32_1 = arith.constant 0 : i32
    %c0_i32_2 = arith.constant 0 : i32
    return %c0_i32, %c0_i32_0, %c0_i32_1 : i32, i32, i32
  }
  func.func @transform_6(%arg0: i32) -> (i32, i32) {
    %c0_i32 = arith.constant 0 : i32
    %c0_i32_0 = arith.constant 0 : i32
    %c0_i32_1 = arith.constant 0 : i32
    return %c0_i32, %c0_i32_0 : i32, i32
  }
  func.func @transform_7(%arg0: i32) -> (i32, i32) {
    %c0_i32 = arith.constant 0 : i32
    %c0_i32_0 = arith.constant 0 : i32
    %c0_i32_1 = arith.constant 0 : i32
    return %c0_i32, %c0_i32_0 : i32, i32
  }
  func.func @transform_8(%arg0: i32) -> (i32, i32) {
    %c0_i32 = arith.constant 0 : i32
    %c0_i32_0 = arith.constant 0 : i32
    %c0_i32_1 = arith.constant 0 : i32
    return %c0_i32, %c0_i32_0 : i32, i32
  }
  func.func @transform_9(%arg0: i32) -> (i32, i32) {
    %c0_i32 = arith.constant 0 : i32
    %c0_i32_0 = arith.constant 0 : i32
    %c0_i32_1 = arith.constant 0 : i32
    return %c0_i32, %c0_i32_0 : i32, i32
  }
  func.func @transform_10(%arg0: i32) -> (i32, i32, i32) {
    %c0_i32 = arith.constant 0 : i32
    %c0_i32_0 = arith.constant 0 : i32
    %c0_i32_1 = arith.constant 0 : i32
    return %arg0, %c0_i32, %c0_i32_0 : i32, i32, i32
  }
  func.func @transform_11(%arg0: i32) -> (i32, i32, i32) {
    %c0_i32 = arith.constant 0 : i32
    %c0_i32_0 = arith.constant 0 : i32
    %c0_i32_1 = arith.constant 0 : i32
    return %arg0, %c0_i32, %c0_i32_0 : i32, i32, i32
  }
}

module attributes {stable_mosaic.version = 11 : i64} {
  func.func @kernel(%arg0: i32, %arg1: memref<1x1x256xf32, #tpu.memory_space<vmem>>, %arg2: memref<1x1x256xf32, #tpu.memory_space<vmem>>, %arg3: memref<3x32x32xbf16, #tpu.memory_space<vmem>>, %arg4: memref<8x32xf32, #tpu.memory_space<vmem>>, %arg5: memref<8x32xf32, #tpu.memory_space<vmem>>, %arg6: memref<2x8x16xf32, #tpu.memory_space<vmem>>, %arg7: memref<32x32xbf16, #tpu.memory_space<vmem>>, %arg8: memref<32x32xbf16, #tpu.memory_space<vmem>>, %arg9: memref<32x128xbf16, #tpu.memory_space<vmem>>, %arg10: memref<128x32xbf16, #tpu.memory_space<vmem>>, %arg11: memref<1x1x256xf32, #tpu.memory_space<vmem>>, %arg12: memref<1x1x256xf32, #tpu.memory_space<vmem>>) attributes {dimension_semantics = [#tpu.dimension_semantics<parallel>], iteration_bounds = array<i64: 2>, scalar_prefetch = 0 : i64, scratch_operands = 0 : i64, tpu.core_type = #tpu.core_type<tc>, window_params = [{transform_indices = @transform_0, window_bounds = array<i64: 1, 1, 256>}, {transform_indices = @transform_1, window_bounds = array<i64: 1, 1, 256>}, {pipeline_mode = #tpu.pipeline_mode<synchronous>, transform_indices = @transform_2, window_bounds = array<i64: 3, 32, 32>}, {pipeline_mode = #tpu.pipeline_mode<synchronous>, transform_indices = @transform_3, window_bounds = array<i64: 8, 32>}, {pipeline_mode = #tpu.pipeline_mode<synchronous>, transform_indices = @transform_4, window_bounds = array<i64: 8, 32>}, {pipeline_mode = #tpu.pipeline_mode<synchronous>, transform_indices = @transform_5, window_bounds = array<i64: 2, 8, 16>}, {pipeline_mode = #tpu.pipeline_mode<synchronous>, transform_indices = @transform_6, window_bounds = array<i64: 32, 32>}, {pipeline_mode = #tpu.pipeline_mode<synchronous>, transform_indices = @transform_7, window_bounds = array<i64: 32, 32>}, {pipeline_mode = #tpu.pipeline_mode<synchronous>, transform_indices = @transform_8, window_bounds = array<i64: 32, 128>}, {pipeline_mode = #tpu.pipeline_mode<synchronous>, transform_indices = @transform_9, window_bounds = array<i64: 128, 32>}, {transform_indices = @transform_10, window_bounds = array<i64: 1, 1, 256>}, {transform_indices = @transform_11, window_bounds = array<i64: 1, 1, 256>}]} {
    %c0 = arith.constant 0 : index
    %c0_0 = arith.constant 0 : index
    %c0_1 = arith.constant 0 : index
    %0 = vector.load %arg1[%c0, %c0_0, %c0_1] : memref<1x1x256xf32, #tpu.memory_space<vmem>>, vector<1x1x256xf32>
    %1 = vector.shape_cast %0 : vector<1x1x256xf32> to vector<8x32xf32>
    %c0_2 = arith.constant 0 : index
    %c0_3 = arith.constant 0 : index
    %c0_4 = arith.constant 0 : index
    %2 = vector.load %arg2[%c0_2, %c0_3, %c0_4] : memref<1x1x256xf32, #tpu.memory_space<vmem>>, vector<1x1x256xf32>
    %3 = vector.shape_cast %2 : vector<1x1x256xf32> to vector<8x32xf32>
    %4 = arith.mulf %1, %1 : vector<8x32xf32>
    %5 = arith.mulf %3, %3 : vector<8x32xf32>
    %6 = arith.addf %4, %5 : vector<8x32xf32>
    %cst = arith.constant dense<0.000000e+00> : vector<8xf32>
    %7 = vector.multi_reduction <add>, %6, %cst [1] : vector<8x32xf32> to vector<8xf32>
    %8 = vector.shape_cast %7 : vector<8xf32> to vector<8x1xf32>
    %cst_5 = arith.constant 1.000000e-30 : f32
    %9 = vector.broadcast %cst_5 : f32 to vector<8x1xf32>
    %10 = arith.addf %8, %9 : vector<8x1xf32>
    %11 = math.rsqrt %10 : vector<8x1xf32>
    %12 = vector.broadcast %11 : vector<8x1xf32> to vector<8x32xf32>
    %13 = arith.mulf %1, %12 : vector<8x32xf32>
    %14 = vector.broadcast %11 : vector<8x1xf32> to vector<8x32xf32>
    %15 = arith.mulf %3, %14 : vector<8x32xf32>
    %16 = tpu.concatenate %13, %15 in 0 : vector<8x32xf32>, vector<8x32xf32> -> vector<16x32xf32>
    %17 = arith.truncf %16 : vector<16x32xf32> to vector<16x32xbf16>
    %c0_6 = arith.constant 0 : index
    %c0_7 = arith.constant 0 : index
    %c0_8 = arith.constant 0 : index
    %18 = vector.load %arg3[%c0_6, %c0_7, %c0_8] : memref<3x32x32xbf16, #tpu.memory_space<vmem>>, vector<1x32x32xbf16>
    %19 = vector.shape_cast %18 : vector<1x32x32xbf16> to vector<32x32xbf16>
    %cst_9 = arith.constant dense<0.000000e+00> : vector<16x32xf32>
    %20 = tpu.matmul %17, %19, %cst_9 {dimension_numbers = #tpu.dot_dimension_numbers<[1], [0], [0], [1], [0, 0, 1, 1], [], []>} : vector<16x32xbf16>, vector<32x32xbf16>, vector<16x32xf32> -> vector<16x32xf32>
    %c1 = arith.constant 1 : index
    %c0_10 = arith.constant 0 : index
    %c0_11 = arith.constant 0 : index
    %21 = vector.load %arg3[%c1, %c0_10, %c0_11] : memref<3x32x32xbf16, #tpu.memory_space<vmem>>, vector<1x32x32xbf16>
    %22 = vector.shape_cast %21 : vector<1x32x32xbf16> to vector<32x32xbf16>
    %cst_12 = arith.constant dense<0.000000e+00> : vector<16x32xf32>
    %23 = tpu.matmul %17, %22, %cst_12 {dimension_numbers = #tpu.dot_dimension_numbers<[1], [0], [0], [1], [0, 0, 1, 1], [], []>} : vector<16x32xbf16>, vector<32x32xbf16>, vector<16x32xf32> -> vector<16x32xf32>
    %c2 = arith.constant 2 : index
    %c0_13 = arith.constant 0 : index
    %c0_14 = arith.constant 0 : index
    %24 = vector.load %arg3[%c2, %c0_13, %c0_14] : memref<3x32x32xbf16, #tpu.memory_space<vmem>>, vector<1x32x32xbf16>
    %25 = vector.shape_cast %24 : vector<1x32x32xbf16> to vector<32x32xbf16>
    %cst_15 = arith.constant dense<0.000000e+00> : vector<16x32xf32>
    %26 = tpu.matmul %17, %25, %cst_15 {dimension_numbers = #tpu.dot_dimension_numbers<[1], [0], [0], [1], [0, 0, 1, 1], [], []>} : vector<16x32xbf16>, vector<32x32xbf16>, vector<16x32xf32> -> vector<16x32xf32>
    %c0_16 = arith.constant 0 : index
    %c0_17 = arith.constant 0 : index
    %27 = vector.load %arg4[%c0_16, %c0_17] : memref<8x32xf32, #tpu.memory_space<vmem>>, vector<8x32xf32>
    %c0_18 = arith.constant 0 : index
    %c0_19 = arith.constant 0 : index
    %28 = vector.load %arg5[%c0_18, %c0_19] : memref<8x32xf32, #tpu.memory_space<vmem>>, vector<8x32xf32>
    %29 = vector.extract_strided_slice %20 {offsets = [0, 0], sizes = [8, 32], strides = [1, 1]} : vector<16x32xf32> to vector<8x32xf32>
    %30 = vector.extract_strided_slice %20 {offsets = [8, 0], sizes = [8, 32], strides = [1, 1]} : vector<16x32xf32> to vector<8x32xf32>
    %31 = vector.extract_strided_slice %23 {offsets = [0, 0], sizes = [8, 32], strides = [1, 1]} : vector<16x32xf32> to vector<8x32xf32>
    %32 = vector.extract_strided_slice %23 {offsets = [8, 0], sizes = [8, 32], strides = [1, 1]} : vector<16x32xf32> to vector<8x32xf32>
    %33 = vector.extract_strided_slice %26 {offsets = [0, 0], sizes = [8, 32], strides = [1, 1]} : vector<16x32xf32> to vector<8x32xf32>
    %34 = vector.extract_strided_slice %26 {offsets = [8, 0], sizes = [8, 32], strides = [1, 1]} : vector<16x32xf32> to vector<8x32xf32>
    %35 = arith.mulf %29, %27 : vector<8x32xf32>
    %36 = arith.mulf %30, %28 : vector<8x32xf32>
    %37 = arith.subf %35, %36 : vector<8x32xf32>
    %38 = arith.mulf %29, %28 : vector<8x32xf32>
    %39 = arith.mulf %30, %27 : vector<8x32xf32>
    %40 = arith.addf %38, %39 : vector<8x32xf32>
    %41 = arith.mulf %31, %27 : vector<8x32xf32>
    %42 = arith.mulf %32, %28 : vector<8x32xf32>
    %43 = arith.addf %41, %42 : vector<8x32xf32>
    %44 = arith.mulf %32, %27 : vector<8x32xf32>
    %45 = arith.mulf %31, %28 : vector<8x32xf32>
    %46 = arith.subf %44, %45 : vector<8x32xf32>
    %47 = vector.extract_strided_slice %37 {offsets = [0, 0], sizes = [8, 16], strides = [1, 1]} : vector<8x32xf32> to vector<8x16xf32>
    %48 = vector.extract_strided_slice %37 {offsets = [0, 16], sizes = [8, 16], strides = [1, 1]} : vector<8x32xf32> to vector<8x16xf32>
    %49 = tpu.concatenate %47, %48 in 0 : vector<8x16xf32>, vector<8x16xf32> -> vector<16x16xf32>
    %50 = vector.shape_cast %49 : vector<16x16xf32> to vector<2x8x16xf32>
    %51 = vector.extract_strided_slice %40 {offsets = [0, 0], sizes = [8, 16], strides = [1, 1]} : vector<8x32xf32> to vector<8x16xf32>
    %52 = vector.extract_strided_slice %40 {offsets = [0, 16], sizes = [8, 16], strides = [1, 1]} : vector<8x32xf32> to vector<8x16xf32>
    %53 = tpu.concatenate %51, %52 in 0 : vector<8x16xf32>, vector<8x16xf32> -> vector<16x16xf32>
    %54 = vector.shape_cast %53 : vector<16x16xf32> to vector<2x8x16xf32>
    %55 = vector.extract_strided_slice %43 {offsets = [0, 0], sizes = [8, 16], strides = [1, 1]} : vector<8x32xf32> to vector<8x16xf32>
    %56 = vector.extract_strided_slice %43 {offsets = [0, 16], sizes = [8, 16], strides = [1, 1]} : vector<8x32xf32> to vector<8x16xf32>
    %57 = tpu.concatenate %55, %56 in 0 : vector<8x16xf32>, vector<8x16xf32> -> vector<16x16xf32>
    %58 = vector.shape_cast %57 : vector<16x16xf32> to vector<2x8x16xf32>
    %59 = vector.extract_strided_slice %46 {offsets = [0, 0], sizes = [8, 16], strides = [1, 1]} : vector<8x32xf32> to vector<8x16xf32>
    %60 = vector.extract_strided_slice %46 {offsets = [0, 16], sizes = [8, 16], strides = [1, 1]} : vector<8x32xf32> to vector<8x16xf32>
    %61 = tpu.concatenate %59, %60 in 0 : vector<8x16xf32>, vector<8x16xf32> -> vector<16x16xf32>
    %62 = vector.shape_cast %61 : vector<16x16xf32> to vector<2x8x16xf32>
    %63 = vector.extract_strided_slice %33 {offsets = [0, 0], sizes = [8, 16], strides = [1, 1]} : vector<8x32xf32> to vector<8x16xf32>
    %64 = vector.extract_strided_slice %33 {offsets = [0, 16], sizes = [8, 16], strides = [1, 1]} : vector<8x32xf32> to vector<8x16xf32>
    %65 = tpu.concatenate %63, %64 in 0 : vector<8x16xf32>, vector<8x16xf32> -> vector<16x16xf32>
    %66 = vector.shape_cast %65 : vector<16x16xf32> to vector<2x8x16xf32>
    %67 = vector.extract_strided_slice %34 {offsets = [0, 0], sizes = [8, 16], strides = [1, 1]} : vector<8x32xf32> to vector<8x16xf32>
    %68 = vector.extract_strided_slice %34 {offsets = [0, 16], sizes = [8, 16], strides = [1, 1]} : vector<8x32xf32> to vector<8x16xf32>
    %69 = tpu.concatenate %67, %68 in 0 : vector<8x16xf32>, vector<8x16xf32> -> vector<16x16xf32>
    %70 = vector.shape_cast %69 : vector<16x16xf32> to vector<2x8x16xf32>
    %71 = tpu.concatenate %50, %54 in 2 : vector<2x8x16xf32>, vector<2x8x16xf32> -> vector<2x8x32xf32>
    %72 = arith.truncf %71 : vector<2x8x32xf32> to vector<2x8x32xbf16>
    %cst_20 = arith.constant 0.000000e+00 : f32
    %73 = vector.broadcast %cst_20 : f32 to vector<2x8x16xf32>
    %74 = arith.subf %73, %62 : vector<2x8x16xf32>
    %75 = tpu.concatenate %58, %74 in 2 : vector<2x8x16xf32>, vector<2x8x16xf32> -> vector<2x8x32xf32>
    %76 = tpu.concatenate %62, %58 in 2 : vector<2x8x16xf32>, vector<2x8x16xf32> -> vector<2x8x32xf32>
    %77 = tpu.concatenate %75, %76 in 1 : vector<2x8x32xf32>, vector<2x8x32xf32> -> vector<2x16x32xf32>
    %78 = arith.truncf %77 : vector<2x16x32xf32> to vector<2x16x32xbf16>
    %cst_21 = arith.constant dense<0.000000e+00> : vector<2x8x16xf32>
    %79 = tpu.matmul %72, %78, %cst_21 {dimension_numbers = #tpu.dot_dimension_numbers<[2], [2], [1], [1], [0, 0, 0, 1, 1, 1], [0], [0]>} : vector<2x8x32xbf16>, vector<2x16x32xbf16>, vector<2x8x16xf32> -> vector<2x8x16xf32>
    %c0_22 = arith.constant 0 : index
    %c0_23 = arith.constant 0 : index
    %c0_24 = arith.constant 0 : index
    %80 = vector.load %arg6[%c0_22, %c0_23, %c0_24] : memref<2x8x16xf32, #tpu.memory_space<vmem>>, vector<2x8x16xf32>
    %81 = vector.shape_cast %80 : vector<2x8x16xf32> to vector<2x1x8x16xf32>
    %82 = vector.shape_cast %81 : vector<2x1x8x16xf32> to vector<2x8x16xf32>
    %83 = arith.mulf %79, %82 : vector<2x8x16xf32>
    %84 = tpu.concatenate %66, %70 in 2 : vector<2x8x16xf32>, vector<2x8x16xf32> -> vector<2x8x32xf32>
    %cst_25 = arith.constant 0.000000e+00 : f32
    %85 = vector.broadcast %cst_25 : f32 to vector<2x8x16xf32>
    %86 = arith.subf %85, %70 : vector<2x8x16xf32>
    %87 = tpu.concatenate %86, %66 in 2 : vector<2x8x16xf32>, vector<2x8x16xf32> -> vector<2x8x32xf32>
    %88 = tpu.concatenate %84, %87 in 1 : vector<2x8x32xf32>, vector<2x8x32xf32> -> vector<2x16x32xf32>
    %89 = arith.truncf %88 : vector<2x16x32xf32> to vector<2x16x32xbf16>
    %90 = arith.truncf %83 : vector<2x8x16xf32> to vector<2x8x16xbf16>
    %cst_26 = arith.constant dense<0.000000e+00> : vector<2x8x32xf32>
    %91 = tpu.matmul %90, %89, %cst_26 {dimension_numbers = #tpu.dot_dimension_numbers<[2], [1], [1], [2], [0, 0, 0, 1, 1, 2], [0], [0]>} : vector<2x8x16xbf16>, vector<2x16x32xbf16>, vector<2x8x32xf32> -> vector<2x8x32xf32>
    %92 = arith.mulf %91, %91 : vector<2x8x32xf32>
    %cst_27 = arith.constant dense<0.000000e+00> : vector<2x8xf32>
    %93 = vector.multi_reduction <add>, %92, %cst_27 [2] : vector<2x8x32xf32> to vector<2x8xf32>
    %94 = vector.shape_cast %93 : vector<2x8xf32> to vector<2x8x1xf32>
    %cst_28 = arith.constant 1.000000e-30 : f32
    %95 = vector.broadcast %cst_28 : f32 to vector<2x8x1xf32>
    %96 = arith.addf %94, %95 : vector<2x8x1xf32>
    %97 = math.rsqrt %96 : vector<2x8x1xf32>
    %98 = vector.broadcast %97 : vector<2x8x1xf32> to vector<2x8x32xf32>
    %99 = arith.mulf %91, %98 : vector<2x8x32xf32>
    %100 = vector.extract_strided_slice %99 {offsets = [0, 0, 0], sizes = [2, 8, 16], strides = [1, 1, 1]} : vector<2x8x32xf32> to vector<2x8x16xf32>
    %101 = vector.extract_strided_slice %100 {offsets = [0, 0, 0], sizes = [1, 8, 16], strides = [1, 1, 1]} : vector<2x8x16xf32> to vector<1x8x16xf32>
    %102 = vector.shape_cast %101 : vector<1x8x16xf32> to vector<8x16xf32>
    %103 = vector.extract_strided_slice %100 {offsets = [1, 0, 0], sizes = [1, 8, 16], strides = [1, 1, 1]} : vector<2x8x16xf32> to vector<1x8x16xf32>
    %104 = vector.shape_cast %103 : vector<1x8x16xf32> to vector<8x16xf32>
    %105 = tpu.concatenate %102, %104 in 1 : vector<8x16xf32>, vector<8x16xf32> -> vector<8x32xf32>
    %106 = vector.extract_strided_slice %99 {offsets = [0, 0, 16], sizes = [2, 8, 16], strides = [1, 1, 1]} : vector<2x8x32xf32> to vector<2x8x16xf32>
    %107 = vector.extract_strided_slice %106 {offsets = [0, 0, 0], sizes = [1, 8, 16], strides = [1, 1, 1]} : vector<2x8x16xf32> to vector<1x8x16xf32>
    %108 = vector.shape_cast %107 : vector<1x8x16xf32> to vector<8x16xf32>
    %109 = vector.extract_strided_slice %106 {offsets = [1, 0, 0], sizes = [1, 8, 16], strides = [1, 1, 1]} : vector<2x8x16xf32> to vector<1x8x16xf32>
    %110 = vector.shape_cast %109 : vector<1x8x16xf32> to vector<8x16xf32>
    %111 = tpu.concatenate %108, %110 in 1 : vector<8x16xf32>, vector<8x16xf32> -> vector<8x32xf32>
    %112 = tpu.concatenate %105, %111 in 0 : vector<8x32xf32>, vector<8x32xf32> -> vector<16x32xf32>
    %113 = arith.truncf %112 : vector<16x32xf32> to vector<16x32xbf16>
    %c0_29 = arith.constant 0 : index
    %c0_30 = arith.constant 0 : index
    %114 = vector.load %arg7[%c0_29, %c0_30] : memref<32x32xbf16, #tpu.memory_space<vmem>>, vector<32x32xbf16>
    %cst_31 = arith.constant dense<0.000000e+00> : vector<16x32xf32>
    %115 = tpu.matmul %113, %114, %cst_31 {dimension_numbers = #tpu.dot_dimension_numbers<[1], [0], [0], [1], [0, 0, 1, 1], [], []>} : vector<16x32xbf16>, vector<32x32xbf16>, vector<16x32xf32> -> vector<16x32xf32>
    %116 = vector.extract_strided_slice %115 {offsets = [0, 0], sizes = [8, 32], strides = [1, 1]} : vector<16x32xf32> to vector<8x32xf32>
    %117 = vector.extract_strided_slice %115 {offsets = [8, 0], sizes = [8, 32], strides = [1, 1]} : vector<16x32xf32> to vector<8x32xf32>
    %cst_32 = arith.constant -2.000000e+00 : f32
    %118 = vector.broadcast %cst_32 : f32 to vector<8x32xf32>
    %119 = arith.mulf %118, %116 : vector<8x32xf32>
    %cst_33 = arith.constant 4.000000e+01 : f32
    %120 = vector.broadcast %cst_33 : f32 to vector<8x32xf32>
    %121 = arith.minimumf %119, %120 : vector<8x32xf32>
    %122 = math.exp %121 : vector<8x32xf32>
    %cst_34 = arith.constant 2.000000e+00 : f32
    %123 = vector.broadcast %cst_34 : f32 to vector<8x32xf32>
    %124 = arith.mulf %123, %117 : vector<8x32xf32>
    %125 = math.cos %124 : vector<8x32xf32>
    %cst_35 = arith.constant 2.000000e+00 : f32
    %126 = vector.broadcast %cst_35 : f32 to vector<8x32xf32>
    %127 = arith.mulf %126, %117 : vector<8x32xf32>
    %128 = math.sin %127 : vector<8x32xf32>
    %129 = arith.mulf %122, %125 : vector<8x32xf32>
    %cst_36 = arith.constant 1.000000e+00 : f32
    %130 = vector.broadcast %cst_36 : f32 to vector<8x32xf32>
    %131 = arith.addf %130, %129 : vector<8x32xf32>
    %132 = arith.mulf %122, %128 : vector<8x32xf32>
    %cst_37 = arith.constant 0.000000e+00 : f32
    %133 = vector.broadcast %cst_37 : f32 to vector<8x32xf32>
    %134 = arith.subf %133, %132 : vector<8x32xf32>
    %cst_38 = arith.constant 2.000000e+00 : f32
    %135 = vector.broadcast %cst_38 : f32 to vector<8x32xf32>
    %136 = arith.mulf %135, %122 : vector<8x32xf32>
    %137 = arith.mulf %136, %125 : vector<8x32xf32>
    %cst_39 = arith.constant 1.000000e+00 : f32
    %138 = vector.broadcast %cst_39 : f32 to vector<8x32xf32>
    %139 = arith.addf %138, %137 : vector<8x32xf32>
    %140 = arith.mulf %122, %122 : vector<8x32xf32>
    %141 = arith.addf %139, %140 : vector<8x32xf32>
    %142 = tpu.reciprocal %141 {approx = true} : vector<8x32xf32> -> vector<8x32xf32>
    %143 = arith.mulf %116, %131 : vector<8x32xf32>
    %144 = arith.mulf %117, %134 : vector<8x32xf32>
    %145 = arith.addf %143, %144 : vector<8x32xf32>
    %146 = arith.mulf %145, %142 : vector<8x32xf32>
    %147 = arith.mulf %117, %131 : vector<8x32xf32>
    %148 = arith.mulf %116, %134 : vector<8x32xf32>
    %149 = arith.subf %147, %148 : vector<8x32xf32>
    %150 = arith.mulf %149, %142 : vector<8x32xf32>
    %151 = arith.mulf %105, %146 : vector<8x32xf32>
    %152 = arith.mulf %111, %150 : vector<8x32xf32>
    %153 = arith.subf %151, %152 : vector<8x32xf32>
    %154 = arith.mulf %105, %150 : vector<8x32xf32>
    %155 = arith.mulf %111, %146 : vector<8x32xf32>
    %156 = arith.addf %154, %155 : vector<8x32xf32>
    %157 = tpu.concatenate %153, %156 in 0 : vector<8x32xf32>, vector<8x32xf32> -> vector<16x32xf32>
    %158 = arith.truncf %157 : vector<16x32xf32> to vector<16x32xbf16>
    %c0_40 = arith.constant 0 : index
    %c0_41 = arith.constant 0 : index
    %159 = vector.load %arg8[%c0_40, %c0_41] : memref<32x32xbf16, #tpu.memory_space<vmem>>, vector<32x32xbf16>
    %cst_42 = arith.constant dense<0.000000e+00> : vector<16x32xf32>
    %160 = tpu.matmul %158, %159, %cst_42 {dimension_numbers = #tpu.dot_dimension_numbers<[1], [0], [0], [1], [0, 0, 1, 1], [], []>} : vector<16x32xbf16>, vector<32x32xbf16>, vector<16x32xf32> -> vector<16x32xf32>
    %161 = vector.extract_strided_slice %160 {offsets = [0, 0], sizes = [8, 32], strides = [1, 1]} : vector<16x32xf32> to vector<8x32xf32>
    %162 = arith.addf %1, %161 : vector<8x32xf32>
    %163 = vector.extract_strided_slice %160 {offsets = [8, 0], sizes = [8, 32], strides = [1, 1]} : vector<16x32xf32> to vector<8x32xf32>
    %164 = arith.addf %3, %163 : vector<8x32xf32>
    %165 = arith.mulf %162, %162 : vector<8x32xf32>
    %166 = arith.mulf %164, %164 : vector<8x32xf32>
    %167 = arith.addf %165, %166 : vector<8x32xf32>
    %cst_43 = arith.constant dense<0.000000e+00> : vector<8xf32>
    %168 = vector.multi_reduction <add>, %167, %cst_43 [1] : vector<8x32xf32> to vector<8xf32>
    %169 = vector.shape_cast %168 : vector<8xf32> to vector<8x1xf32>
    %cst_44 = arith.constant 1.000000e-30 : f32
    %170 = vector.broadcast %cst_44 : f32 to vector<8x1xf32>
    %171 = arith.addf %169, %170 : vector<8x1xf32>
    %172 = math.rsqrt %171 : vector<8x1xf32>
    %173 = vector.broadcast %172 : vector<8x1xf32> to vector<8x32xf32>
    %174 = arith.mulf %162, %173 : vector<8x32xf32>
    %175 = vector.broadcast %172 : vector<8x1xf32> to vector<8x32xf32>
    %176 = arith.mulf %164, %175 : vector<8x32xf32>
    %177 = tpu.concatenate %174, %176 in 0 : vector<8x32xf32>, vector<8x32xf32> -> vector<16x32xf32>
    %178 = arith.truncf %177 : vector<16x32xf32> to vector<16x32xbf16>
    %c0_45 = arith.constant 0 : index
    %c0_46 = arith.constant 0 : index
    %179 = vector.load %arg9[%c0_45, %c0_46] : memref<32x128xbf16, #tpu.memory_space<vmem>>, vector<32x128xbf16>
    %cst_47 = arith.constant dense<0.000000e+00> : vector<16x128xf32>
    %180 = tpu.matmul %178, %179, %cst_47 {dimension_numbers = #tpu.dot_dimension_numbers<[1], [0], [0], [1], [0, 0, 1, 1], [], []>} : vector<16x32xbf16>, vector<32x128xbf16>, vector<16x128xf32> -> vector<16x128xf32>
    %181 = vector.extract_strided_slice %180 {offsets = [0, 0], sizes = [8, 128], strides = [1, 1]} : vector<16x128xf32> to vector<8x128xf32>
    %182 = vector.extract_strided_slice %180 {offsets = [8, 0], sizes = [8, 128], strides = [1, 1]} : vector<16x128xf32> to vector<8x128xf32>
    %cst_48 = arith.constant 0.000000e+00 : f32
    %183 = vector.broadcast %cst_48 : f32 to vector<8x128xf32>
    %184 = arith.subf %183, %181 : vector<8x128xf32>
    %cst_49 = arith.constant 4.000000e+01 : f32
    %185 = vector.broadcast %cst_49 : f32 to vector<8x128xf32>
    %186 = arith.minimumf %184, %185 : vector<8x128xf32>
    %187 = math.exp %186 : vector<8x128xf32>
    %188 = math.cos %182 : vector<8x128xf32>
    %189 = math.sin %182 : vector<8x128xf32>
    %190 = arith.mulf %187, %188 : vector<8x128xf32>
    %cst_50 = arith.constant 1.000000e+00 : f32
    %191 = vector.broadcast %cst_50 : f32 to vector<8x128xf32>
    %192 = arith.addf %191, %190 : vector<8x128xf32>
    %193 = arith.mulf %187, %189 : vector<8x128xf32>
    %cst_51 = arith.constant 0.000000e+00 : f32
    %194 = vector.broadcast %cst_51 : f32 to vector<8x128xf32>
    %195 = arith.subf %194, %193 : vector<8x128xf32>
    %cst_52 = arith.constant 2.000000e+00 : f32
    %196 = vector.broadcast %cst_52 : f32 to vector<8x128xf32>
    %197 = arith.mulf %196, %187 : vector<8x128xf32>
    %198 = arith.mulf %197, %188 : vector<8x128xf32>
    %cst_53 = arith.constant 1.000000e+00 : f32
    %199 = vector.broadcast %cst_53 : f32 to vector<8x128xf32>
    %200 = arith.addf %199, %198 : vector<8x128xf32>
    %201 = arith.mulf %187, %187 : vector<8x128xf32>
    %202 = arith.addf %200, %201 : vector<8x128xf32>
    %203 = tpu.reciprocal %202 {approx = true} : vector<8x128xf32> -> vector<8x128xf32>
    %204 = arith.mulf %181, %192 : vector<8x128xf32>
    %205 = arith.mulf %182, %195 : vector<8x128xf32>
    %206 = arith.addf %204, %205 : vector<8x128xf32>
    %207 = arith.mulf %206, %203 : vector<8x128xf32>
    %208 = arith.mulf %182, %192 : vector<8x128xf32>
    %209 = arith.mulf %181, %195 : vector<8x128xf32>
    %210 = arith.subf %208, %209 : vector<8x128xf32>
    %211 = arith.mulf %210, %203 : vector<8x128xf32>
    %212 = tpu.concatenate %207, %211 in 0 : vector<8x128xf32>, vector<8x128xf32> -> vector<16x128xf32>
    %213 = arith.truncf %212 : vector<16x128xf32> to vector<16x128xbf16>
    %c0_54 = arith.constant 0 : index
    %c0_55 = arith.constant 0 : index
    %214 = vector.load %arg10[%c0_54, %c0_55] : memref<128x32xbf16, #tpu.memory_space<vmem>>, vector<128x32xbf16>
    %cst_56 = arith.constant dense<0.000000e+00> : vector<16x32xf32>
    %215 = tpu.matmul %213, %214, %cst_56 {dimension_numbers = #tpu.dot_dimension_numbers<[1], [0], [0], [1], [0, 0, 1, 1], [], []>} : vector<16x128xbf16>, vector<128x32xbf16>, vector<16x32xf32> -> vector<16x32xf32>
    %216 = vector.extract_strided_slice %215 {offsets = [0, 0], sizes = [8, 32], strides = [1, 1]} : vector<16x32xf32> to vector<8x32xf32>
    %217 = arith.addf %162, %216 : vector<8x32xf32>
    %218 = vector.shape_cast %217 : vector<8x32xf32> to vector<1x1x256xf32>
    %c0_57 = arith.constant 0 : index
    %c0_58 = arith.constant 0 : index
    %c0_59 = arith.constant 0 : index
    %219 = vector.load %arg11[%c0_57, %c0_58, %c0_59] : memref<1x1x256xf32, #tpu.memory_space<vmem>>, vector<1x1x256xf32>
    tpu.vector_store %arg11[%c0_57, %c0_58, %c0_59], %218 {strides = array<i32>} : memref<1x1x256xf32, #tpu.memory_space<vmem>>, vector<1x1x256xf32>,
    %220 = vector.extract_strided_slice %215 {offsets = [8, 0], sizes = [8, 32], strides = [1, 1]} : vector<16x32xf32> to vector<8x32xf32>
    %221 = arith.addf %164, %220 : vector<8x32xf32>
    %222 = vector.shape_cast %221 : vector<8x32xf32> to vector<1x1x256xf32>
    %c0_60 = arith.constant 0 : index
    %c0_61 = arith.constant 0 : index
    %c0_62 = arith.constant 0 : index
    %223 = vector.load %arg12[%c0_60, %c0_61, %c0_62] : memref<1x1x256xf32, #tpu.memory_space<vmem>>, vector<1x1x256xf32>
    tpu.vector_store %arg12[%c0_60, %c0_61, %c0_62], %222 {strides = array<i32>} : memref<1x1x256xf32, #tpu.memory_space<vmem>>, vector<1x1x256xf32>,
    return
  }
  func.func @transform_0(%arg0: i32) -> (i32, i32, i32) {
    %c0_i32 = arith.constant 0 : i32
    %c0_i32_0 = arith.constant 0 : i32
    %c0_i32_1 = arith.constant 0 : i32
    return %arg0, %c0_i32, %c0_i32_0 : i32, i32, i32
  }
  func.func @transform_1(%arg0: i32) -> (i32, i32, i32) {
    %c0_i32 = arith.constant 0 : i32
    %c0_i32_0 = arith.constant 0 : i32
    %c0_i32_1 = arith.constant 0 : i32
    return %arg0, %c0_i32, %c0_i32_0 : i32, i32, i32
  }
  func.func @transform_2(%arg0: i32) -> (i32, i32, i32) {
    %c0_i32 = arith.constant 0 : i32
    %c0_i32_0 = arith.constant 0 : i32
    %c0_i32_1 = arith.constant 0 : i32
    %c0_i32_2 = arith.constant 0 : i32
    return %c0_i32, %c0_i32_0, %c0_i32_1 : i32, i32, i32
  }
  func.func @transform_3(%arg0: i32) -> (i32, i32) {
    %c0_i32 = arith.constant 0 : i32
    %c0_i32_0 = arith.constant 0 : i32
    %c0_i32_1 = arith.constant 0 : i32
    return %c0_i32, %c0_i32_0 : i32, i32
  }
  func.func @transform_4(%arg0: i32) -> (i32, i32) {
    %c0_i32 = arith.constant 0 : i32
    %c0_i32_0 = arith.constant 0 : i32
    %c0_i32_1 = arith.constant 0 : i32
    return %c0_i32, %c0_i32_0 : i32, i32
  }
  func.func @transform_5(%arg0: i32) -> (i32, i32, i32) {
    %c0_i32 = arith.constant 0 : i32
    %c0_i32_0 = arith.constant 0 : i32
    %c0_i32_1 = arith.constant 0 : i32
    %c0_i32_2 = arith.constant 0 : i32
    return %c0_i32, %c0_i32_0, %c0_i32_1 : i32, i32, i32
  }
  func.func @transform_6(%arg0: i32) -> (i32, i32) {
    %c0_i32 = arith.constant 0 : i32
    %c0_i32_0 = arith.constant 0 : i32
    %c0_i32_1 = arith.constant 0 : i32
    return %c0_i32, %c0_i32_0 : i32, i32
  }
  func.func @transform_7(%arg0: i32) -> (i32, i32) {
    %c0_i32 = arith.constant 0 : i32
    %c0_i32_0 = arith.constant 0 : i32
    %c0_i32_1 = arith.constant 0 : i32
    return %c0_i32, %c0_i32_0 : i32, i32
  }
  func.func @transform_8(%arg0: i32) -> (i32, i32) {
    %c0_i32 = arith.constant 0 : i32
    %c0_i32_0 = arith.constant 0 : i32
    %c0_i32_1 = arith.constant 0 : i32
    return %c0_i32, %c0_i32_0 : i32, i32
  }
  func.func @transform_9(%arg0: i32) -> (i32, i32) {
    %c0_i32 = arith.constant 0 : i32
    %c0_i32_0 = arith.constant 0 : i32
    %c0_i32_1 = arith.constant 0 : i32
    return %c0_i32, %c0_i32_0 : i32, i32
  }
  func.func @transform_10(%arg0: i32) -> (i32, i32, i32) {
    %c0_i32 = arith.constant 0 : i32
    %c0_i32_0 = arith.constant 0 : i32
    %c0_i32_1 = arith.constant 0 : i32
    return %arg0, %c0_i32, %c0_i32_0 : i32, i32, i32
  }
  func.func @transform_11(%arg0: i32) -> (i32, i32, i32) {
    %c0_i32 = arith.constant 0 : i32
    %c0_i32_0 = arith.constant 0 : i32
    %c0_i32_1 = arith.constant 0 : i32
    return %arg0, %c0_i32, %c0_i32_0 : i32, i32, i32
  }
}

module attributes {stable_mosaic.version = 11 : i64} {
  func.func @kernel(%arg0: i32, %arg1: memref<1x8x32xf32, #tpu.memory_space<vmem>>, %arg2: memref<1x8x32xf32, #tpu.memory_space<vmem>>, %arg3: memref<3x32x32xbf16, #tpu.memory_space<vmem>>, %arg4: memref<8x32xf32, #tpu.memory_space<vmem>>, %arg5: memref<8x32xf32, #tpu.memory_space<vmem>>, %arg6: memref<2x8x16xf32, #tpu.memory_space<vmem>>, %arg7: memref<32x32xbf16, #tpu.memory_space<vmem>>, %arg8: memref<32x32xbf16, #tpu.memory_space<vmem>>, %arg9: memref<32x128xbf16, #tpu.memory_space<vmem>>, %arg10: memref<128x32xbf16, #tpu.memory_space<vmem>>, %arg11: memref<1x8x32xf32, #tpu.memory_space<vmem>>, %arg12: memref<1x8x32xf32, #tpu.memory_space<vmem>>) attributes {dimension_semantics = [#tpu.dimension_semantics<parallel>], iteration_bounds = array<i64: 2>, scalar_prefetch = 0 : i64, scratch_operands = 0 : i64, tpu.core_type = #tpu.core_type<tc>, window_params = [{transform_indices = @transform_0, window_bounds = array<i64: 1, 8, 32>}, {transform_indices = @transform_1, window_bounds = array<i64: 1, 8, 32>}, {pipeline_mode = #tpu.pipeline_mode<synchronous>, transform_indices = @transform_2, window_bounds = array<i64: 3, 32, 32>}, {pipeline_mode = #tpu.pipeline_mode<synchronous>, transform_indices = @transform_3, window_bounds = array<i64: 8, 32>}, {pipeline_mode = #tpu.pipeline_mode<synchronous>, transform_indices = @transform_4, window_bounds = array<i64: 8, 32>}, {pipeline_mode = #tpu.pipeline_mode<synchronous>, transform_indices = @transform_5, window_bounds = array<i64: 2, 8, 16>}, {pipeline_mode = #tpu.pipeline_mode<synchronous>, transform_indices = @transform_6, window_bounds = array<i64: 32, 32>}, {pipeline_mode = #tpu.pipeline_mode<synchronous>, transform_indices = @transform_7, window_bounds = array<i64: 32, 32>}, {pipeline_mode = #tpu.pipeline_mode<synchronous>, transform_indices = @transform_8, window_bounds = array<i64: 32, 128>}, {pipeline_mode = #tpu.pipeline_mode<synchronous>, transform_indices = @transform_9, window_bounds = array<i64: 128, 32>}, {transform_indices = @transform_10, window_bounds = array<i64: 1, 8, 32>}, {transform_indices = @transform_11, window_bounds = array<i64: 1, 8, 32>}]} {
    %c0 = arith.constant 0 : index
    %c0_0 = arith.constant 0 : index
    %c0_1 = arith.constant 0 : index
    %0 = vector.load %arg1[%c0, %c0_0, %c0_1] : memref<1x8x32xf32, #tpu.memory_space<vmem>>, vector<1x8x32xf32>
    %1 = vector.shape_cast %0 : vector<1x8x32xf32> to vector<8x32xf32>
    %c0_2 = arith.constant 0 : index
    %c0_3 = arith.constant 0 : index
    %c0_4 = arith.constant 0 : index
    %2 = vector.load %arg2[%c0_2, %c0_3, %c0_4] : memref<1x8x32xf32, #tpu.memory_space<vmem>>, vector<1x8x32xf32>
    %3 = vector.shape_cast %2 : vector<1x8x32xf32> to vector<8x32xf32>
    %4 = arith.mulf %1, %1 : vector<8x32xf32>
    %5 = arith.mulf %3, %3 : vector<8x32xf32>
    %6 = arith.addf %4, %5 : vector<8x32xf32>
    %cst = arith.constant dense<0.000000e+00> : vector<8xf32>
    %7 = vector.multi_reduction <add>, %6, %cst [1] : vector<8x32xf32> to vector<8xf32>
    %8 = vector.shape_cast %7 : vector<8xf32> to vector<8x1xf32>
    %cst_5 = arith.constant 1.000000e-30 : f32
    %9 = vector.broadcast %cst_5 : f32 to vector<8x1xf32>
    %10 = arith.addf %8, %9 : vector<8x1xf32>
    %11 = math.rsqrt %10 : vector<8x1xf32>
    %12 = vector.broadcast %11 : vector<8x1xf32> to vector<8x32xf32>
    %13 = arith.mulf %1, %12 : vector<8x32xf32>
    %14 = vector.broadcast %11 : vector<8x1xf32> to vector<8x32xf32>
    %15 = arith.mulf %3, %14 : vector<8x32xf32>
    %16 = tpu.concatenate %13, %15 in 0 : vector<8x32xf32>, vector<8x32xf32> -> vector<16x32xf32>
    %17 = arith.truncf %16 : vector<16x32xf32> to vector<16x32xbf16>
    %c0_6 = arith.constant 0 : index
    %c0_7 = arith.constant 0 : index
    %c0_8 = arith.constant 0 : index
    %18 = vector.load %arg3[%c0_6, %c0_7, %c0_8] : memref<3x32x32xbf16, #tpu.memory_space<vmem>>, vector<1x32x32xbf16>
    %19 = vector.shape_cast %18 : vector<1x32x32xbf16> to vector<32x32xbf16>
    %cst_9 = arith.constant dense<0.000000e+00> : vector<16x32xf32>
    %20 = tpu.matmul %17, %19, %cst_9 {dimension_numbers = #tpu.dot_dimension_numbers<[1], [0], [0], [1], [0, 0, 1, 1], [], []>} : vector<16x32xbf16>, vector<32x32xbf16>, vector<16x32xf32> -> vector<16x32xf32>
    %c1 = arith.constant 1 : index
    %c0_10 = arith.constant 0 : index
    %c0_11 = arith.constant 0 : index
    %21 = vector.load %arg3[%c1, %c0_10, %c0_11] : memref<3x32x32xbf16, #tpu.memory_space<vmem>>, vector<1x32x32xbf16>
    %22 = vector.shape_cast %21 : vector<1x32x32xbf16> to vector<32x32xbf16>
    %cst_12 = arith.constant dense<0.000000e+00> : vector<16x32xf32>
    %23 = tpu.matmul %17, %22, %cst_12 {dimension_numbers = #tpu.dot_dimension_numbers<[1], [0], [0], [1], [0, 0, 1, 1], [], []>} : vector<16x32xbf16>, vector<32x32xbf16>, vector<16x32xf32> -> vector<16x32xf32>
    %c2 = arith.constant 2 : index
    %c0_13 = arith.constant 0 : index
    %c0_14 = arith.constant 0 : index
    %24 = vector.load %arg3[%c2, %c0_13, %c0_14] : memref<3x32x32xbf16, #tpu.memory_space<vmem>>, vector<1x32x32xbf16>
    %25 = vector.shape_cast %24 : vector<1x32x32xbf16> to vector<32x32xbf16>
    %cst_15 = arith.constant dense<0.000000e+00> : vector<16x32xf32>
    %26 = tpu.matmul %17, %25, %cst_15 {dimension_numbers = #tpu.dot_dimension_numbers<[1], [0], [0], [1], [0, 0, 1, 1], [], []>} : vector<16x32xbf16>, vector<32x32xbf16>, vector<16x32xf32> -> vector<16x32xf32>
    %c0_16 = arith.constant 0 : index
    %c0_17 = arith.constant 0 : index
    %27 = vector.load %arg4[%c0_16, %c0_17] : memref<8x32xf32, #tpu.memory_space<vmem>>, vector<8x32xf32>
    %c0_18 = arith.constant 0 : index
    %c0_19 = arith.constant 0 : index
    %28 = vector.load %arg5[%c0_18, %c0_19] : memref<8x32xf32, #tpu.memory_space<vmem>>, vector<8x32xf32>
    %29 = vector.extract_strided_slice %20 {offsets = [0, 0], sizes = [8, 32], strides = [1, 1]} : vector<16x32xf32> to vector<8x32xf32>
    %30 = vector.extract_strided_slice %20 {offsets = [8, 0], sizes = [8, 32], strides = [1, 1]} : vector<16x32xf32> to vector<8x32xf32>
    %31 = vector.extract_strided_slice %23 {offsets = [0, 0], sizes = [8, 32], strides = [1, 1]} : vector<16x32xf32> to vector<8x32xf32>
    %32 = vector.extract_strided_slice %23 {offsets = [8, 0], sizes = [8, 32], strides = [1, 1]} : vector<16x32xf32> to vector<8x32xf32>
    %33 = vector.extract_strided_slice %26 {offsets = [0, 0], sizes = [8, 32], strides = [1, 1]} : vector<16x32xf32> to vector<8x32xf32>
    %34 = vector.extract_strided_slice %26 {offsets = [8, 0], sizes = [8, 32], strides = [1, 1]} : vector<16x32xf32> to vector<8x32xf32>
    %35 = arith.mulf %29, %27 : vector<8x32xf32>
    %36 = arith.mulf %30, %28 : vector<8x32xf32>
    %37 = arith.subf %35, %36 : vector<8x32xf32>
    %38 = arith.mulf %29, %28 : vector<8x32xf32>
    %39 = arith.mulf %30, %27 : vector<8x32xf32>
    %40 = arith.addf %38, %39 : vector<8x32xf32>
    %41 = arith.mulf %31, %27 : vector<8x32xf32>
    %42 = arith.mulf %32, %28 : vector<8x32xf32>
    %43 = arith.addf %41, %42 : vector<8x32xf32>
    %44 = arith.mulf %32, %27 : vector<8x32xf32>
    %45 = arith.mulf %31, %28 : vector<8x32xf32>
    %46 = arith.subf %44, %45 : vector<8x32xf32>
    %47 = vector.extract_strided_slice %37 {offsets = [0, 0], sizes = [8, 16], strides = [1, 1]} : vector<8x32xf32> to vector<8x16xf32>
    %48 = vector.extract_strided_slice %37 {offsets = [0, 16], sizes = [8, 16], strides = [1, 1]} : vector<8x32xf32> to vector<8x16xf32>
    %49 = tpu.concatenate %47, %48 in 0 : vector<8x16xf32>, vector<8x16xf32> -> vector<16x16xf32>
    %50 = vector.shape_cast %49 : vector<16x16xf32> to vector<2x8x16xf32>
    %51 = vector.extract_strided_slice %40 {offsets = [0, 0], sizes = [8, 16], strides = [1, 1]} : vector<8x32xf32> to vector<8x16xf32>
    %52 = vector.extract_strided_slice %40 {offsets = [0, 16], sizes = [8, 16], strides = [1, 1]} : vector<8x32xf32> to vector<8x16xf32>
    %53 = tpu.concatenate %51, %52 in 0 : vector<8x16xf32>, vector<8x16xf32> -> vector<16x16xf32>
    %54 = vector.shape_cast %53 : vector<16x16xf32> to vector<2x8x16xf32>
    %55 = vector.extract_strided_slice %43 {offsets = [0, 0], sizes = [8, 16], strides = [1, 1]} : vector<8x32xf32> to vector<8x16xf32>
    %56 = vector.extract_strided_slice %43 {offsets = [0, 16], sizes = [8, 16], strides = [1, 1]} : vector<8x32xf32> to vector<8x16xf32>
    %57 = tpu.concatenate %55, %56 in 0 : vector<8x16xf32>, vector<8x16xf32> -> vector<16x16xf32>
    %58 = vector.shape_cast %57 : vector<16x16xf32> to vector<2x8x16xf32>
    %59 = vector.extract_strided_slice %46 {offsets = [0, 0], sizes = [8, 16], strides = [1, 1]} : vector<8x32xf32> to vector<8x16xf32>
    %60 = vector.extract_strided_slice %46 {offsets = [0, 16], sizes = [8, 16], strides = [1, 1]} : vector<8x32xf32> to vector<8x16xf32>
    %61 = tpu.concatenate %59, %60 in 0 : vector<8x16xf32>, vector<8x16xf32> -> vector<16x16xf32>
    %62 = vector.shape_cast %61 : vector<16x16xf32> to vector<2x8x16xf32>
    %63 = vector.extract_strided_slice %33 {offsets = [0, 0], sizes = [8, 16], strides = [1, 1]} : vector<8x32xf32> to vector<8x16xf32>
    %64 = vector.extract_strided_slice %33 {offsets = [0, 16], sizes = [8, 16], strides = [1, 1]} : vector<8x32xf32> to vector<8x16xf32>
    %65 = tpu.concatenate %63, %64 in 0 : vector<8x16xf32>, vector<8x16xf32> -> vector<16x16xf32>
    %66 = vector.shape_cast %65 : vector<16x16xf32> to vector<2x8x16xf32>
    %67 = vector.extract_strided_slice %34 {offsets = [0, 0], sizes = [8, 16], strides = [1, 1]} : vector<8x32xf32> to vector<8x16xf32>
    %68 = vector.extract_strided_slice %34 {offsets = [0, 16], sizes = [8, 16], strides = [1, 1]} : vector<8x32xf32> to vector<8x16xf32>
    %69 = tpu.concatenate %67, %68 in 0 : vector<8x16xf32>, vector<8x16xf32> -> vector<16x16xf32>
    %70 = vector.shape_cast %69 : vector<16x16xf32> to vector<2x8x16xf32>
    %71 = tpu.concatenate %50, %54 in 2 : vector<2x8x16xf32>, vector<2x8x16xf32> -> vector<2x8x32xf32>
    %72 = arith.truncf %71 : vector<2x8x32xf32> to vector<2x8x32xbf16>
    %cst_20 = arith.constant 0.000000e+00 : f32
    %73 = vector.broadcast %cst_20 : f32 to vector<2x8x16xf32>
    %74 = arith.subf %73, %62 : vector<2x8x16xf32>
    %75 = tpu.concatenate %58, %74 in 2 : vector<2x8x16xf32>, vector<2x8x16xf32> -> vector<2x8x32xf32>
    %76 = tpu.concatenate %62, %58 in 2 : vector<2x8x16xf32>, vector<2x8x16xf32> -> vector<2x8x32xf32>
    %77 = tpu.concatenate %75, %76 in 1 : vector<2x8x32xf32>, vector<2x8x32xf32> -> vector<2x16x32xf32>
    %78 = arith.truncf %77 : vector<2x16x32xf32> to vector<2x16x32xbf16>
    %cst_21 = arith.constant dense<0.000000e+00> : vector<2x8x16xf32>
    %79 = tpu.matmul %72, %78, %cst_21 {dimension_numbers = #tpu.dot_dimension_numbers<[2], [2], [1], [1], [0, 0, 0, 1, 1, 1], [0], [0]>} : vector<2x8x32xbf16>, vector<2x16x32xbf16>, vector<2x8x16xf32> -> vector<2x8x16xf32>
    %c0_22 = arith.constant 0 : index
    %c0_23 = arith.constant 0 : index
    %c0_24 = arith.constant 0 : index
    %80 = vector.load %arg6[%c0_22, %c0_23, %c0_24] : memref<2x8x16xf32, #tpu.memory_space<vmem>>, vector<2x8x16xf32>
    %81 = vector.shape_cast %80 : vector<2x8x16xf32> to vector<2x1x8x16xf32>
    %82 = vector.shape_cast %81 : vector<2x1x8x16xf32> to vector<2x8x16xf32>
    %83 = arith.mulf %79, %82 : vector<2x8x16xf32>
    %84 = tpu.concatenate %66, %70 in 2 : vector<2x8x16xf32>, vector<2x8x16xf32> -> vector<2x8x32xf32>
    %cst_25 = arith.constant 0.000000e+00 : f32
    %85 = vector.broadcast %cst_25 : f32 to vector<2x8x16xf32>
    %86 = arith.subf %85, %70 : vector<2x8x16xf32>
    %87 = tpu.concatenate %86, %66 in 2 : vector<2x8x16xf32>, vector<2x8x16xf32> -> vector<2x8x32xf32>
    %88 = tpu.concatenate %84, %87 in 1 : vector<2x8x32xf32>, vector<2x8x32xf32> -> vector<2x16x32xf32>
    %89 = arith.truncf %88 : vector<2x16x32xf32> to vector<2x16x32xbf16>
    %90 = arith.truncf %83 : vector<2x8x16xf32> to vector<2x8x16xbf16>
    %cst_26 = arith.constant dense<0.000000e+00> : vector<2x8x32xf32>
    %91 = tpu.matmul %90, %89, %cst_26 {dimension_numbers = #tpu.dot_dimension_numbers<[2], [1], [1], [2], [0, 0, 0, 1, 1, 2], [0], [0]>} : vector<2x8x16xbf16>, vector<2x16x32xbf16>, vector<2x8x32xf32> -> vector<2x8x32xf32>
    %92 = arith.mulf %91, %91 : vector<2x8x32xf32>
    %cst_27 = arith.constant dense<0.000000e+00> : vector<2x8xf32>
    %93 = vector.multi_reduction <add>, %92, %cst_27 [2] : vector<2x8x32xf32> to vector<2x8xf32>
    %94 = vector.shape_cast %93 : vector<2x8xf32> to vector<2x8x1xf32>
    %cst_28 = arith.constant 1.000000e-30 : f32
    %95 = vector.broadcast %cst_28 : f32 to vector<2x8x1xf32>
    %96 = arith.addf %94, %95 : vector<2x8x1xf32>
    %97 = math.rsqrt %96 : vector<2x8x1xf32>
    %98 = vector.broadcast %97 : vector<2x8x1xf32> to vector<2x8x32xf32>
    %99 = arith.mulf %91, %98 : vector<2x8x32xf32>
    %100 = vector.extract_strided_slice %99 {offsets = [0, 0, 0], sizes = [2, 8, 16], strides = [1, 1, 1]} : vector<2x8x32xf32> to vector<2x8x16xf32>
    %101 = vector.extract_strided_slice %100 {offsets = [0, 0, 0], sizes = [1, 8, 16], strides = [1, 1, 1]} : vector<2x8x16xf32> to vector<1x8x16xf32>
    %102 = vector.shape_cast %101 : vector<1x8x16xf32> to vector<8x16xf32>
    %103 = vector.extract_strided_slice %100 {offsets = [1, 0, 0], sizes = [1, 8, 16], strides = [1, 1, 1]} : vector<2x8x16xf32> to vector<1x8x16xf32>
    %104 = vector.shape_cast %103 : vector<1x8x16xf32> to vector<8x16xf32>
    %105 = tpu.concatenate %102, %104 in 1 : vector<8x16xf32>, vector<8x16xf32> -> vector<8x32xf32>
    %106 = vector.extract_strided_slice %99 {offsets = [0, 0, 16], sizes = [2, 8, 16], strides = [1, 1, 1]} : vector<2x8x32xf32> to vector<2x8x16xf32>
    %107 = vector.extract_strided_slice %106 {offsets = [0, 0, 0], sizes = [1, 8, 16], strides = [1, 1, 1]} : vector<2x8x16xf32> to vector<1x8x16xf32>
    %108 = vector.shape_cast %107 : vector<1x8x16xf32> to vector<8x16xf32>
    %109 = vector.extract_strided_slice %106 {offsets = [1, 0, 0], sizes = [1, 8, 16], strides = [1, 1, 1]} : vector<2x8x16xf32> to vector<1x8x16xf32>
    %110 = vector.shape_cast %109 : vector<1x8x16xf32> to vector<8x16xf32>
    %111 = tpu.concatenate %108, %110 in 1 : vector<8x16xf32>, vector<8x16xf32> -> vector<8x32xf32>
    %112 = tpu.concatenate %105, %111 in 0 : vector<8x32xf32>, vector<8x32xf32> -> vector<16x32xf32>
    %113 = arith.truncf %112 : vector<16x32xf32> to vector<16x32xbf16>
    %c0_29 = arith.constant 0 : index
    %c0_30 = arith.constant 0 : index
    %114 = vector.load %arg7[%c0_29, %c0_30] : memref<32x32xbf16, #tpu.memory_space<vmem>>, vector<32x32xbf16>
    %cst_31 = arith.constant dense<0.000000e+00> : vector<16x32xf32>
    %115 = tpu.matmul %113, %114, %cst_31 {dimension_numbers = #tpu.dot_dimension_numbers<[1], [0], [0], [1], [0, 0, 1, 1], [], []>} : vector<16x32xbf16>, vector<32x32xbf16>, vector<16x32xf32> -> vector<16x32xf32>
    %116 = vector.extract_strided_slice %115 {offsets = [0, 0], sizes = [8, 32], strides = [1, 1]} : vector<16x32xf32> to vector<8x32xf32>
    %117 = vector.extract_strided_slice %115 {offsets = [8, 0], sizes = [8, 32], strides = [1, 1]} : vector<16x32xf32> to vector<8x32xf32>
    %cst_32 = arith.constant -2.000000e+00 : f32
    %118 = vector.broadcast %cst_32 : f32 to vector<8x32xf32>
    %119 = arith.mulf %118, %116 : vector<8x32xf32>
    %cst_33 = arith.constant 4.000000e+01 : f32
    %120 = vector.broadcast %cst_33 : f32 to vector<8x32xf32>
    %121 = arith.minimumf %119, %120 : vector<8x32xf32>
    %122 = math.exp %121 : vector<8x32xf32>
    %cst_34 = arith.constant 2.000000e+00 : f32
    %123 = vector.broadcast %cst_34 : f32 to vector<8x32xf32>
    %124 = arith.mulf %123, %117 : vector<8x32xf32>
    %125 = math.cos %124 : vector<8x32xf32>
    %cst_35 = arith.constant 2.000000e+00 : f32
    %126 = vector.broadcast %cst_35 : f32 to vector<8x32xf32>
    %127 = arith.mulf %126, %117 : vector<8x32xf32>
    %128 = math.sin %127 : vector<8x32xf32>
    %129 = arith.mulf %122, %125 : vector<8x32xf32>
    %cst_36 = arith.constant 1.000000e+00 : f32
    %130 = vector.broadcast %cst_36 : f32 to vector<8x32xf32>
    %131 = arith.addf %130, %129 : vector<8x32xf32>
    %132 = arith.mulf %122, %128 : vector<8x32xf32>
    %cst_37 = arith.constant 0.000000e+00 : f32
    %133 = vector.broadcast %cst_37 : f32 to vector<8x32xf32>
    %134 = arith.subf %133, %132 : vector<8x32xf32>
    %cst_38 = arith.constant 2.000000e+00 : f32
    %135 = vector.broadcast %cst_38 : f32 to vector<8x32xf32>
    %136 = arith.mulf %135, %122 : vector<8x32xf32>
    %137 = arith.mulf %136, %125 : vector<8x32xf32>
    %cst_39 = arith.constant 1.000000e+00 : f32
    %138 = vector.broadcast %cst_39 : f32 to vector<8x32xf32>
    %139 = arith.addf %138, %137 : vector<8x32xf32>
    %140 = arith.mulf %122, %122 : vector<8x32xf32>
    %141 = arith.addf %139, %140 : vector<8x32xf32>
    %142 = tpu.reciprocal %141 {approx = true} : vector<8x32xf32> -> vector<8x32xf32>
    %143 = arith.mulf %116, %131 : vector<8x32xf32>
    %144 = arith.mulf %117, %134 : vector<8x32xf32>
    %145 = arith.addf %143, %144 : vector<8x32xf32>
    %146 = arith.mulf %145, %142 : vector<8x32xf32>
    %147 = arith.mulf %117, %131 : vector<8x32xf32>
    %148 = arith.mulf %116, %134 : vector<8x32xf32>
    %149 = arith.subf %147, %148 : vector<8x32xf32>
    %150 = arith.mulf %149, %142 : vector<8x32xf32>
    %151 = arith.mulf %105, %146 : vector<8x32xf32>
    %152 = arith.mulf %111, %150 : vector<8x32xf32>
    %153 = arith.subf %151, %152 : vector<8x32xf32>
    %154 = arith.mulf %105, %150 : vector<8x32xf32>
    %155 = arith.mulf %111, %146 : vector<8x32xf32>
    %156 = arith.addf %154, %155 : vector<8x32xf32>
    %157 = tpu.concatenate %153, %156 in 0 : vector<8x32xf32>, vector<8x32xf32> -> vector<16x32xf32>
    %158 = arith.truncf %157 : vector<16x32xf32> to vector<16x32xbf16>
    %c0_40 = arith.constant 0 : index
    %c0_41 = arith.constant 0 : index
    %159 = vector.load %arg8[%c0_40, %c0_41] : memref<32x32xbf16, #tpu.memory_space<vmem>>, vector<32x32xbf16>
    %cst_42 = arith.constant dense<0.000000e+00> : vector<16x32xf32>
    %160 = tpu.matmul %158, %159, %cst_42 {dimension_numbers = #tpu.dot_dimension_numbers<[1], [0], [0], [1], [0, 0, 1, 1], [], []>} : vector<16x32xbf16>, vector<32x32xbf16>, vector<16x32xf32> -> vector<16x32xf32>
    %161 = vector.extract_strided_slice %160 {offsets = [0, 0], sizes = [8, 32], strides = [1, 1]} : vector<16x32xf32> to vector<8x32xf32>
    %162 = arith.addf %1, %161 : vector<8x32xf32>
    %163 = vector.extract_strided_slice %160 {offsets = [8, 0], sizes = [8, 32], strides = [1, 1]} : vector<16x32xf32> to vector<8x32xf32>
    %164 = arith.addf %3, %163 : vector<8x32xf32>
    %165 = arith.mulf %162, %162 : vector<8x32xf32>
    %166 = arith.mulf %164, %164 : vector<8x32xf32>
    %167 = arith.addf %165, %166 : vector<8x32xf32>
    %cst_43 = arith.constant dense<0.000000e+00> : vector<8xf32>
    %168 = vector.multi_reduction <add>, %167, %cst_43 [1] : vector<8x32xf32> to vector<8xf32>
    %169 = vector.shape_cast %168 : vector<8xf32> to vector<8x1xf32>
    %cst_44 = arith.constant 1.000000e-30 : f32
    %170 = vector.broadcast %cst_44 : f32 to vector<8x1xf32>
    %171 = arith.addf %169, %170 : vector<8x1xf32>
    %172 = math.rsqrt %171 : vector<8x1xf32>
    %173 = vector.broadcast %172 : vector<8x1xf32> to vector<8x32xf32>
    %174 = arith.mulf %162, %173 : vector<8x32xf32>
    %175 = vector.broadcast %172 : vector<8x1xf32> to vector<8x32xf32>
    %176 = arith.mulf %164, %175 : vector<8x32xf32>
    %177 = tpu.concatenate %174, %176 in 0 : vector<8x32xf32>, vector<8x32xf32> -> vector<16x32xf32>
    %178 = arith.truncf %177 : vector<16x32xf32> to vector<16x32xbf16>
    %c0_45 = arith.constant 0 : index
    %c0_46 = arith.constant 0 : index
    %179 = vector.load %arg9[%c0_45, %c0_46] : memref<32x128xbf16, #tpu.memory_space<vmem>>, vector<32x128xbf16>
    %cst_47 = arith.constant dense<0.000000e+00> : vector<16x128xf32>
    %180 = tpu.matmul %178, %179, %cst_47 {dimension_numbers = #tpu.dot_dimension_numbers<[1], [0], [0], [1], [0, 0, 1, 1], [], []>} : vector<16x32xbf16>, vector<32x128xbf16>, vector<16x128xf32> -> vector<16x128xf32>
    %181 = vector.extract_strided_slice %180 {offsets = [0, 0], sizes = [8, 128], strides = [1, 1]} : vector<16x128xf32> to vector<8x128xf32>
    %182 = vector.extract_strided_slice %180 {offsets = [8, 0], sizes = [8, 128], strides = [1, 1]} : vector<16x128xf32> to vector<8x128xf32>
    %cst_48 = arith.constant 0.000000e+00 : f32
    %183 = vector.broadcast %cst_48 : f32 to vector<8x128xf32>
    %184 = arith.subf %183, %181 : vector<8x128xf32>
    %cst_49 = arith.constant 4.000000e+01 : f32
    %185 = vector.broadcast %cst_49 : f32 to vector<8x128xf32>
    %186 = arith.minimumf %184, %185 : vector<8x128xf32>
    %187 = math.exp %186 : vector<8x128xf32>
    %188 = math.cos %182 : vector<8x128xf32>
    %189 = math.sin %182 : vector<8x128xf32>
    %190 = arith.mulf %187, %188 : vector<8x128xf32>
    %cst_50 = arith.constant 1.000000e+00 : f32
    %191 = vector.broadcast %cst_50 : f32 to vector<8x128xf32>
    %192 = arith.addf %191, %190 : vector<8x128xf32>
    %193 = arith.mulf %187, %189 : vector<8x128xf32>
    %cst_51 = arith.constant 0.000000e+00 : f32
    %194 = vector.broadcast %cst_51 : f32 to vector<8x128xf32>
    %195 = arith.subf %194, %193 : vector<8x128xf32>
    %cst_52 = arith.constant 2.000000e+00 : f32
    %196 = vector.broadcast %cst_52 : f32 to vector<8x128xf32>
    %197 = arith.mulf %196, %187 : vector<8x128xf32>
    %198 = arith.mulf %197, %188 : vector<8x128xf32>
    %cst_53 = arith.constant 1.000000e+00 : f32
    %199 = vector.broadcast %cst_53 : f32 to vector<8x128xf32>
    %200 = arith.addf %199, %198 : vector<8x128xf32>
    %201 = arith.mulf %187, %187 : vector<8x128xf32>
    %202 = arith.addf %200, %201 : vector<8x128xf32>
    %203 = tpu.reciprocal %202 {approx = true} : vector<8x128xf32> -> vector<8x128xf32>
    %204 = arith.mulf %181, %192 : vector<8x128xf32>
    %205 = arith.mulf %182, %195 : vector<8x128xf32>
    %206 = arith.addf %204, %205 : vector<8x128xf32>
    %207 = arith.mulf %206, %203 : vector<8x128xf32>
    %208 = arith.mulf %182, %192 : vector<8x128xf32>
    %209 = arith.mulf %181, %195 : vector<8x128xf32>
    %210 = arith.subf %208, %209 : vector<8x128xf32>
    %211 = arith.mulf %210, %203 : vector<8x128xf32>
    %212 = tpu.concatenate %207, %211 in 0 : vector<8x128xf32>, vector<8x128xf32> -> vector<16x128xf32>
    %213 = arith.truncf %212 : vector<16x128xf32> to vector<16x128xbf16>
    %c0_54 = arith.constant 0 : index
    %c0_55 = arith.constant 0 : index
    %214 = vector.load %arg10[%c0_54, %c0_55] : memref<128x32xbf16, #tpu.memory_space<vmem>>, vector<128x32xbf16>
    %cst_56 = arith.constant dense<0.000000e+00> : vector<16x32xf32>
    %215 = tpu.matmul %213, %214, %cst_56 {dimension_numbers = #tpu.dot_dimension_numbers<[1], [0], [0], [1], [0, 0, 1, 1], [], []>} : vector<16x128xbf16>, vector<128x32xbf16>, vector<16x32xf32> -> vector<16x32xf32>
    %216 = vector.extract_strided_slice %215 {offsets = [0, 0], sizes = [8, 32], strides = [1, 1]} : vector<16x32xf32> to vector<8x32xf32>
    %217 = arith.addf %162, %216 : vector<8x32xf32>
    %218 = vector.shape_cast %217 : vector<8x32xf32> to vector<1x8x32xf32>
    %c0_57 = arith.constant 0 : index
    %c0_58 = arith.constant 0 : index
    %c0_59 = arith.constant 0 : index
    %219 = vector.load %arg11[%c0_57, %c0_58, %c0_59] : memref<1x8x32xf32, #tpu.memory_space<vmem>>, vector<1x8x32xf32>
    tpu.vector_store %arg11[%c0_57, %c0_58, %c0_59], %218 {strides = array<i32>} : memref<1x8x32xf32, #tpu.memory_space<vmem>>, vector<1x8x32xf32>,
    %220 = vector.extract_strided_slice %215 {offsets = [8, 0], sizes = [8, 32], strides = [1, 1]} : vector<16x32xf32> to vector<8x32xf32>
    %221 = arith.addf %164, %220 : vector<8x32xf32>
    %222 = vector.shape_cast %221 : vector<8x32xf32> to vector<1x8x32xf32>
    %c0_60 = arith.constant 0 : index
    %c0_61 = arith.constant 0 : index
    %c0_62 = arith.constant 0 : index
    %223 = vector.load %arg12[%c0_60, %c0_61, %c0_62] : memref<1x8x32xf32, #tpu.memory_space<vmem>>, vector<1x8x32xf32>
    tpu.vector_store %arg12[%c0_60, %c0_61, %c0_62], %222 {strides = array<i32>} : memref<1x8x32xf32, #tpu.memory_space<vmem>>, vector<1x8x32xf32>,
    return
  }
  func.func @transform_0(%arg0: i32) -> (i32, i32, i32) {
    %c0_i32 = arith.constant 0 : i32
    %c0_i32_0 = arith.constant 0 : i32
    %c0_i32_1 = arith.constant 0 : i32
    return %arg0, %c0_i32, %c0_i32_0 : i32, i32, i32
  }
  func.func @transform_1(%arg0: i32) -> (i32, i32, i32) {
    %c0_i32 = arith.constant 0 : i32
    %c0_i32_0 = arith.constant 0 : i32
    %c0_i32_1 = arith.constant 0 : i32
    return %arg0, %c0_i32, %c0_i32_0 : i32, i32, i32
  }
  func.func @transform_2(%arg0: i32) -> (i32, i32, i32) {
    %c0_i32 = arith.constant 0 : i32
    %c0_i32_0 = arith.constant 0 : i32
    %c0_i32_1 = arith.constant 0 : i32
    %c0_i32_2 = arith.constant 0 : i32
    return %c0_i32, %c0_i32_0, %c0_i32_1 : i32, i32, i32
  }
  func.func @transform_3(%arg0: i32) -> (i32, i32) {
    %c0_i32 = arith.constant 0 : i32
    %c0_i32_0 = arith.constant 0 : i32
    %c0_i32_1 = arith.constant 0 : i32
    return %c0_i32, %c0_i32_0 : i32, i32
  }
  func.func @transform_4(%arg0: i32) -> (i32, i32) {
    %c0_i32 = arith.constant 0 : i32
    %c0_i32_0 = arith.constant 0 : i32
    %c0_i32_1 = arith.constant 0 : i32
    return %c0_i32, %c0_i32_0 : i32, i32
  }
  func.func @transform_5(%arg0: i32) -> (i32, i32, i32) {
    %c0_i32 = arith.constant 0 : i32
    %c0_i32_0 = arith.constant 0 : i32
    %c0_i32_1 = arith.constant 0 : i32
    %c0_i32_2 = arith.constant 0 : i32
    return %c0_i32, %c0_i32_0, %c0_i32_1 : i32, i32, i32
  }
  func.func @transform_6(%arg0: i32) -> (i32, i32) {
    %c0_i32 = arith.constant 0 : i32
    %c0_i32_0 = arith.constant 0 : i32
    %c0_i32_1 = arith.constant 0 : i32
    return %c0_i32, %c0_i32_0 : i32, i32
  }
  func.func @transform_7(%arg0: i32) -> (i32, i32) {
    %c0_i32 = arith.constant 0 : i32
    %c0_i32_0 = arith.constant 0 : i32
    %c0_i32_1 = arith.constant 0 : i32
    return %c0_i32, %c0_i32_0 : i32, i32
  }
  func.func @transform_8(%arg0: i32) -> (i32, i32) {
    %c0_i32 = arith.constant 0 : i32
    %c0_i32_0 = arith.constant 0 : i32
    %c0_i32_1 = arith.constant 0 : i32
    return %c0_i32, %c0_i32_0 : i32, i32
  }
  func.func @transform_9(%arg0: i32) -> (i32, i32) {
    %c0_i32 = arith.constant 0 : i32
    %c0_i32_0 = arith.constant 0 : i32
    %c0_i32_1 = arith.constant 0 : i32
    return %c0_i32, %c0_i32_0 : i32, i32
  }
  func.func @transform_10(%arg0: i32) -> (i32, i32, i32) {
    %c0_i32 = arith.constant 0 : i32
    %c0_i32_0 = arith.constant 0 : i32
    %c0_i32_1 = arith.constant 0 : i32
    return %arg0, %c0_i32, %c0_i32_0 : i32, i32, i32
  }
  func.func @transform_11(%arg0: i32) -> (i32, i32, i32) {
    %c0_i32 = arith.constant 0 : i32
    %c0_i32_0 = arith.constant 0 : i32
    %c0_i32_1 = arith.constant 0 : i32
    return %arg0, %c0_i32, %c0_i32_0 : i32, i32, i32
  }
}

</mosaic_0001>

<llo_original>
// kernel: tpu_custom_call.1
$region0: #{tpu_custom_call.1}
  #allocation0 [shape = 'u32[]', space=smem, size = 0x4, offset = 0x4, fixed_abs, tag = 'smem constant byte address 0x4 - core index']
  #allocation1 [shape = 'u32[144,128]{1,0:T(1,128)}', space=vmem, size = 0x12000, scoped, tag = 'internal scratch']
  %s0 = inlined_call_operand.vmem [shape: f32[2,8,32], index: 0, kind: input, shape index: {}]
  %s1 = inlined_call_operand.vmem [shape: f32[2,8,32], index: 1, kind: input, shape index: {}]
  %s2 = inlined_call_operand.vmem [shape: bf16[3,32,32], index: 2, kind: input, shape index: {}]
  %s3 = inlined_call_operand.hbm [shape: f32[8,32], index: 3, kind: input, shape index: {}]
  %s4 = inlined_call_operand.hbm [shape: f32[8,32], index: 4, kind: input, shape index: {}]
  %s5 = inlined_call_operand.vmem [shape: f32[2,8,16], index: 5, kind: input, shape index: {}]
  %s6 = inlined_call_operand.hbm [shape: bf16[32,32], index: 6, kind: input, shape index: {}]
  %s7 = inlined_call_operand.hbm [shape: bf16[32,32], index: 7, kind: input, shape index: {}]
  %s8 = inlined_call_operand.hbm [shape: bf16[32,128], index: 8, kind: input, shape index: {}]
  %s9 = inlined_call_operand.vmem [shape: bf16[128,32], index: 9, kind: input, shape index: {}]
  %s10 = inlined_call_operand.hbm [shape: f32[2,8,32], index: 10, kind: output, shape index: {0}]
  %s11 = inlined_call_operand.hbm [shape: f32[2,8,32], index: 11, kind: output, shape index: {1}]
  %12 = xla_tuple %s10, %s11
  %s13 = sld [smem:[#allocation0]]
  $region101: #{tpu_custom_call.1} parent=0
    _
  %s15 = ssub.s32 1, %s13
  %s16 = scalar_select 0, %s15, %s13
  $region1: #{tpu_custom_call.1} parent=0
    #allocation2 [shape = 'u8[4096]{0}', space=vmem, size = 0x1000, scoped, tag = 'input window, operand 3, single buffered']
    #allocation3 [shape = 's32[2]{0}', space=sflag, size = 0x8, scoped, tag = 'scoped memory for tpu_custom_call.1']
    #allocation4 [shape = 's32[2]{0}', space=sflag, size = 0x8, scoped, tag = 'scoped memory for tpu_custom_call.1']
    #allocation5 [shape = 'u8[4096]{0}', space=vmem, size = 0x1000, scoped, tag = 'input window, operand 4, single buffered']
    #allocation6 [shape = 's32[1]{0}', space=sflag, size = 0x4, scoped, tag = 'scoped memory for tpu_custom_call.1']
    #allocation7 [shape = 'u8[8192]{0}', space=vmem, size = 0x2000, scoped, tag = 'input window, operand 6, single buffered']
    #allocation8 [shape = 'u8[8192]{0}', space=vmem, size = 0x2000, scoped, tag = 'input window, operand 7, single buffered']
    #allocation9 [shape = 's32[1]{0}', space=sflag, size = 0x4, scoped, tag = 'scoped memory for tpu_custom_call.1']
    #allocation10 [shape = 'u8[8192]{0}', space=vmem, size = 0x2000, scoped, tag = 'input window, operand 8, single buffered']
    #allocation11 [shape = 'u8[8192]{0}', space=vmem, size = 0x2000, scoped, tag = 'output window, operand 0']
    #allocation12 [shape = 'u8[8192]{0}', space=vmem, size = 0x2000, scoped, tag = 'output window, operand 1']
    #allocation13 [shape = 's32[2]{0}', space=sflag, size = 0x8, scoped, tag = 'scoped memory for tpu_custom_call.1']
    %17 = vsyncpa [#allocation3], 0
    %18 = vsyncpa [#allocation6], 0
    %19 = vsyncpa [#allocation9], 0
    %20 = vsyncpa [#allocation4], 0
    %s21 = scalar_lea.sflag [#allocation4], 1
    %22 = vsyncpa %s21, 0
    %23 = vsyncpa [#allocation13], 0
    %s24 = scalar_lea.sflag [#allocation13], 1
    %25 = vsyncpa %s24, 0
    loop: start=0, step=1, limit=4
    $region2: #{tpu_custom_call.1} parent=1 // loop_pre_header
      _
    $region3: #{tpu_custom_call.1} parent=1 // loop_header
      %s27 = sphi 0, %s31
      %p28 = scmp.ge.s32.totalorder %s27, 4
      %s37 = sphi 0, %s39
      %s40 = sphi 0, %s37
      %s41 = sphi 0, %s40
      %s57 = sphi 0, %s41
      %s63 = sphi 0, %s65
      %s66 = sphi 0, %s63
      %s67 = sphi 0, %s66
      %s83 = sphi 0, %s67
      %s87 = sphi 0, %s87
      %s89 = sphi 0, %s87
      %s90 = sphi 0, %s89
      %s104 = sphi 0, %s90
      %s108 = sphi 0, %s108
      %s110 = sphi 0, %s108
      %s111 = sphi 0, %s110
      %s125 = sphi 0, %s111
      %s129 = sphi 0, %s129
      %s131 = sphi 0, %s129
      %s132 = sphi 0, %s131
      %s146 = sphi 0, %s132
      %s150 = sphi 0, %s150
      %s152 = sphi 0, %s150
      %s153 = sphi 0, %s152
      %s167 = sphi 0, %s153
      %s171 = sphi 0, %s171
      %s173 = sphi 0, %s171
      %s174 = sphi 0, %s173
      %s188 = sphi 0, %s174
      %s192 = sphi 0, %s192
      %s194 = sphi 0, %s192
      %s195 = sphi 0, %s194
      %s209 = sphi 0, %s195
      %s213 = sphi 0, %s213
      %s215 = sphi 0, %s213
      %s216 = sphi 0, %s215
      %s230 = sphi 0, %s216
      %s234 = sphi 0, %s234
      %s236 = sphi 0, %s234
      %s237 = sphi 0, %s236
      %s251 = sphi 0, %s237
      %s257 = sphi 0, %s259
      %s260 = sphi 0, %s257
      %s261 = sphi 0, %s260
      %s277 = sphi 0, %s261
      %s283 = sphi 0, %s285
      %s286 = sphi 0, %s283
      %s287 = sphi 0, %s286
      %s303 = sphi 0, %s287
    $region4: #{tpu_custom_call.1} parent=1 // loop_header_branch
      %30 = sbr.rel (%p28) target = $region8
    $region5: #{tpu_custom_call.1} parent=1 // loop_body
      %s32 = ssub.s32 %s27, 1
      %s33 = ssub.s32 %s27, 2
      %s34 = sadd.s32 %s27, 1
      %s35 = ssub.s32 %s27, %s34
      %p36 = scmp.eq.s32.totalorder %s35, 0
      %s38 = sadd.s32 %s37, 1
      %s39 = scalar_select %p36, %s37, %s38
      %p42 = pneg %p36
      %p43 = scmp.eq.s32.totalorder %s27, 1
      %p44 = por %p42, %p43
      %p45 = scmp.ne.s32.totalorder %s37, %s40
      %p46 = scmp.eq.s32.totalorder %s27, 0
      %p47 = por %p45, %p46
      %p48 = scmp.ne.s32.totalorder %s37, %s40
      %p49 = scmp.eq.s32.totalorder %s32, 1
      %p50 = por %p48, %p49
      %p51 = scmp.ne.s32.totalorder %s40, %s41
      %p52 = scmp.eq.s32.totalorder %s32, 0
      %p53 = por %p51, %p52
      %p54 = scmp.ne.s32.totalorder %s40, %s41
      %p55 = scmp.eq.s32.totalorder %s33, 1
      %p56 = por %p54, %p55
      %p58 = scmp.ne.s32.totalorder %s41, %s57
      %p59 = scmp.eq.s32.totalorder %s33, 0
      %p60 = por %p58, %p59
      %s61 = ssub.s32 %s27, %s34
      %p62 = scmp.eq.s32.totalorder %s61, 0
      %s64 = sadd.s32 %s63, 1
      %s65 = scalar_select %p62, %s63, %s64
      %p68 = pneg %p62
      %p69 = scmp.eq.s32.totalorder %s27, 1
      %p70 = por %p68, %p69
      %p71 = scmp.ne.s32.totalorder %s63, %s66
      %p72 = scmp.eq.s32.totalorder %s27, 0
      %p73 = por %p71, %p72
      %p74 = scmp.ne.s32.totalorder %s63, %s66
      %p75 = scmp.eq.s32.totalorder %s32, 1
      %p76 = por %p74, %p75
      %p77 = scmp.ne.s32.totalorder %s66, %s67
      %p78 = scmp.eq.s32.totalorder %s32, 0
      %p79 = por %p77, %p78
      %p80 = scmp.ne.s32.totalorder %s66, %s67
      %p81 = scmp.eq.s32.totalorder %s33, 1
      %p82 = por %p80, %p81
      %p84 = scmp.ne.s32.totalorder %s67, %s83
      %p85 = scmp.eq.s32.totalorder %s33, 0
      %p86 = por %p84, %p85
      %s88 = sadd.s32 %s87, 1
      %p91 = scmp.eq.s32.totalorder %s27, 1
      %p92 = scmp.ne.s32.totalorder %s87, %s89
      %p93 = scmp.eq.s32.totalorder %s27, 0
      %p94 = por %p92, %p93
      %p95 = scmp.ne.s32.totalorder %s87, %s89
      %p96 = scmp.eq.s32.totalorder %s32, 1
      %p97 = por %p95, %p96
      %p98 = scmp.ne.s32.totalorder %s89, %s90
      %p99 = scmp.eq.s32.totalorder %s32, 0
      %p100 = por %p98, %p99
      %p101 = scmp.ne.s32.totalorder %s89, %s90
      %p102 = scmp.eq.s32.totalorder %s33, 1
      %p103 = por %p101, %p102
      %p105 = scmp.ne.s32.totalorder %s90, %s104
      %p106 = scmp.eq.s32.totalorder %s33, 0
      %p107 = por %p105, %p106
      %s109 = sadd.s32 %s108, 1
      %p112 = scmp.eq.s32.totalorder %s27, 1
      %p113 = scmp.ne.s32.totalorder %s108, %s110
      %p114 = scmp.eq.s32.totalorder %s27, 0
      %p115 = por %p113, %p114
      %p116 = scmp.ne.s32.totalorder %s108, %s110
      %p117 = scmp.eq.s32.totalorder %s32, 1
      %p118 = por %p116, %p117
      %p119 = scmp.ne.s32.totalorder %s110, %s111
      %p120 = scmp.eq.s32.totalorder %s32, 0
      %p121 = por %p119, %p120
      %p122 = scmp.ne.s32.totalorder %s110, %s111
      %p123 = scmp.eq.s32.totalorder %s33, 1
      %p124 = por %p122, %p123
      %p126 = scmp.ne.s32.totalorder %s111, %s125
      %p127 = scmp.eq.s32.totalorder %s33, 0
      %p128 = por %p126, %p127
      %s130 = sadd.s32 %s129, 1
      %p133 = scmp.eq.s32.totalorder %s27, 1
      %p134 = scmp.ne.s32.totalorder %s129, %s131
      %p135 = scmp.eq.s32.totalorder %s27, 0
      %p136 = por %p134, %p135
      %p137 = scmp.ne.s32.totalorder %s129, %s131
      %p138 = scmp.eq.s32.totalorder %s32, 1
      %p139 = por %p137, %p138
      %p140 = scmp.ne.s32.totalorder %s131, %s132
      %p141 = scmp.eq.s32.totalorder %s32, 0
      %p142 = por %p140, %p141
      %p143 = scmp.ne.s32.totalorder %s131, %s132
      %p144 = scmp.eq.s32.totalorder %s33, 1
      %p145 = por %p143, %p144
      %p147 = scmp.ne.s32.totalorder %s132, %s146
      %p148 = scmp.eq.s32.totalorder %s33, 0
      %p149 = por %p147, %p148
      %s151 = sadd.s32 %s150, 1
      %p154 = scmp.eq.s32.totalorder %s27, 1
      %p155 = scmp.ne.s32.totalorder %s150, %s152
      %p156 = scmp.eq.s32.totalorder %s27, 0
      %p157 = por %p155, %p156
      %p158 = scmp.ne.s32.totalorder %s150, %s152
      %p159 = scmp.eq.s32.totalorder %s32, 1
      %p160 = por %p158, %p159
      %p161 = scmp.ne.s32.totalorder %s152, %s153
      %p162 = scmp.eq.s32.totalorder %s32, 0
      %p163 = por %p161, %p162
      %p164 = scmp.ne.s32.totalorder %s152, %s153
      %p165 = scmp.eq.s32.totalorder %s33, 1
      %p166 = por %p164, %p165
      %p168 = scmp.ne.s32.totalorder %s153, %s167
      %p169 = scmp.eq.s32.totalorder %s33, 0
      %p170 = por %p168, %p169
      %s172 = sadd.s32 %s171, 1
      %p175 = scmp.eq.s32.totalorder %s27, 1
      %p176 = scmp.ne.s32.totalorder %s171, %s173
      %p177 = scmp.eq.s32.totalorder %s27, 0
      %p178 = por %p176, %p177
      %p179 = scmp.ne.s32.totalorder %s171, %s173
      %p180 = scmp.eq.s32.totalorder %s32, 1
      %p181 = por %p179, %p180
      %p182 = scmp.ne.s32.totalorder %s173, %s174
      %p183 = scmp.eq.s32.totalorder %s32, 0
      %p184 = por %p182, %p183
      %p185 = scmp.ne.s32.totalorder %s173, %s174
      %p186 = scmp.eq.s32.totalorder %s33, 1
      %p187 = por %p185, %p186
      %p189 = scmp.ne.s32.totalorder %s174, %s188
      %p190 = scmp.eq.s32.totalorder %s33, 0
      %p191 = por %p189, %p190
      %s193 = sadd.s32 %s192, 1
      %p196 = scmp.eq.s32.totalorder %s27, 1
      %p197 = scmp.ne.s32.totalorder %s192, %s194
      %p198 = scmp.eq.s32.totalorder %s27, 0
      %p199 = por %p197, %p198
      %p200 = scmp.ne.s32.totalorder %s192, %s194
      %p201 = scmp.eq.s32.totalorder %s32, 1
      %p202 = por %p200, %p201
      %p203 = scmp.ne.s32.totalorder %s194, %s195
      %p204 = scmp.eq.s32.totalorder %s32, 0
      %p205 = por %p203, %p204
      %p206 = scmp.ne.s32.totalorder %s194, %s195
      %p207 = scmp.eq.s32.totalorder %s33, 1
      %p208 = por %p206, %p207
      %p210 = scmp.ne.s32.totalorder %s195, %s209
      %p211 = scmp.eq.s32.totalorder %s33, 0
      %p212 = por %p210, %p211
      %s214 = sadd.s32 %s213, 1
      %p217 = scmp.eq.s32.totalorder %s27, 1
      %p218 = scmp.ne.s32.totalorder %s213, %s215
      %p219 = scmp.eq.s32.totalorder %s27, 0
      %p220 = por %p218, %p219
      %p221 = scmp.ne.s32.totalorder %s213, %s215
      %p222 = scmp.eq.s32.totalorder %s32, 1
      %p223 = por %p221, %p222
      %p224 = scmp.ne.s32.totalorder %s215, %s216
      %p225 = scmp.eq.s32.totalorder %s32, 0
      %p226 = por %p224, %p225
      %p227 = scmp.ne.s32.totalorder %s215, %s216
      %p228 = scmp.eq.s32.totalorder %s33, 1
      %p229 = por %p227, %p228
      %p231 = scmp.ne.s32.totalorder %s216, %s230
      %p232 = scmp.eq.s32.totalorder %s33, 0
      %p233 = por %p231, %p232
      %s235 = sadd.s32 %s234, 1
      %p238 = scmp.eq.s32.totalorder %s27, 1
      %p239 = scmp.ne.s32.totalorder %s234, %s236
      %p240 = scmp.eq.s32.totalorder %s27, 0
      %p241 = por %p239, %p240
      %p242 = scmp.ne.s32.totalorder %s234, %s236
      %p243 = scmp.eq.s32.totalorder %s32, 1
      %p244 = por %p242, %p243
      %p245 = scmp.ne.s32.totalorder %s236, %s237
      %p246 = scmp.eq.s32.totalorder %s32, 0
      %p247 = por %p245, %p246
      %p248 = scmp.ne.s32.totalorder %s236, %s237
      %p249 = scmp.eq.s32.totalorder %s33, 1
      %p250 = por %p248, %p249
      %p252 = scmp.ne.s32.totalorder %s237, %s251
      %p253 = scmp.eq.s32.totalorder %s33, 0
      %p254 = por %p252, %p253
      %s255 = ssub.s32 %s27, %s34
      %p256 = scmp.eq.s32.totalorder %s255, 0
      %s258 = sadd.s32 %s257, 1
      %s259 = scalar_select %p256, %s257, %s258
      %p262 = pneg %p256
      %p263 = scmp.eq.s32.totalorder %s27, 1
      %p264 = por %p262, %p263
      %p265 = scmp.ne.s32.totalorder %s257, %s260
      %p266 = scmp.eq.s32.totalorder %s27, 0
      %p267 = por %p265, %p266
      %p268 = scmp.ne.s32.totalorder %s257, %s260
      %p269 = scmp.eq.s32.totalorder %s32, 1
      %p270 = por %p268, %p269
      %p271 = scmp.ne.s32.totalorder %s260, %s261
      %p272 = scmp.eq.s32.totalorder %s32, 0
      %p273 = por %p271, %p272
      %p274 = scmp.ne.s32.totalorder %s260, %s261
      %p275 = scmp.eq.s32.totalorder %s33, 1
      %p276 = por %p274, %p275
      %p278 = scmp.ne.s32.totalorder %s261, %s277
      %p279 = scmp.eq.s32.totalorder %s33, 0
      %p280 = por %p278, %p279
      %s281 = ssub.s32 %s27, %s34
      %p282 = scmp.eq.s32.totalorder %s281, 0
      %s284 = sadd.s32 %s283, 1
      %s285 = scalar_select %p282, %s283, %s284
      %p288 = pneg %p282
      %p289 = scmp.eq.s32.totalorder %s27, 1
      %p290 = por %p288, %p289
      %p291 = scmp.ne.s32.totalorder %s283, %s286
      %p292 = scmp.eq.s32.totalorder %s27, 0
      %p293 = por %p291, %p292
      %p294 = scmp.ne.s32.totalorder %s283, %s286
      %p295 = scmp.eq.s32.totalorder %s32, 1
      %p296 = por %p294, %p295
      %p297 = scmp.ne.s32.totalorder %s286, %s287
      %p298 = scmp.eq.s32.totalorder %s32, 0
      %p299 = por %p297, %p298
      %p300 = scmp.ne.s32.totalorder %s286, %s287
      %p301 = scmp.eq.s32.totalorder %s33, 1
      %p302 = por %p300, %p301
      %p304 = scmp.ne.s32.totalorder %s287, %s303
      %p305 = scmp.eq.s32.totalorder %s33, 0
      %p306 = por %p304, %p305
      %p307 = scmp.le.s32.totalorder 1, %s27
      %p308 = scmp.lt.s32.totalorder %s27, 3
      %p309 = pnand %p307, %p308
      %p310 = pneg %p309
      // Predicated region
      $region9: #{tpu_custom_call.1} parent=5 // pred_check
        _
      $region10: #{tpu_custom_call.1} parent=5 // pred_check_branch
        %312 = sbr.rel (%p309) target = $region12
      $region11: #{tpu_custom_call.1} parent=5 // pred_region
        %s313 = ssub.s32 %s27, 1
        // Predicated region
        $region13: #{tpu_custom_call.1} parent=11 // pred_check
          %p314 = pneg %p100
        $region14: #{tpu_custom_call.1} parent=11 // pred_check_branch
          %316 = sbr.rel (%p314) target = $region16
        $region15: #{tpu_custom_call.1} parent=11 // pred_region
          _
        $region16: #{tpu_custom_call.1} parent=11 // pred_fallthru
          _
        // Predicated region
        $region17: #{tpu_custom_call.1} parent=11 // pred_check
          %p317 = pneg %p121
        $region18: #{tpu_custom_call.1} parent=11 // pred_check_branch
          %319 = sbr.rel (%p317) target = $region20
        $region19: #{tpu_custom_call.1} parent=11 // pred_region
          %s321 = ssub.s32 128, 128
          %322 = vsyncadd [#allocation3], %s321
          %s324 = sshll.u32 [#allocation2], 4
          %s325 = int_to_ptr.vmem [resolvable:$true] %s324
          %327 = dma.hbm_to_vmem [thread:$0]  %s3, 128, %s325, [#allocation3]
        $region20: #{tpu_custom_call.1} parent=11 // pred_fallthru
          _
        // Predicated region
        $region21: #{tpu_custom_call.1} parent=11 // pred_check
          %p328 = pneg %p142
        $region22: #{tpu_custom_call.1} parent=11 // pred_check_branch
          %330 = sbr.rel (%p328) target = $region24
        $region23: #{tpu_custom_call.1} parent=11 // pred_region
          %s332 = ssub.s32 128, 128
          %333 = vsyncadd [#allocation6], %s332
          %s335 = sshll.u32 [#allocation5], 4
          %s336 = int_to_ptr.vmem [resolvable:$true] %s335
          %338 = dma.hbm_to_vmem [thread:$0]  %s4, 128, %s336, [#allocation6]
        $region24: #{tpu_custom_call.1} parent=11 // pred_fallthru
          _
        // Predicated region
        $region25: #{tpu_custom_call.1} parent=11 // pred_check
          %p339 = pneg %p163
        $region26: #{tpu_custom_call.1} parent=11 // pred_check_branch
          %341 = sbr.rel (%p339) target = $region28
        $region27: #{tpu_custom_call.1} parent=11 // pred_region
          _
        $region28: #{tpu_custom_call.1} parent=11 // pred_fallthru
          _
        // Predicated region
        $region29: #{tpu_custom_call.1} parent=11 // pred_check
          %p342 = pneg %p184
        $region30: #{tpu_custom_call.1} parent=11 // pred_check_branch
          %344 = sbr.rel (%p342) target = $region32
        $region31: #{tpu_custom_call.1} parent=11 // pred_region
          %s346 = ssub.s32 256, 256
          %347 = vsyncadd [#allocation6], %s346
          %s348 = sshll.u32 [#allocation7], 4
          %s349 = int_to_ptr.vmem [resolvable:$true] %s348
          %354 = dma.hbm_to_vmem [thread:$0]  %s6, 256, %s349, [#allocation6], 64, 64, 4
        $region32: #{tpu_custom_call.1} parent=11 // pred_fallthru
          _
        // Predicated region
        $region33: #{tpu_custom_call.1} parent=11 // pred_check
          %p355 = pneg %p205
        $region34: #{tpu_custom_call.1} parent=11 // pred_check_branch
          %357 = sbr.rel (%p355) target = $region36
        $region35: #{tpu_custom_call.1} parent=11 // pred_region
          %s359 = ssub.s32 256, 256
          %360 = vsyncadd [#allocation9], %s359
          %s361 = sshll.u32 [#allocation8], 4
          %s362 = int_to_ptr.vmem [resolvable:$true] %s361
          %367 = dma.hbm_to_vmem [thread:$0]  %s7, 256, %s362, [#allocation9], 64, 64, 4
        $region36: #{tpu_custom_call.1} parent=11 // pred_fallthru
          _
        // Predicated region
        $region37: #{tpu_custom_call.1} parent=11 // pred_check
          %p368 = pneg %p226
        $region38: #{tpu_custom_call.1} parent=11 // pred_check_branch
          %370 = sbr.rel (%p368) target = $region40
        $region39: #{tpu_custom_call.1} parent=11 // pred_region
          %s372 = ssub.s32 256, 256
          %373 = vsyncadd [#allocation9], %s372
          %s374 = sshll.u32 [#allocation10], 4
          %s375 = int_to_ptr.vmem [resolvable:$true] %s374
          %380 = dma.hbm_to_vmem [thread:$0]  %s8, 256, %s375, [#allocation9], 64, 64, 4
        $region40: #{tpu_custom_call.1} parent=11 // pred_fallthru
          _
        // Predicated region
        $region41: #{tpu_custom_call.1} parent=11 // pred_check
          %p381 = pneg %p247
        $region42: #{tpu_custom_call.1} parent=11 // pred_check_branch
          %383 = sbr.rel (%p381) target = $region44
        $region43: #{tpu_custom_call.1} parent=11 // pred_region
          _
        $region44: #{tpu_custom_call.1} parent=11 // pred_fallthru
          _
      $region12: #{tpu_custom_call.1} parent=5 // pred_fallthru
        _
      %p384 = scmp.lt.s32.totalorder %s27, 2
      // Predicated region
      $region45: #{tpu_custom_call.1} parent=5 // pred_check
        %p385 = pneg %p384
      $region46: #{tpu_custom_call.1} parent=5 // pred_check_branch
        %387 = sbr.rel (%p385) target = $region48
      $region47: #{tpu_custom_call.1} parent=5 // pred_region
        // Predicated region
        $region49: #{tpu_custom_call.1} parent=47 // pred_check
          %p388 = pneg %p47
        $region50: #{tpu_custom_call.1} parent=47 // pred_check_branch
          %390 = sbr.rel (%p388) target = $region52
        $region51: #{tpu_custom_call.1} parent=47 // pred_region
          %p391 = scmp.lt.s32.totalorder %s27, 1
          %s392 = scalar_select %p391, %s27, 1
          %s393 = smul.addr %s392, 8
          %s394 = scalar_lea.vmem %s0, %s393
        $region52: #{tpu_custom_call.1} parent=47 // pred_fallthru
          _
        // Predicated region
        $region53: #{tpu_custom_call.1} parent=47 // pred_check
          %p395 = pneg %p73
        $region54: #{tpu_custom_call.1} parent=47 // pred_check_branch
          %397 = sbr.rel (%p395) target = $region56
        $region55: #{tpu_custom_call.1} parent=47 // pred_region
          %p398 = scmp.lt.s32.totalorder %s27, 1
          %s399 = scalar_select %p398, %s27, 1
          %s400 = smul.addr %s399, 8
          %s401 = scalar_lea.vmem %s1, %s400
        $region56: #{tpu_custom_call.1} parent=47 // pred_fallthru
          _
      $region48: #{tpu_custom_call.1} parent=5 // pred_fallthru
        _
      %p402 = scmp.le.s32.totalorder 1, %s27
      %p403 = scmp.lt.s32.totalorder %s27, 3
      %p404 = pnand %p402, %p403
      %p405 = pneg %p404
      // Predicated region
      $region57: #{tpu_custom_call.1} parent=5 // pred_check
        _
      $region58: #{tpu_custom_call.1} parent=5 // pred_check_branch
        %407 = sbr.rel (%p404) target = $region60
      $region59: #{tpu_custom_call.1} parent=5 // pred_region
        %s408 = ssub.s32 %s27, 1
        // Predicated region
        $region61: #{tpu_custom_call.1} parent=59 // pred_check
          %p409 = pneg %p121
        $region62: #{tpu_custom_call.1} parent=59 // pred_check_branch
          %411 = sbr.rel (%p409) target = $region64
        $region63: #{tpu_custom_call.1} parent=59 // pred_region
          %412 = dma.done [#allocation3], 128
        $region64: #{tpu_custom_call.1} parent=59 // pred_fallthru
          _
        // Predicated region
        $region65: #{tpu_custom_call.1} parent=59 // pred_check
          %p413 = pneg %p142
        $region66: #{tpu_custom_call.1} parent=59 // pred_check_branch
          %415 = sbr.rel (%p413) target = $region68
        $region67: #{tpu_custom_call.1} parent=59 // pred_region
          %416 = dma.done [#allocation6], 128
        $region68: #{tpu_custom_call.1} parent=59 // pred_fallthru
          _
        // Predicated region
        $region69: #{tpu_custom_call.1} parent=59 // pred_check
          %p417 = pneg %p184
        $region70: #{tpu_custom_call.1} parent=59 // pred_check_branch
          %419 = sbr.rel (%p417) target = $region72
        $region71: #{tpu_custom_call.1} parent=59 // pred_region
          %420 = dma.done [#allocation6], 256
        $region72: #{tpu_custom_call.1} parent=59 // pred_fallthru
          _
        // Predicated region
        $region73: #{tpu_custom_call.1} parent=59 // pred_check
          %p421 = pneg %p205
        $region74: #{tpu_custom_call.1} parent=59 // pred_check_branch
          %423 = sbr.rel (%p421) target = $region76
        $region75: #{tpu_custom_call.1} parent=59 // pred_region
          %424 = dma.done [#allocation9], 256
        $region76: #{tpu_custom_call.1} parent=59 // pred_fallthru
          _
        // Predicated region
        $region77: #{tpu_custom_call.1} parent=59 // pred_check
          %p425 = pneg %p226
        $region78: #{tpu_custom_call.1} parent=59 // pred_check_branch
          %427 = sbr.rel (%p425) target = $region80
        $region79: #{tpu_custom_call.1} parent=59 // pred_region
          %428 = dma.done [#allocation9], 256
        $region80: #{tpu_custom_call.1} parent=59 // pred_fallthru
          _
        %p429 = scmp.lt.s32.totalorder %s32, 1
        %s430 = scalar_select %p429, %s32, 1
        %s431 = smul.addr %s430, 8
        %s432 = scalar_lea.vmem %s0, %s431
        %p433 = pneg %p53
        %p434 = pneg %p50
        %p435 = scmp.lt.s32.totalorder %s32, 1
        %s436 = scalar_select %p435, %s32, 1
        %s437 = smul.addr %s436, 8
        %s438 = scalar_lea.vmem %s1, %s437
        %p439 = pneg %p79
        %p440 = pneg %p76
        %p441 = pneg %p100
        %p442 = pneg %p97
        %p443 = pneg %p121
        %p444 = pneg %p118
        %p445 = pneg %p142
        %p446 = pneg %p139
        %p447 = pneg %p163
        %p448 = pneg %p160
        %p449 = pneg %p184
        %p450 = pneg %p181
        %p451 = pneg %p205
        %p452 = pneg %p202
        %p453 = pneg %p226
        %p454 = pneg %p223
        %p455 = pneg %p247
        %p456 = pneg %p244
        %p457 = pneg %p273
        %p458 = pneg %p270
        %s459 = sand.u32 %s260, 1
        %s460 = scalar_lea.sflag [#allocation4], %s459
        %s461 = sand.u32 %s260, 1
        %s462 = smul.addr %s461, 8
        %s463 = scalar_lea.vmem [#allocation11], %s462
        %p464 = pneg %p299
        %p465 = pneg %p296
        %s466 = sand.u32 %s286, 1
        %s467 = scalar_lea.sflag [#allocation13], %s466
        %s468 = sand.u32 %s286, 1
        %s469 = smul.addr %s468, 8
        %s470 = scalar_lea.vmem [#allocation12], %s469
        %p471 = scmp.lt.s32.totalorder %s32, 1
        %s472 = scalar_select %p471, %s32, 1
        %s473 = smul.addr %s472, 8
        %s474 = scalar_lea.vmem %s0, %s473
        %p475 = scmp.lt.s32.totalorder %s32, 1
        %s476 = scalar_select %p475, %s32, 1
        %s477 = smul.addr %s476, 8
        %s478 = scalar_lea.vmem %s1, %s477
        %v480 = vld [vmem:[%s474] sm:$0xff]
        %v481 = vld [vmem:[%s478] sm:$0xff]
        %v482 = vmul.f32 %v480, %v480
        %v483 = vmul.f32 %v481, %v481
        %v484 = vadd.f32 %v482, %v483
        %vm485 = vcmask 261120
        %v486 = vsel %vm485, %v484, 0.0
        %487 = vadd.xlane.f32.xlu0 %v486
        %v488 = vpop.xlane.xlu0 %487
        %v489 = vadd.f32 %v488, 1e-30
        %v490 = vrsqrt.pop %v489
        %v491 = vmul.f32 %v480, %v490
        %v492 = vmul.f32 %v481, %v490
        %v493 = vpack.c.bf16 %v492, %v491
        %v494 = vld [vmem:[%s2] sm:$0xf]
        %v495 = vld [vmem:[%s2 + $0x4] sm:$0xf]
        %v496 = vld [vmem:[%s2 + $0x8] sm:$0xf]
        %v497 = vld [vmem:[%s2 + $0xc] sm:$0xf]
        %v502 = vunpack.c.l.b16 %v494
        %v503 = vunpack.c.l.b16 %v495
        %v504 = vunpack.c.l.b16 %v496
        %v505 = vunpack.c.l.b16 %v497
        %v506 = vpack.c.b16 %v503, %v502
        %v507 = vpack.c.b16 %v505, %v504
        %v511 = vsel %vm485, %v493, 0
        %513 = vmatprep.subr.bf16.mxu0 0
        %514 = vmatpush1.bf16.msra.mxu0 %v506
        %515 = vmatprep.subr.bf16.mxu0 0
        %516 = vmatpush1.bf16.msra.mxu0 %v507
        %517 = vmatprep.subr.bf16.mxu0 0
        %518 = vmatpush1.bf16.msra.mxu0 0
        %519 = vmatprep.subr.bf16.mxu0 0
        %520 = vmatpush1.bf16.msra.mxu0 0
        %521 = vmatprep.subr.bf16.mxu0 0
        %522 = vmatpush1.bf16.msra.mxu0 0
        %523 = vmatprep.subr.bf16.mxu0 0
        %524 = vmatpush1.bf16.msra.mxu0 0
        %525 = vmatprep.subr.bf16.mxu0 0
        %526 = vmatpush1.bf16.msra.mxu0 0
        %527 = vmatprep.subr.bf16.mxu0 0
        %528 = vmatpush1.bf16.msra.mxu0 0
        %529 = vmatprep.subr.bf16.mxu0 0
        %530 = vmatpush1.bf16.msra.mxu0 0
        %531 = vmatprep.subr.bf16.mxu0 0
        %532 = vmatpush1.bf16.msra.mxu0 0
        %533 = vmatprep.subr.bf16.mxu0 0
        %534 = vmatpush1.bf16.msra.mxu0 0
        %535 = vmatprep.subr.bf16.mxu0 0
        %536 = vmatpush1.bf16.msra.mxu0 0
        %537 = vmatprep.subr.bf16.mxu0 0
        %538 = vmatpush1.bf16.msra.mxu0 0
        %539 = vmatprep.subr.bf16.mxu0 0
        %540 = vmatpush1.bf16.msra.mxu0 0
        %541 = vmatprep.subr.bf16.mxu0 0
        %542 = vmatpush1.bf16.msra.mxu0 0
        %543 = vmatprep.subr.bf16.mxu0 0
        %544 = vmatpush1.bf16.msra.mxu0 0
        %545 = vmatprep.mubr.bf16.mxu0 0
        %546 = vmatmul.mubr.bf16.gmra.mrb[0].mxu0 %v511
        %v547 = vpop.f32.mrb[0].mxu0
        %v548 = vadd.f32 0.0, %v547
        %v549 = vpop.f32.mrb[0].mxu0
        %v550 = vpop.f32.mrb[0].mxu0
        %v551 = vadd.f32 0.0, %v550
        %v552 = vpop.f32.mrb[0].mxu0
        %553 = vdwg.mxu0
        %s554 = scalar_lea.vmem %s2, 16
        %v555 = vld [vmem:[%s554] sm:$0xf]
        %v556 = vld [vmem:[%s554 + $0x4] sm:$0xf]
        %v557 = vld [vmem:[%s554 + $0x8] sm:$0xf]
        %v558 = vld [vmem:[%s554 + $0xc] sm:$0xf]
        %v563 = vunpack.c.l.b16 %v555
        %v564 = vunpack.c.l.b16 %v556
        %v565 = vunpack.c.l.b16 %v557
        %v566 = vunpack.c.l.b16 %v558
        %v567 = vpack.c.b16 %v564, %v563
        %v568 = vpack.c.b16 %v566, %v565
        %571 = vmatprep.subr.bf16.mxu0 0
        %572 = vmatpush1.bf16.msra.mxu0 %v567
        %573 = vmatprep.subr.bf16.mxu0 0
        %574 = vmatpush1.bf16.msra.mxu0 %v568
        %575 = vmatprep.subr.bf16.mxu0 0
        %576 = vmatpush1.bf16.msra.mxu0 0
        %577 = vmatprep.subr.bf16.mxu0 0
        %578 = vmatpush1.bf16.msra.mxu0 0
        %579 = vmatprep.subr.bf16.mxu0 0
        %580 = vmatpush1.bf16.msra.mxu0 0
        %581 = vmatprep.subr.bf16.mxu0 0
        %582 = vmatpush1.bf16.msra.mxu0 0
        %583 = vmatprep.subr.bf16.mxu0 0
        %584 = vmatpush1.bf16.msra.mxu0 0
        %585 = vmatprep.subr.bf16.mxu0 0
        %586 = vmatpush1.bf16.msra.mxu0 0
        %587 = vmatprep.subr.bf16.mxu0 0
        %588 = vmatpush1.bf16.msra.mxu0 0
        %589 = vmatprep.subr.bf16.mxu0 0
        %590 = vmatpush1.bf16.msra.mxu0 0
        %591 = vmatprep.subr.bf16.mxu0 0
        %592 = vmatpush1.bf16.msra.mxu0 0
        %593 = vmatprep.subr.bf16.mxu0 0
        %594 = vmatpush1.bf16.msra.mxu0 0
        %595 = vmatprep.subr.bf16.mxu0 0
        %596 = vmatpush1.bf16.msra.mxu0 0
        %597 = vmatprep.subr.bf16.mxu0 0
        %598 = vmatpush1.bf16.msra.mxu0 0
        %599 = vmatprep.subr.bf16.mxu0 0
        %600 = vmatpush1.bf16.msra.mxu0 0
        %601 = vmatprep.subr.bf16.mxu0 0
        %602 = vmatpush1.bf16.msra.mxu0 0
        %603 = vmatprep.mubr.bf16.mxu0 0
        %604 = vmatmul.mubr.bf16.gmra.mrb[0].mxu0 %v511
        %v605 = vpop.f32.mrb[0].mxu0
        %v606 = vadd.f32 0.0, %v605
        %v607 = vpop.f32.mrb[0].mxu0
        %v608 = vpop.f32.mrb[0].mxu0
        %v609 = vadd.f32 0.0, %v608
        %v610 = vpop.f32.mrb[0].mxu0
        %611 = vdwg.mxu0
        %s612 = scalar_lea.vmem %s2, 32
        %v613 = vld [vmem:[%s612] sm:$0xf]
        %v614 = vld [vmem:[%s612 + $0x4] sm:$0xf]
        %v615 = vld [vmem:[%s612 + $0x8] sm:$0xf]
        %v616 = vld [vmem:[%s612 + $0xc] sm:$0xf]
        %v621 = vunpack.c.l.b16 %v613
        %v622 = vunpack.c.l.b16 %v614
        %v623 = vunpack.c.l.b16 %v615
        %v624 = vunpack.c.l.b16 %v616
        %v625 = vpack.c.b16 %v622, %v621
        %v626 = vpack.c.b16 %v624, %v623
        %629 = vmatprep.subr.bf16.mxu0 0
        %630 = vmatpush1.bf16.msra.mxu0 %v625
        %631 = vmatprep.subr.bf16.mxu0 0
        %632 = vmatpush1.bf16.msra.mxu0 %v626
        %633 = vmatprep.subr.bf16.mxu0 0
        %634 = vmatpush1.bf16.msra.mxu0 0
        %635 = vmatprep.subr.bf16.mxu0 0
        %636 = vmatpush1.bf16.msra.mxu0 0
        %637 = vmatprep.subr.bf16.mxu0 0
        %638 = vmatpush1.bf16.msra.mxu0 0
        %639 = vmatprep.subr.bf16.mxu0 0
        %640 = vmatpush1.bf16.msra.mxu0 0
        %641 = vmatprep.subr.bf16.mxu0 0
        %642 = vmatpush1.bf16.msra.mxu0 0
        %643 = vmatprep.subr.bf16.mxu0 0
        %644 = vmatpush1.bf16.msra.mxu0 0
        %645 = vmatprep.subr.bf16.mxu0 0
        %646 = vmatpush1.bf16.msra.mxu0 0
        %647 = vmatprep.subr.bf16.mxu0 0
        %648 = vmatpush1.bf16.msra.mxu0 0
        %649 = vmatprep.subr.bf16.mxu0 0
        %650 = vmatpush1.bf16.msra.mxu0 0
        %651 = vmatprep.subr.bf16.mxu0 0
        %652 = vmatpush1.bf16.msra.mxu0 0
        %653 = vmatprep.subr.bf16.mxu0 0
        %654 = vmatpush1.bf16.msra.mxu0 0
        %655 = vmatprep.subr.bf16.mxu0 0
        %656 = vmatpush1.bf16.msra.mxu0 0
        %657 = vmatprep.subr.bf16.mxu0 0
        %658 = vmatpush1.bf16.msra.mxu0 0
        %659 = vmatprep.subr.bf16.mxu0 0
        %660 = vmatpush1.bf16.msra.mxu0 0
        %661 = vmatprep.mubr.bf16.mxu0 0
        %662 = vmatmul.mubr.bf16.gmra.mrb[0].mxu0 %v511
        %v663 = vpop.f32.mrb[0].mxu0
        %v664 = vadd.f32 0.0, %v663
        %v665 = vpop.f32.mrb[0].mxu0
        %v666 = vpop.f32.mrb[0].mxu0
        %v667 = vadd.f32 0.0, %v666
        %v668 = vpop.f32.mrb[0].mxu0
        %669 = vdwg.mxu0
        %v670 = vld [vmem:[#allocation2] sm:$0xff]
        %v671 = vld [vmem:[#allocation5] sm:$0xff]
        %v672 = vmul.f32 %v548, %v670
        %v673 = vmul.f32 %v551, %v671
        %v674 = vsub.f32 %v672, %v673
        %v675 = vmul.f32 %v548, %v671
        %v676 = vmul.f32 %v551, %v670
        %v677 = vadd.f32 %v675, %v676
        %v678 = vmul.f32 %v606, %v670
        %v679 = vmul.f32 %v609, %v671
        %v680 = vadd.f32 %v678, %v679
        %v681 = vmul.f32 %v609, %v670
        %v682 = vmul.f32 %v606, %v671
        %v683 = vsub.f32 %v681, %v682
        %685 = vrot.lane.b32.xlu0 %v674, 112
        %v686 = vpop.permute.xlu0 %685
        %689 = vrot.lane.b32.xlu0 %v677, 112
        %v690 = vpop.permute.xlu0 %689
        %692 = vrot.lane.b32.xlu0 %v680, 112
        %v693 = vpop.permute.xlu0 %692
        %696 = vrot.lane.b32.xlu0 %v683, 112
        %v697 = vpop.permute.xlu0 %696
        %700 = vrot.lane.b32.xlu0 %v664, 112
        %v701 = vpop.permute.xlu0 %700
        %704 = vrot.lane.b32.xlu0 %v667, 112
        %v705 = vpop.permute.xlu0 %704
        %707 = vrot.lane.b32.xlu0 %v677, 16
        %v708 = vpop.permute.xlu0 %707
        %709 = vrot.lane.b32.xlu0 %v690, 16
        %v710 = vpop.permute.xlu0 %709
        %vm713 = vcmask 130048
        %v714 = vsel %vm713, %v674, %v708
        %v715 = vsel %vm713, %v686, %v710
        %v716 = vpack.c.bf16 %v714, %v714
        %v717 = vpack.c.bf16 %v715, %v715
        %v718 = vsub.f32 0.0, %v683
        %v719 = vsub.f32 0.0, %v697
        %722 = vrot.lane.b32.xlu0 %v718, 16
        %v723 = vpop.permute.xlu0 %722
        %724 = vrot.lane.b32.xlu0 %v719, 16
        %v725 = vpop.permute.xlu0 %724
        %v728 = vsel %vm713, %v680, %v723
        %v729 = vsel %vm713, %v693, %v725
        %730 = vrot.lane.b32.xlu0 %v680, 16
        %v731 = vpop.permute.xlu0 %730
        %732 = vrot.lane.b32.xlu0 %v693, 16
        %v733 = vpop.permute.xlu0 %732
        %v736 = vsel %vm713, %v683, %v731
        %v737 = vsel %vm713, %v697, %v733
        %v738 = vpack.c.bf16 %v736, %v728
        %v739 = vpack.c.bf16 %v737, %v729
        %v741 = vsel %vm485, %v716, 0
        %v744 = vsel %vm485, %v738, 0
        %746 = vmatprep.subr.bf16.mxu0 0
        %747 = vmatpush1.bf16.xpose.msra.mxu0 %v744
        %748 = vmatprep.subr.bf16.mxu0 0
        %749 = vmatpush1.bf16.xpose.msra.mxu0 0
        %750 = vmatprep.subr.bf16.mxu0 0
        %751 = vmatpush1.bf16.xpose.msra.mxu0 0
        %752 = vmatprep.subr.bf16.mxu0 0
        %753 = vmatpush1.bf16.xpose.msra.mxu0 0
        %754 = vmatprep.subr.bf16.mxu0 0
        %755 = vmatpush1.bf16.xpose.msra.mxu0 0
        %756 = vmatprep.subr.bf16.mxu0 0
        %757 = vmatpush1.bf16.xpose.msra.mxu0 0
        %758 = vmatprep.subr.bf16.mxu0 0
        %759 = vmatpush1.bf16.xpose.msra.mxu0 0
        %760 = vmatprep.subr.bf16.mxu0 0
        %761 = vmatpush1.bf16.xpose.msra.mxu0 0
        %762 = vmatprep.subr.bf16.mxu0 0
        %763 = vmatpush1.bf16.xpose.msra.mxu0 0
        %764 = vmatprep.subr.bf16.mxu0 0
        %765 = vmatpush1.bf16.xpose.msra.mxu0 0
        %766 = vmatprep.subr.bf16.mxu0 0
        %767 = vmatpush1.bf16.xpose.msra.mxu0 0
        %768 = vmatprep.subr.bf16.mxu0 0
        %769 = vmatpush1.bf16.xpose.msra.mxu0 0
        %770 = vmatprep.subr.bf16.mxu0 0
        %771 = vmatpush1.bf16.xpose.msra.mxu0 0
        %772 = vmatprep.subr.bf16.mxu0 0
        %773 = vmatpush1.bf16.xpose.msra.mxu0 0
        %774 = vmatprep.subr.bf16.mxu0 0
        %775 = vmatpush1.bf16.xpose.msra.mxu0 0
        %776 = vmatprep.subr.bf16.mxu0 0
        %777 = vmatpush1.bf16.xpose.msra.mxu0 0
        %778 = vmatprep.mubr.bf16.mxu0 0
        %779 = vmatmul.mubr.bf16.gmra.mrb[0].mxu0 %v741
        %v780 = vpop.f32.mrb[0].mxu0
        %v781 = vadd.f32 0.0, %v780
        %v782 = vpop.f32.mrb[0].mxu0
        %v783 = vpop.f32.mrb[0].mxu0
        %v784 = vpop.f32.mrb[0].mxu0
        %785 = vdwg.mxu0
        %v787 = vsel %vm485, %v717, 0
        %v790 = vsel %vm485, %v739, 0
        %792 = vmatprep.subr.bf16.mxu0 0
        %793 = vmatpush1.bf16.xpose.msra.mxu0 %v790
        %794 = vmatprep.subr.bf16.mxu0 0
        %795 = vmatpush1.bf16.xpose.msra.mxu0 0
        %796 = vmatprep.subr.bf16.mxu0 0
        %797 = vmatpush1.bf16.xpose.msra.mxu0 0
        %798 = vmatprep.subr.bf16.mxu0 0
        %799 = vmatpush1.bf16.xpose.msra.mxu0 0
        %800 = vmatprep.subr.bf16.mxu0 0
        %801 = vmatpush1.bf16.xpose.msra.mxu0 0
        %802 = vmatprep.subr.bf16.mxu0 0
        %803 = vmatpush1.bf16.xpose.msra.mxu0 0
        %804 = vmatprep.subr.bf16.mxu0 0
        %805 = vmatpush1.bf16.xpose.msra.mxu0 0
        %806 = vmatprep.subr.bf16.mxu0 0
        %807 = vmatpush1.bf16.xpose.msra.mxu0 0
        %808 = vmatprep.subr.bf16.mxu0 0
        %809 = vmatpush1.bf16.xpose.msra.mxu0 0
        %810 = vmatprep.subr.bf16.mxu0 0
        %811 = vmatpush1.bf16.xpose.msra.mxu0 0
        %812 = vmatprep.subr.bf16.mxu0 0
        %813 = vmatpush1.bf16.xpose.msra.mxu0 0
        %814 = vmatprep.subr.bf16.mxu0 0
        %815 = vmatpush1.bf16.xpose.msra.mxu0 0
        %816 = vmatprep.subr.bf16.mxu0 0
        %817 = vmatpush1.bf16.xpose.msra.mxu0 0
        %818 = vmatprep.subr.bf16.mxu0 0
        %819 = vmatpush1.bf16.xpose.msra.mxu0 0
        %820 = vmatprep.subr.bf16.mxu0 0
        %821 = vmatpush1.bf16.xpose.msra.mxu0 0
        %822 = vmatprep.subr.bf16.mxu0 0
        %823 = vmatpush1.bf16.xpose.msra.mxu0 0
        %824 = vmatprep.mubr.bf16.mxu0 0
        %825 = vmatmul.mubr.bf16.gmra.mrb[0].mxu0 %v787
        %v826 = vpop.f32.mrb[0].mxu0
        %v827 = vadd.f32 0.0, %v826
        %v828 = vpop.f32.mrb[0].mxu0
        %v829 = vpop.f32.mrb[0].mxu0
        %v830 = vpop.f32.mrb[0].mxu0
        %831 = vdwg.mxu0
        %v832 = vld [vmem:[%s5] sm:$0xff]
        %v833 = vld [vmem:[%s5 + $0x8] sm:$0xff]
        %v834 = vmul.f32 %v781, %v832
        %v835 = vmul.f32 %v827, %v833
        %836 = vrot.lane.b32.xlu0 %v667, 16
        %v837 = vpop.permute.xlu0 %836
        %838 = vrot.lane.b32.xlu0 %v705, 16
        %v839 = vpop.permute.xlu0 %838
        %v842 = vsel %vm713, %v664, %v837
        %v843 = vsel %vm713, %v701, %v839
        %v844 = vsub.f32 0.0, %v667
        %v845 = vsub.f32 0.0, %v705
        %846 = vrot.lane.b32.xlu0 %v664, 16
        %v847 = vpop.permute.xlu0 %846
        %848 = vrot.lane.b32.xlu0 %v701, 16
        %v849 = vpop.permute.xlu0 %848
        %v852 = vsel %vm713, %v844, %v847
        %v853 = vsel %vm713, %v845, %v849
        %v854 = vpack.c.bf16 %v852, %v842
        %v855 = vpack.c.bf16 %v853, %v843
        %v856 = vpack.c.bf16 %v834, %v834
        %v857 = vpack.c.bf16 %v835, %v835
        %v859 = vsel %vm713, %v856, 0
        %861 = vmatprep.subr.bf16.mxu0 0
        %862 = vmatpush1.bf16.msra.mxu0 %v854
        %863 = vmatprep.subr.bf16.mxu0 0
        %864 = vmatpush1.bf16.msra.mxu0 0
        %865 = vmatprep.subr.bf16.mxu0 0
        %866 = vmatpush1.bf16.msra.mxu0 0
        %867 = vmatprep.subr.bf16.mxu0 0
        %868 = vmatpush1.bf16.msra.mxu0 0
        %869 = vmatprep.subr.bf16.mxu0 0
        %870 = vmatpush1.bf16.msra.mxu0 0
        %871 = vmatprep.subr.bf16.mxu0 0
        %872 = vmatpush1.bf16.msra.mxu0 0
        %873 = vmatprep.subr.bf16.mxu0 0
        %874 = vmatpush1.bf16.msra.mxu0 0
        %875 = vmatprep.subr.bf16.mxu0 0
        %876 = vmatpush1.bf16.msra.mxu0 0
        %877 = vmatprep.subr.bf16.mxu0 0
        %878 = vmatpush1.bf16.msra.mxu0 0
        %879 = vmatprep.subr.bf16.mxu0 0
        %880 = vmatpush1.bf16.msra.mxu0 0
        %881 = vmatprep.subr.bf16.mxu0 0
        %882 = vmatpush1.bf16.msra.mxu0 0
        %883 = vmatprep.subr.bf16.mxu0 0
        %884 = vmatpush1.bf16.msra.mxu0 0
        %885 = vmatprep.subr.bf16.mxu0 0
        %886 = vmatpush1.bf16.msra.mxu0 0
        %887 = vmatprep.subr.bf16.mxu0 0
        %888 = vmatpush1.bf16.msra.mxu0 0
        %889 = vmatprep.subr.bf16.mxu0 0
        %890 = vmatpush1.bf16.msra.mxu0 0
        %891 = vmatprep.subr.bf16.mxu0 0
        %892 = vmatpush1.bf16.msra.mxu0 0
        %893 = vmatprep.mubr.bf16.mxu0 0
        %894 = vmatmul.mubr.bf16.gmra.mrb[0].mxu0 %v859
        %v895 = vpop.f32.mrb[0].mxu0
        %v896 = vadd.f32 0.0, %v895
        %v897 = vpop.f32.mrb[0].mxu0
        %v898 = vpop.f32.mrb[0].mxu0
        %v899 = vpop.f32.mrb[0].mxu0
        %900 = vdwg.mxu0
        %v902 = vsel %vm713, %v857, 0
        %904 = vmatprep.subr.bf16.mxu0 0
        %905 = vmatpush1.bf16.msra.mxu0 %v855
        %906 = vmatprep.subr.bf16.mxu0 0
        %907 = vmatpush1.bf16.msra.mxu0 0
        %908 = vmatprep.subr.bf16.mxu0 0
        %909 = vmatpush1.bf16.msra.mxu0 0
        %910 = vmatprep.subr.bf16.mxu0 0
        %911 = vmatpush1.bf16.msra.mxu0 0
        %912 = vmatprep.subr.bf16.mxu0 0
        %913 = vmatpush1.bf16.msra.mxu0 0
        %914 = vmatprep.subr.bf16.mxu0 0
        %915 = vmatpush1.bf16.msra.mxu0 0
        %916 = vmatprep.subr.bf16.mxu0 0
        %917 = vmatpush1.bf16.msra.mxu0 0
        %918 = vmatprep.subr.bf16.mxu0 0
        %919 = vmatpush1.bf16.msra.mxu0 0
        %920 = vmatprep.subr.bf16.mxu0 0
        %921 = vmatpush1.bf16.msra.mxu0 0
        %922 = vmatprep.subr.bf16.mxu0 0
        %923 = vmatpush1.bf16.msra.mxu0 0
        %924 = vmatprep.subr.bf16.mxu0 0
        %925 = vmatpush1.bf16.msra.mxu0 0
        %926 = vmatprep.subr.bf16.mxu0 0
        %927 = vmatpush1.bf16.msra.mxu0 0
        %928 = vmatprep.subr.bf16.mxu0 0
        %929 = vmatpush1.bf16.msra.mxu0 0
        %930 = vmatprep.subr.bf16.mxu0 0
        %931 = vmatpush1.bf16.msra.mxu0 0
        %932 = vmatprep.subr.bf16.mxu0 0
        %933 = vmatpush1.bf16.msra.mxu0 0
        %934 = vmatprep.subr.bf16.mxu0 0
        %935 = vmatpush1.bf16.msra.mxu0 0
        %936 = vmatprep.mubr.bf16.mxu0 0
        %937 = vmatmul.mubr.bf16.gmra.mrb[0].mxu0 %v902
        %v938 = vpop.f32.mrb[0].mxu0
        %v939 = vadd.f32 0.0, %v938
        %v940 = vpop.f32.mrb[0].mxu0
        %v941 = vpop.f32.mrb[0].mxu0
        %v942 = vpop.f32.mrb[0].mxu0
        %943 = vdwg.mxu0
        %v944 = vmul.f32 %v896, %v896
        %v945 = vmul.f32 %v939, %v939
        %v946 = vsel %vm485, %v944, 0.0
        %947 = vadd.xlane.f32.xlu0 %v946
        %v948 = vpop.xlane.xlu0 %947
        %v949 = vsel %vm485, %v945, 0.0
        %950 = vadd.xlane.f32.xlu0 %v949
        %v951 = vpop.xlane.xlu0 %950
        %v952 = vadd.f32 %v948, 1e-30
        %v953 = vadd.f32 %v951, 1e-30
        %v954 = vrsqrt.pop %v952
        %v955 = vrsqrt.pop %v953
        %v956 = vmul.f32 %v896, %v954
        %v957 = vmul.f32 %v939, %v955
        %959 = vrot.lane.b32.xlu0 %v957, 16
        %v960 = vpop.permute.xlu0 %959
        %v962 = vsel %vm713, %v956, %v960
        %964 = vrot.lane.b32.xlu0 %v956, 112
        %v965 = vpop.permute.xlu0 %964
        %v967 = vsel %vm713, %v965, %v957
        %v968 = vpack.c.bf16 %v967, %v962
        %v969 = vld [vmem:[#allocation7] sm:$0xf]
        %v970 = vld [vmem:[#allocation7 + $0x4] sm:$0xf]
        %v971 = vld [vmem:[#allocation7 + $0x8] sm:$0xf]
        %v972 = vld [vmem:[#allocation7 + $0xc] sm:$0xf]
        %v977 = vunpack.c.l.b16 %v969
        %v978 = vunpack.c.l.b16 %v970
        %v979 = vunpack.c.l.b16 %v971
        %v980 = vunpack.c.l.b16 %v972
        %v981 = vpack.c.b16 %v978, %v977
        %v982 = vpack.c.b16 %v980, %v979
        %v986 = vsel %vm485, %v968, 0
        %988 = vmatprep.subr.bf16.mxu0 0
        %989 = vmatpush1.bf16.msra.mxu0 %v981
        %990 = vmatprep.subr.bf16.mxu0 0
        %991 = vmatpush1.bf16.msra.mxu0 %v982
        %992 = vmatprep.subr.bf16.mxu0 0
        %993 = vmatpush1.bf16.msra.mxu0 0
        %994 = vmatprep.subr.bf16.mxu0 0
        %995 = vmatpush1.bf16.msra.mxu0 0
        %996 = vmatprep.subr.bf16.mxu0 0
        %997 = vmatpush1.bf16.msra.mxu0 0
        %998 = vmatprep.subr.bf16.mxu0 0
        %999 = vmatpush1.bf16.msra.mxu0 0
        %1000 = vmatprep.subr.bf16.mxu0 0
        %1001 = vmatpush1.bf16.msra.mxu0 0
        %1002 = vmatprep.subr.bf16.mxu0 0
        %1003 = vmatpush1.bf16.msra.mxu0 0
        %1004 = vmatprep.subr.bf16.mxu0 0
        %1005 = vmatpush1.bf16.msra.mxu0 0
        %1006 = vmatprep.subr.bf16.mxu0 0
        %1007 = vmatpush1.bf16.msra.mxu0 0
        %1008 = vmatprep.subr.bf16.mxu0 0
        %1009 = vmatpush1.bf16.msra.mxu0 0
        %1010 = vmatprep.subr.bf16.mxu0 0
        %1011 = vmatpush1.bf16.msra.mxu0 0
        %1012 = vmatprep.subr.bf16.mxu0 0
        %1013 = vmatpush1.bf16.msra.mxu0 0
        %1014 = vmatprep.subr.bf16.mxu0 0
        %1015 = vmatpush1.bf16.msra.mxu0 0
        %1016 = vmatprep.subr.bf16.mxu0 0
        %1017 = vmatpush1.bf16.msra.mxu0 0
        %1018 = vmatprep.subr.bf16.mxu0 0
        %1019 = vmatpush1.bf16.msra.mxu0 0
        %1020 = vmatprep.mubr.bf16.mxu0 0
        %1021 = vmatmul.mubr.bf16.gmra.mrb[0].mxu0 %v986
        %v1022 = vpop.f32.mrb[0].mxu0
        %v1023 = vadd.f32 0.0, %v1022
        %v1024 = vpop.f32.mrb[0].mxu0
        %v1025 = vpop.f32.mrb[0].mxu0
        %v1026 = vadd.f32 0.0, %v1025
        %v1027 = vpop.f32.mrb[0].mxu0
        %1028 = vdwg.mxu0
        %v1029 = vmul.f32 %v1023, -2.0
        %v1030 = vmin.f32 %v1029, 40.0
        %v1031 = vmul.f32 %v1030, 1.442695
        %v1032 = vpow.pop %v1031
        %v1033 = vmul.f32 %v1026, 2.0
        %v1034 = vand.u32 2147483647, %v1033
        %vm1035 = vcmp.le.f32.partialorder %v1034, 0.7853982
        %vm1036 = vcmp.lt.s32.totalorder %v1033, 0
        %v1037 = vand.u32 %v1033, 2139095040
        %v1038 = vshrl.u32 %v1037, 23
        %v1039 = vsub.s32 %v1038, 127
        %v1040 = vand.u32 2147483647, %v1033
        %v1041 = vand.u32 %v1040, 8388607
        %v1042 = vor.u32 %v1041, 8388608
        %v1043 = vsub.s32 0, %v1042
        %v1044 = vadd.s32 %v1039, 1
        %vm1045 = vcmp.gt.s32.totalorder %v1044, 0
        %v1046 = vsel %vm1045, %v1044, 0
        %v1047 = vshrl.u32 %v1046, 5
        %v1048 = vand.u32 %v1046, 31
        %v1049 = vsub.s32 32, %v1048
        %v1050 = vshrl.u32 683565275, %v1049
        %v1051 = vshll.u32 683565275, %v1048
        %v1052 = vshrl.u32 2475754826, %v1049
        %v1053 = vor.u32 %v1051, %v1052
        %v1054 = vshll.u32 2475754826, %v1048
        %v1055 = vshrl.u32 2131351028, %v1049
        %v1056 = vor.u32 %v1054, %v1055
        %v1057 = vshll.u32 2131351028, %v1048
        %v1058 = vshrl.u32 2102212464, %v1049
        %v1059 = vor.u32 %v1057, %v1058
        %v1060 = vshll.u32 2102212464, %v1048
        %v1061 = vshrl.u32 920167782, %v1049
        %v1062 = vor.u32 %v1060, %v1061
        %v1063 = vshll.u32 920167782, %v1048
        %v1064 = vshrl.u32 1326507024, %v1049
        %v1065 = vor.u32 %v1063, %v1064
        %vm1066 = vcmp.lt.s32.totalorder %v1047, 1
        %vm1067 = vcmp.lt.s32.totalorder %v1047, 2
        %vm1068 = vcmp.lt.s32.totalorder %v1047, 3
        %vm1069 = vcmp.lt.s32.totalorder %v1047, 4
        %v1070 = vsel %vm1066, %v1050, %v1053
        %v1071 = vsel %vm1069, %v1059, 2102212464
        %v1072 = vsel %vm1068, %v1056, %v1071
        %v1073 = vsel %vm1067, %v1070, %v1072
        %v1074 = vsel %vm1066, %v1053, %v1056
        %v1075 = vsel %vm1069, %v1062, 920167782
        %v1076 = vsel %vm1068, %v1059, %v1075
        %v1077 = vsel %vm1067, %v1074, %v1076
        %v1078 = vsel %vm1066, %v1056, %v1059
        %v1079 = vsel %vm1069, %v1065, 1326507024
        %v1080 = vsel %vm1068, %v1062, %v1079
        %v1081 = vsel %vm1067, %v1078, %v1080
        %v1082 = vshll.u32 %v1042, 8
        %v1083 = vmul.u32.u64.compose %v1082, %v1081
        %v1084 = vextract.low.u32 %v1083
        %v1085 = vextract.high.u32 %v1083
        %v1086 = vmul.u32.u64.compose %v1082, %v1077
        %v1087 = vextract.low.u32 %v1086
        %v1088 = vextract.high.u32 %v1086
        %v1089 = vmul.u32 %v1082, %v1073
        %v1090 = vadd.s32 %v1085, %v1087
        %vm1091 = vc.u32 %v1085, %v1087
        %v1092 = vadd.s32 %v1088, 1
        %v1093 = vsel %vm1091, %v1092, %v1088
        %v1094 = vadd.s32 %v1089, %v1093
        %v1095 = vadd.s32 %v1094, 536870912
        %v1096 = vshrl.u32 %v1095, 30
        %v1097 = vshll.u32 %v1096, 30
        %v1098 = vsub.s32 %v1094, %v1097
        %vm1099 = vcmp.lt.s32.totalorder %v1098, 0
        %v1100 = vsub.s32 0, %v1098
        %v1101 = vsel %vm1099, %v1100, %v1098
        %v1102 = vclz %v1101
        %v1103 = vsub.s32 %v1102, 2
        %vm1104 = vcmp.gt.s32.totalorder 0, %v1103
        %v1105 = vsel %vm1104, 0, %v1103
        %v1106 = vsub.s32 32, %v1105
        %v1107 = vshll.u32 %v1098, %v1105
        %v1108 = vshrl.u32 %v1090, %v1106
        %v1109 = vor.u32 %v1107, %v1108
        %v1110 = vsub.s32 4294967266, %v1105
        %v1111 = vadd.s32 %v1110, 127
        %v1112 = vshll.u32 %v1111, 23
        %v1113 = vor.u32 4788187, %v1112
        %v1114 = vand.u32 2147483647, %v1113
        %v1116 = vcvt.s32.f32 %v1109
        %v1117 = vmul.f32 %v1116, %v1114
        %v1118 = vxor.u32 %v1117, 2147483648
        %v1119 = vsel %vm1036, %v1118, %v1117
        %v1120 = vsub.s32 4, %v1096
        %v1121 = vsel %vm1036, %v1120, %v1096
        %v1122 = vsel %vm1035, %v1033, %v1119
        %v1123 = vsel %vm1035, 0, %v1121
        %v1124 = vcosq.f32.pop %v1122
        %v1125 = vsinq.f32.pop %v1122
        %vm1126 = vweird.f32 %v1033
        %v1127 = vand.u32 %v1123, 3
        %vm1128 = vcmp.lt.s32.totalorder %v1127, 2
        %vm1129 = vcmp.eq.s32.totalorder %v1127, 0
        %v1130 = vxor.u32 %v1125, 2147483648
        %v1131 = vsel %vm1129, %v1124, %v1130
        %vm1132 = vcmp.eq.s32.totalorder %v1127, 2
        %v1133 = vxor.u32 %v1124, 2147483648
        %v1134 = vsel %vm1132, %v1133, %v1125
        %v1135 = vsel %vm1128, %v1131, %v1134
        %v1136 = vsel %vm1126, nan, %v1135
        %v1137 = vand.u32 2147483647, %v1033
        %vm1138 = vcmp.le.f32.partialorder %v1137, 0.7853982
        %vm1139 = vcmp.lt.s32.totalorder %v1033, 0
        %v1140 = vand.u32 %v1033, 2139095040
        %v1141 = vshrl.u32 %v1140, 23
        %v1142 = vsub.s32 %v1141, 127
        %v1143 = vand.u32 2147483647, %v1033
        %v1144 = vand.u32 %v1143, 8388607
        %v1145 = vor.u32 %v1144, 8388608
        %v1146 = vsub.s32 0, %v1145
        %v1147 = vadd.s32 %v1142, 1
        %vm1148 = vcmp.gt.s32.totalorder %v1147, 0
        %v1149 = vsel %vm1148, %v1147, 0
        %v1150 = vshrl.u32 %v1149, 5
        %v1151 = vand.u32 %v1149, 31
        %v1152 = vsub.s32 32, %v1151
        %v1153 = vshrl.u32 683565275, %v1152
        %v1154 = vshll.u32 683565275, %v1151
        %v1155 = vshrl.u32 2475754826, %v1152
        %v1156 = vor.u32 %v1154, %v1155
        %v1157 = vshll.u32 2475754826, %v1151
        %v1158 = vshrl.u32 2131351028, %v1152
        %v1159 = vor.u32 %v1157, %v1158
        %v1160 = vshll.u32 2131351028, %v1151
        %v1161 = vshrl.u32 2102212464, %v1152
        %v1162 = vor.u32 %v1160, %v1161
        %v1163 = vshll.u32 2102212464, %v1151
        %v1164 = vshrl.u32 920167782, %v1152
        %v1165 = vor.u32 %v1163, %v1164
        %v1166 = vshll.u32 920167782, %v1151
        %v1167 = vshrl.u32 1326507024, %v1152
        %v1168 = vor.u32 %v1166, %v1167
        %vm1169 = vcmp.lt.s32.totalorder %v1150, 1
        %vm1170 = vcmp.lt.s32.totalorder %v1150, 2
        %vm1171 = vcmp.lt.s32.totalorder %v1150, 3
        %vm1172 = vcmp.lt.s32.totalorder %v1150, 4
        %v1173 = vsel %vm1169, %v1153, %v1156
        %v1174 = vsel %vm1172, %v1162, 2102212464
        %v1175 = vsel %vm1171, %v1159, %v1174
        %v1176 = vsel %vm1170, %v1173, %v1175
        %v1177 = vsel %vm1169, %v1156, %v1159
        %v1178 = vsel %vm1172, %v1165, 920167782
        %v1179 = vsel %vm1171, %v1162, %v1178
        %v1180 = vsel %vm1170, %v1177, %v1179
        %v1181 = vsel %vm1169, %v1159, %v1162
        %v1182 = vsel %vm1172, %v1168, 1326507024
        %v1183 = vsel %vm1171, %v1165, %v1182
        %v1184 = vsel %vm1170, %v1181, %v1183
        %v1185 = vshll.u32 %v1145, 8
        %v1186 = vmul.u32.u64.compose %v1185, %v1184
        %v1187 = vextract.low.u32 %v1186
        %v1188 = vextract.high.u32 %v1186
        %v1189 = vmul.u32.u64.compose %v1185, %v1180
        %v1190 = vextract.low.u32 %v1189
        %v1191 = vextract.high.u32 %v1189
        %v1192 = vmul.u32 %v1185, %v1176
        %v1193 = vadd.s32 %v1188, %v1190
        %vm1194 = vc.u32 %v1188, %v1190
        %v1195 = vadd.s32 %v1191, 1
        %v1196 = vsel %vm1194, %v1195, %v1191
        %v1197 = vadd.s32 %v1192, %v1196
        %v1198 = vadd.s32 %v1197, 536870912
        %v1199 = vshrl.u32 %v1198, 30
        %v1200 = vshll.u32 %v1199, 30
        %v1201 = vsub.s32 %v1197, %v1200
        %vm1202 = vcmp.lt.s32.totalorder %v1201, 0
        %v1203 = vsub.s32 0, %v1201
        %v1204 = vsel %vm1202, %v1203, %v1201
        %v1205 = vclz %v1204
        %v1206 = vsub.s32 %v1205, 2
        %vm1207 = vcmp.gt.s32.totalorder 0, %v1206
        %v1208 = vsel %vm1207, 0, %v1206
        %v1209 = vsub.s32 32, %v1208
        %v1210 = vshll.u32 %v1201, %v1208
        %v1211 = vshrl.u32 %v1193, %v1209
        %v1212 = vor.u32 %v1210, %v1211
        %v1213 = vsub.s32 4294967266, %v1208
        %v1214 = vadd.s32 %v1213, 127
        %v1215 = vshll.u32 %v1214, 23
        %v1216 = vor.u32 4788187, %v1215
        %v1217 = vand.u32 2147483647, %v1216
        %v1219 = vcvt.s32.f32 %v1212
        %v1220 = vmul.f32 %v1219, %v1217
        %v1221 = vxor.u32 %v1220, 2147483648
        %v1222 = vsel %vm1139, %v1221, %v1220
        %v1223 = vsub.s32 4, %v1199
        %v1224 = vsel %vm1139, %v1223, %v1199
        %v1225 = vsel %vm1138, %v1033, %v1222
        %v1226 = vsel %vm1138, 0, %v1224
        %v1227 = vcosq.f32.pop %v1225
        %v1228 = vsinq.f32.pop %v1225
        %vm1229 = vweird.f32 %v1033
        %v1230 = vadd.s32 %v1226, 3
        %v1231 = vand.u32 %v1230, 3
        %vm1232 = vcmp.lt.s32.totalorder %v1231, 2
        %vm1233 = vcmp.eq.s32.totalorder %v1231, 0
        %v1234 = vxor.u32 %v1228, 2147483648
        %v1235 = vsel %vm1233, %v1227, %v1234
        %vm1236 = vcmp.eq.s32.totalorder %v1231, 2
        %v1237 = vxor.u32 %v1227, 2147483648
        %v1238 = vsel %vm1236, %v1237, %v1228
        %v1239 = vsel %vm1232, %v1235, %v1238
        %v1240 = vsel %vm1229, nan, %v1239
        %v1241 = vmul.f32 %v1032, %v1136
        %v1242 = vadd.f32 %v1241, 1.0
        %v1243 = vmul.f32 %v1032, %v1240
        %v1244 = vsub.f32 0.0, %v1243
        %v1245 = vmul.f32 %v1032, 2.0
        %v1246 = vmul.f32 %v1245, %v1136
        %v1247 = vadd.f32 %v1246, 1.0
        %v1248 = vmul.f32 %v1032, %v1032
        %v1249 = vadd.f32 %v1247, %v1248
        %v1250 = vrcp.pop %v1249
        %v1251 = vmul.f32 %v1023, %v1242
        %v1252 = vmul.f32 %v1026, %v1244
        %v1253 = vadd.f32 %v1251, %v1252
        %v1254 = vmul.f32 %v1253, %v1250
        %v1255 = vmul.f32 %v1026, %v1242
        %v1256 = vmul.f32 %v1023, %v1244
        %v1257 = vsub.f32 %v1255, %v1256
        %v1258 = vmul.f32 %v1257, %v1250
        %v1259 = vmul.f32 %v962, %v1254
        %v1260 = vmul.f32 %v967, %v1258
        %v1261 = vsub.f32 %v1259, %v1260
        %v1262 = vmul.f32 %v962, %v1258
        %v1263 = vmul.f32 %v967, %v1254
        %v1264 = vadd.f32 %v1262, %v1263
        %v1265 = vpack.c.bf16 %v1264, %v1261
        %v1266 = vld [vmem:[#allocation8] sm:$0xf]
        %v1267 = vld [vmem:[#allocation8 + $0x4] sm:$0xf]
        %v1268 = vld [vmem:[#allocation8 + $0x8] sm:$0xf]
        %v1269 = vld [vmem:[#allocation8 + $0xc] sm:$0xf]
        %v1274 = vunpack.c.l.b16 %v1266
        %v1275 = vunpack.c.l.b16 %v1267
        %v1276 = vunpack.c.l.b16 %v1268
        %v1277 = vunpack.c.l.b16 %v1269
        %v1278 = vpack.c.b16 %v1275, %v1274
        %v1279 = vpack.c.b16 %v1277, %v1276
        %v1283 = vsel %vm485, %v1265, 0
        %1285 = vmatprep.subr.bf16.mxu0 0
        %1286 = vmatpush1.bf16.msra.mxu0 %v1278
        %1287 = vmatprep.subr.bf16.mxu0 0
        %1288 = vmatpush1.bf16.msra.mxu0 %v1279
        %1289 = vmatprep.subr.bf16.mxu0 0
        %1290 = vmatpush1.bf16.msra.mxu0 0
        %1291 = vmatprep.subr.bf16.mxu0 0
        %1292 = vmatpush1.bf16.msra.mxu0 0
        %1293 = vmatprep.subr.bf16.mxu0 0
        %1294 = vmatpush1.bf16.msra.mxu0 0
        %1295 = vmatprep.subr.bf16.mxu0 0
        %1296 = vmatpush1.bf16.msra.mxu0 0
        %1297 = vmatprep.subr.bf16.mxu0 0
        %1298 = vmatpush1.bf16.msra.mxu0 0
        %1299 = vmatprep.subr.bf16.mxu0 0
        %1300 = vmatpush1.bf16.msra.mxu0 0
        %1301 = vmatprep.subr.bf16.mxu0 0
        %1302 = vmatpush1.bf16.msra.mxu0 0
        %1303 = vmatprep.subr.bf16.mxu0 0
        %1304 = vmatpush1.bf16.msra.mxu0 0
        %1305 = vmatprep.subr.bf16.mxu0 0
        %1306 = vmatpush1.bf16.msra.mxu0 0
        %1307 = vmatprep.subr.bf16.mxu0 0
        %1308 = vmatpush1.bf16.msra.mxu0 0
        %1309 = vmatprep.subr.bf16.mxu0 0
        %1310 = vmatpush1.bf16.msra.mxu0 0
        %1311 = vmatprep.subr.bf16.mxu0 0
        %1312 = vmatpush1.bf16.msra.mxu0 0
        %1313 = vmatprep.subr.bf16.mxu0 0
        %1314 = vmatpush1.bf16.msra.mxu0 0
        %1315 = vmatprep.subr.bf16.mxu0 0
        %1316 = vmatpush1.bf16.msra.mxu0 0
        %1317 = vmatprep.mubr.bf16.mxu0 0
        %1318 = vmatmul.mubr.bf16.gmra.mrb[0].mxu0 %v1283
        %v1319 = vpop.f32.mrb[0].mxu0
        %v1320 = vadd.f32 0.0, %v1319
        %v1321 = vpop.f32.mrb[0].mxu0
        %v1322 = vpop.f32.mrb[0].mxu0
        %v1323 = vadd.f32 0.0, %v1322
        %v1324 = vpop.f32.mrb[0].mxu0
        %1325 = vdwg.mxu0
        %v1326 = vadd.f32 %v480, %v1320
        %v1327 = vadd.f32 %v481, %v1323
        %v1328 = vmul.f32 %v1326, %v1326
        %v1329 = vmul.f32 %v1327, %v1327
        %v1330 = vadd.f32 %v1328, %v1329
        %v1331 = vsel %vm485, %v1330, 0.0
        %1332 = vadd.xlane.f32.xlu0 %v1331
        %v1333 = vpop.xlane.xlu0 %1332
        %v1334 = vadd.f32 %v1333, 1e-30
        %v1335 = vrsqrt.pop %v1334
        %v1336 = vmul.f32 %v1326, %v1335
        %v1337 = vmul.f32 %v1327, %v1335
        %v1338 = vpack.c.bf16 %v1337, %v1336
        %v1339 = vld [vmem:[#allocation10] sm:$0xf]
        %v1340 = vld [vmem:[#allocation10 + $0x4] sm:$0xf]
        %v1341 = vld [vmem:[#allocation10 + $0x8] sm:$0xf]
        %v1342 = vld [vmem:[#allocation10 + $0xc] sm:$0xf]
        %v1347 = vunpack.c.l.b16 %v1339
        %v1348 = vunpack.c.l.b16 %v1340
        %v1349 = vunpack.c.l.b16 %v1341
        %v1350 = vunpack.c.l.b16 %v1342
        %v1351 = vpack.c.b16 %v1348, %v1347
        %v1352 = vpack.c.b16 %v1350, %v1349
        %v1356 = vsel %vm485, %v1338, 0
        %1358 = vmatprep.subr.bf16.mxu0 0
        %1359 = vmatpush1.bf16.msra.mxu0 %v1351
        %1360 = vmatprep.subr.bf16.mxu0 0
        %1361 = vmatpush1.bf16.msra.mxu0 %v1352
        %1362 = vmatprep.subr.bf16.mxu0 0
        %1363 = vmatpush1.bf16.msra.mxu0 0
        %1364 = vmatprep.subr.bf16.mxu0 0
        %1365 = vmatpush1.bf16.msra.mxu0 0
        %1366 = vmatprep.subr.bf16.mxu0 0
        %1367 = vmatpush1.bf16.msra.mxu0 0
        %1368 = vmatprep.subr.bf16.mxu0 0
        %1369 = vmatpush1.bf16.msra.mxu0 0
        %1370 = vmatprep.subr.bf16.mxu0 0
        %1371 = vmatpush1.bf16.msra.mxu0 0
        %1372 = vmatprep.subr.bf16.mxu0 0
        %1373 = vmatpush1.bf16.msra.mxu0 0
        %1374 = vmatprep.subr.bf16.mxu0 0
        %1375 = vmatpush1.bf16.msra.mxu0 0
        %1376 = vmatprep.subr.bf16.mxu0 0
        %1377 = vmatpush1.bf16.msra.mxu0 0
        %1378 = vmatprep.subr.bf16.mxu0 0
        %1379 = vmatpush1.bf16.msra.mxu0 0
        %1380 = vmatprep.subr.bf16.mxu0 0
        %1381 = vmatpush1.bf16.msra.mxu0 0
        %1382 = vmatprep.subr.bf16.mxu0 0
        %1383 = vmatpush1.bf16.msra.mxu0 0
        %1384 = vmatprep.subr.bf16.mxu0 0
        %1385 = vmatpush1.bf16.msra.mxu0 0
        %1386 = vmatprep.subr.bf16.mxu0 0
        %1387 = vmatpush1.bf16.msra.mxu0 0
        %1388 = vmatprep.subr.bf16.mxu0 0
        %1389 = vmatpush1.bf16.msra.mxu0 0
        %1390 = vmatprep.mubr.bf16.mxu0 0
        %1391 = vmatmul.mubr.bf16.gmra.mrb[0].mxu0 %v1356
        %v1392 = vpop.f32.mrb[0].mxu0
        %v1393 = vadd.f32 0.0, %v1392
        %v1394 = vpop.f32.mrb[0].mxu0
        %v1395 = vpop.f32.mrb[0].mxu0
        %v1396 = vadd.f32 0.0, %v1395
        %v1397 = vpop.f32.mrb[0].mxu0
        %1398 = vdwg.mxu0
        %v1399 = vsub.f32 0.0, %v1393
        %v1400 = vmin.f32 %v1399, 40.0
        %v1401 = vmul.f32 %v1400, 1.442695
        %v1402 = vpow.pop %v1401
        %v1403 = vand.u32 2147483647, %v1396
        %vm1404 = vcmp.le.f32.partialorder %v1403, 0.7853982
        %vm1405 = vcmp.lt.s32.totalorder %v1396, 0
        %v1406 = vand.u32 %v1396, 2139095040
        %v1407 = vshrl.u32 %v1406, 23
        %v1408 = vsub.s32 %v1407, 127
        %v1409 = vand.u32 2147483647, %v1396
        %v1410 = vand.u32 %v1409, 8388607
        %v1411 = vor.u32 %v1410, 8388608
        %v1412 = vsub.s32 0, %v1411
        %v1413 = vadd.s32 %v1408, 1
        %vm1414 = vcmp.gt.s32.totalorder %v1413, 0
        %v1415 = vsel %vm1414, %v1413, 0
        %v1416 = vshrl.u32 %v1415, 5
        %v1417 = vand.u32 %v1415, 31
        %v1418 = vsub.s32 32, %v1417
        %v1419 = vshrl.u32 683565275, %v1418
        %v1420 = vshll.u32 683565275, %v1417
        %v1421 = vshrl.u32 2475754826, %v1418
        %v1422 = vor.u32 %v1420, %v1421
        %v1423 = vshll.u32 2475754826, %v1417
        %v1424 = vshrl.u32 2131351028, %v1418
        %v1425 = vor.u32 %v1423, %v1424
        %v1426 = vshll.u32 2131351028, %v1417
        %v1427 = vshrl.u32 2102212464, %v1418
        %v1428 = vor.u32 %v1426, %v1427
        %v1429 = vshll.u32 2102212464, %v1417
        %v1430 = vshrl.u32 920167782, %v1418
        %v1431 = vor.u32 %v1429, %v1430
        %v1432 = vshll.u32 920167782, %v1417
        %v1433 = vshrl.u32 1326507024, %v1418
        %v1434 = vor.u32 %v1432, %v1433
        %vm1435 = vcmp.lt.s32.totalorder %v1416, 1
        %vm1436 = vcmp.lt.s32.totalorder %v1416, 2
        %vm1437 = vcmp.lt.s32.totalorder %v1416, 3
        %vm1438 = vcmp.lt.s32.totalorder %v1416, 4
        %v1439 = vsel %vm1435, %v1419, %v1422
        %v1440 = vsel %vm1438, %v1428, 2102212464
        %v1441 = vsel %vm1437, %v1425, %v1440
        %v1442 = vsel %vm1436, %v1439, %v1441
        %v1443 = vsel %vm1435, %v1422, %v1425
        %v1444 = vsel %vm1438, %v1431, 920167782
        %v1445 = vsel %vm1437, %v1428, %v1444
        %v1446 = vsel %vm1436, %v1443, %v1445
        %v1447 = vsel %vm1435, %v1425, %v1428
        %v1448 = vsel %vm1438, %v1434, 1326507024
        %v1449 = vsel %vm1437, %v1431, %v1448
        %v1450 = vsel %vm1436, %v1447, %v1449
        %v1451 = vshll.u32 %v1411, 8
        %v1452 = vmul.u32.u64.compose %v1451, %v1450
        %v1453 = vextract.low.u32 %v1452
        %v1454 = vextract.high.u32 %v1452
        %v1455 = vmul.u32.u64.compose %v1451, %v1446
        %v1456 = vextract.low.u32 %v1455
        %v1457 = vextract.high.u32 %v1455
        %v1458 = vmul.u32 %v1451, %v1442
        %v1459 = vadd.s32 %v1454, %v1456
        %vm1460 = vc.u32 %v1454, %v1456
        %v1461 = vadd.s32 %v1457, 1
        %v1462 = vsel %vm1460, %v1461, %v1457
        %v1463 = vadd.s32 %v1458, %v1462
        %v1464 = vadd.s32 %v1463, 536870912
        %v1465 = vshrl.u32 %v1464, 30
        %v1466 = vshll.u32 %v1465, 30
        %v1467 = vsub.s32 %v1463, %v1466
        %vm1468 = vcmp.lt.s32.totalorder %v1467, 0
        %v1469 = vsub.s32 0, %v1467
        %v1470 = vsel %vm1468, %v1469, %v1467
        %v1471 = vclz %v1470
        %v1472 = vsub.s32 %v1471, 2
        %vm1473 = vcmp.gt.s32.totalorder 0, %v1472
        %v1474 = vsel %vm1473, 0, %v1472
        %v1475 = vsub.s32 32, %v1474
        %v1476 = vshll.u32 %v1467, %v1474
        %v1477 = vshrl.u32 %v1459, %v1475
        %v1478 = vor.u32 %v1476, %v1477
        %v1479 = vsub.s32 4294967266, %v1474
        %v1480 = vadd.s32 %v1479, 127
        %v1481 = vshll.u32 %v1480, 23
        %v1482 = vor.u32 4788187, %v1481
        %v1483 = vand.u32 2147483647, %v1482
        %v1485 = vcvt.s32.f32 %v1478
        %v1486 = vmul.f32 %v1485, %v1483
        %v1487 = vxor.u32 %v1486, 2147483648
        %v1488 = vsel %vm1405, %v1487, %v1486
        %v1489 = vsub.s32 4, %v1465
        %v1490 = vsel %vm1405, %v1489, %v1465
        %v1491 = vsel %vm1404, %v1396, %v1488
        %v1492 = vsel %vm1404, 0, %v1490
        %v1493 = vcosq.f32.pop %v1491
        %v1494 = vsinq.f32.pop %v1491
        %vm1495 = vweird.f32 %v1396
        %v1496 = vand.u32 %v1492, 3
        %vm1497 = vcmp.lt.s32.totalorder %v1496, 2
        %vm1498 = vcmp.eq.s32.totalorder %v1496, 0
        %v1499 = vxor.u32 %v1494, 2147483648
        %v1500 = vsel %vm1498, %v1493, %v1499
        %vm1501 = vcmp.eq.s32.totalorder %v1496, 2
        %v1502 = vxor.u32 %v1493, 2147483648
        %v1503 = vsel %vm1501, %v1502, %v1494
        %v1504 = vsel %vm1497, %v1500, %v1503
        %v1505 = vsel %vm1495, nan, %v1504
        %v1506 = vand.u32 2147483647, %v1396
        %vm1507 = vcmp.le.f32.partialorder %v1506, 0.7853982
        %vm1508 = vcmp.lt.s32.totalorder %v1396, 0
        %v1509 = vand.u32 %v1396, 2139095040
        %v1510 = vshrl.u32 %v1509, 23
        %v1511 = vsub.s32 %v1510, 127
        %v1512 = vand.u32 2147483647, %v1396
        %v1513 = vand.u32 %v1512, 8388607
        %v1514 = vor.u32 %v1513, 8388608
        %v1515 = vsub.s32 0, %v1514
        %v1516 = vadd.s32 %v1511, 1
        %vm1517 = vcmp.gt.s32.totalorder %v1516, 0
        %v1518 = vsel %vm1517, %v1516, 0
        %v1519 = vshrl.u32 %v1518, 5
        %v1520 = vand.u32 %v1518, 31
        %v1521 = vsub.s32 32, %v1520
        %v1522 = vshrl.u32 683565275, %v1521
        %v1523 = vshll.u32 683565275, %v1520
        %v1524 = vshrl.u32 2475754826, %v1521
        %v1525 = vor.u32 %v1523, %v1524
        %v1526 = vshll.u32 2475754826, %v1520
        %v1527 = vshrl.u32 2131351028, %v1521
        %v1528 = vor.u32 %v1526, %v1527
        %v1529 = vshll.u32 2131351028, %v1520
        %v1530 = vshrl.u32 2102212464, %v1521
        %v1531 = vor.u32 %v1529, %v1530
        %v1532 = vshll.u32 2102212464, %v1520
        %v1533 = vshrl.u32 920167782, %v1521
        %v1534 = vor.u32 %v1532, %v1533
        %v1535 = vshll.u32 920167782, %v1520
        %v1536 = vshrl.u32 1326507024, %v1521
        %v1537 = vor.u32 %v1535, %v1536
        %vm1538 = vcmp.lt.s32.totalorder %v1519, 1
        %vm1539 = vcmp.lt.s32.totalorder %v1519, 2
        %vm1540 = vcmp.lt.s32.totalorder %v1519, 3
        %vm1541 = vcmp.lt.s32.totalorder %v1519, 4
        %v1542 = vsel %vm1538, %v1522, %v1525
        %v1543 = vsel %vm1541, %v1531, 2102212464
        %v1544 = vsel %vm1540, %v1528, %v1543
        %v1545 = vsel %vm1539, %v1542, %v1544
        %v1546 = vsel %vm1538, %v1525, %v1528
        %v1547 = vsel %vm1541, %v1534, 920167782
        %v1548 = vsel %vm1540, %v1531, %v1547
        %v1549 = vsel %vm1539, %v1546, %v1548
        %v1550 = vsel %vm1538, %v1528, %v1531
        %v1551 = vsel %vm1541, %v1537, 1326507024
        %v1552 = vsel %vm1540, %v1534, %v1551
        %v1553 = vsel %vm1539, %v1550, %v1552
        %v1554 = vshll.u32 %v1514, 8
        %v1555 = vmul.u32.u64.compose %v1554, %v1553
        %v1556 = vextract.low.u32 %v1555
        %v1557 = vextract.high.u32 %v1555
        %v1558 = vmul.u32.u64.compose %v1554, %v1549
        %v1559 = vextract.low.u32 %v1558
        %v1560 = vextract.high.u32 %v1558
        %v1561 = vmul.u32 %v1554, %v1545
        %v1562 = vadd.s32 %v1557, %v1559
        %vm1563 = vc.u32 %v1557, %v1559
        %v1564 = vadd.s32 %v1560, 1
        %v1565 = vsel %vm1563, %v1564, %v1560
        %v1566 = vadd.s32 %v1561, %v1565
        %v1567 = vadd.s32 %v1566, 536870912
        %v1568 = vshrl.u32 %v1567, 30
        %v1569 = vshll.u32 %v1568, 30
        %v1570 = vsub.s32 %v1566, %v1569
        %vm1571 = vcmp.lt.s32.totalorder %v1570, 0
        %v1572 = vsub.s32 0, %v1570
        %v1573 = vsel %vm1571, %v1572, %v1570
        %v1574 = vclz %v1573
        %v1575 = vsub.s32 %v1574, 2
        %vm1576 = vcmp.gt.s32.totalorder 0, %v1575
        %v1577 = vsel %vm1576, 0, %v1575
        %v1578 = vsub.s32 32, %v1577
        %v1579 = vshll.u32 %v1570, %v1577
        %v1580 = vshrl.u32 %v1562, %v1578
        %v1581 = vor.u32 %v1579, %v1580
        %v1582 = vsub.s32 4294967266, %v1577
        %v1583 = vadd.s32 %v1582, 127
        %v1584 = vshll.u32 %v1583, 23
        %v1585 = vor.u32 4788187, %v1584
        %v1586 = vand.u32 2147483647, %v1585
        %v1588 = vcvt.s32.f32 %v1581
        %v1589 = vmul.f32 %v1588, %v1586
        %v1590 = vxor.u32 %v1589, 2147483648
        %v1591 = vsel %vm1508, %v1590, %v1589
        %v1592 = vsub.s32 4, %v1568
        %v1593 = vsel %vm1508, %v1592, %v1568
        %v1594 = vsel %vm1507, %v1396, %v1591
        %v1595 = vsel %vm1507, 0, %v1593
        %v1596 = vcosq.f32.pop %v1594
        %v1597 = vsinq.f32.pop %v1594
        %vm1598 = vweird.f32 %v1396
        %v1599 = vadd.s32 %v1595, 3
        %v1600 = vand.u32 %v1599, 3
        %vm1601 = vcmp.lt.s32.totalorder %v1600, 2
        %vm1602 = vcmp.eq.s32.totalorder %v1600, 0
        %v1603 = vxor.u32 %v1597, 2147483648
        %v1604 = vsel %vm1602, %v1596, %v1603
        %vm1605 = vcmp.eq.s32.totalorder %v1600, 2
        %v1606 = vxor.u32 %v1596, 2147483648
        %v1607 = vsel %vm1605, %v1606, %v1597
        %v1608 = vsel %vm1601, %v1604, %v1607
        %v1609 = vsel %vm1598, nan, %v1608
        %v1610 = vmul.f32 %v1402, %v1505
        %v1611 = vadd.f32 %v1610, 1.0
        %v1612 = vmul.f32 %v1402, %v1609
        %v1613 = vsub.f32 0.0, %v1612
        %v1614 = vmul.f32 %v1402, 2.0
        %v1615 = vmul.f32 %v1614, %v1505
        %v1616 = vadd.f32 %v1615, 1.0
        %v1617 = vmul.f32 %v1402, %v1402
        %v1618 = vadd.f32 %v1616, %v1617
        %v1619 = vrcp.pop %v1618
        %v1620 = vmul.f32 %v1393, %v1611
        %v1621 = vmul.f32 %v1396, %v1613
        %v1622 = vadd.f32 %v1620, %v1621
        %v1623 = vmul.f32 %v1622, %v1619
        %v1624 = vmul.f32 %v1396, %v1611
        %v1625 = vmul.f32 %v1393, %v1613
        %v1626 = vsub.f32 %v1624, %v1625
        %v1627 = vmul.f32 %v1626, %v1619
        %v1628 = vpack.c.bf16 %v1627, %v1623
        %v1629 = vld [vmem:[%s9] sm:$0xf]
        %v1630 = vld [vmem:[%s9 + $0x4] sm:$0xf]
        %v1631 = vld [vmem:[%s9 + $0x8] sm:$0xf]
        %v1632 = vld [vmem:[%s9 + $0xc] sm:$0xf]
        %v1633 = vld [vmem:[%s9 + $0x10] sm:$0xf]
        %v1634 = vld [vmem:[%s9 + $0x14] sm:$0xf]
        %v1635 = vld [vmem:[%s9 + $0x18] sm:$0xf]
        %v1636 = vld [vmem:[%s9 + $0x1c] sm:$0xf]
        %v1637 = vld [vmem:[%s9 + $0x20] sm:$0xf]
        %v1638 = vld [vmem:[%s9 + $0x24] sm:$0xf]
        %v1639 = vld [vmem:[%s9 + $0x28] sm:$0xf]
        %v1640 = vld [vmem:[%s9 + $0x2c] sm:$0xf]
        %v1641 = vld [vmem:[%s9 + $0x30] sm:$0xf]
        %v1642 = vld [vmem:[%s9 + $0x34] sm:$0xf]
        %v1643 = vld [vmem:[%s9 + $0x38] sm:$0xf]
        %v1644 = vld [vmem:[%s9 + $0x3c] sm:$0xf]
        %v1661 = vunpack.c.l.b16 %v1629
        %v1662 = vunpack.c.l.b16 %v1630
        %v1663 = vunpack.c.l.b16 %v1631
        %v1664 = vunpack.c.l.b16 %v1632
        %v1665 = vunpack.c.l.b16 %v1633
        %v1666 = vunpack.c.l.b16 %v1634
        %v1667 = vunpack.c.l.b16 %v1635
        %v1668 = vunpack.c.l.b16 %v1636
        %v1669 = vunpack.c.l.b16 %v1637
        %v1670 = vunpack.c.l.b16 %v1638
        %v1671 = vunpack.c.l.b16 %v1639
        %v1672 = vunpack.c.l.b16 %v1640
        %v1673 = vunpack.c.l.b16 %v1641
        %v1674 = vunpack.c.l.b16 %v1642
        %v1675 = vunpack.c.l.b16 %v1643
        %v1676 = vunpack.c.l.b16 %v1644
        %v1677 = vpack.c.b16 %v1662, %v1661
        %v1678 = vpack.c.b16 %v1664, %v1663
        %v1679 = vpack.c.b16 %v1666, %v1665
        %v1680 = vpack.c.b16 %v1668, %v1667
        %v1681 = vpack.c.b16 %v1670, %v1669
        %v1682 = vpack.c.b16 %v1672, %v1671
        %v1683 = vpack.c.b16 %v1674, %v1673
        %v1684 = vpack.c.b16 %v1676, %v1675
        %1693 = vmatprep.subr.bf16.mxu0 0
        %1694 = vmatpush1.bf16.msra.mxu0 %v1677
        %1695 = vmatprep.subr.bf16.mxu0 0
        %1696 = vmatpush1.bf16.msra.mxu0 %v1678
        %1697 = vmatprep.subr.bf16.mxu0 0
        %1698 = vmatpush1.bf16.msra.mxu0 %v1679
        %1699 = vmatprep.subr.bf16.mxu0 0
        %1700 = vmatpush1.bf16.msra.mxu0 %v1680
        %1701 = vmatprep.subr.bf16.mxu0 0
        %1702 = vmatpush1.bf16.msra.mxu0 %v1681
        %1703 = vmatprep.subr.bf16.mxu0 0
        %1704 = vmatpush1.bf16.msra.mxu0 %v1682
        %1705 = vmatprep.subr.bf16.mxu0 0
        %1706 = vmatpush1.bf16.msra.mxu0 %v1683
        %1707 = vmatprep.subr.bf16.mxu0 0
        %1708 = vmatpush1.bf16.msra.mxu0 %v1684
        %1709 = vmatprep.subr.bf16.mxu0 0
        %1710 = vmatpush1.bf16.msra.mxu0 0
        %1711 = vmatprep.subr.bf16.mxu0 0
        %1712 = vmatpush1.bf16.msra.mxu0 0
        %1713 = vmatprep.subr.bf16.mxu0 0
        %1714 = vmatpush1.bf16.msra.mxu0 0
        %1715 = vmatprep.subr.bf16.mxu0 0
        %1716 = vmatpush1.bf16.msra.mxu0 0
        %1717 = vmatprep.subr.bf16.mxu0 0
        %1718 = vmatpush1.bf16.msra.mxu0 0
        %1719 = vmatprep.subr.bf16.mxu0 0
        %1720 = vmatpush1.bf16.msra.mxu0 0
        %1721 = vmatprep.subr.bf16.mxu0 0
        %1722 = vmatpush1.bf16.msra.mxu0 0
        %1723 = vmatprep.subr.bf16.mxu0 0
        %1724 = vmatpush1.bf16.msra.mxu0 0
        %1725 = vmatprep.mubr.bf16.mxu0 0
        %1726 = vmatmul.mubr.bf16.gmra.mrb[0].mxu0 %v1628
        %v1727 = vpop.f32.mrb[0].mxu0
        %v1728 = vadd.f32 0.0, %v1727
        %v1729 = vpop.f32.mrb[0].mxu0
        %v1730 = vpop.f32.mrb[0].mxu0
        %v1731 = vadd.f32 0.0, %v1730
        %v1732 = vpop.f32.mrb[0].mxu0
        %1733 = vdwg.mxu0
        %v1734 = vadd.f32 %v1326, %v1728
        %1735 = vst.msk [vmem:[%s463] sm:$0xff] %vm485, %v1734
        %v1736 = vadd.f32 %v1327, %v1731
        %1737 = vst.msk [vmem:[%s470] sm:$0xff] %vm485, %v1736
        %s1738 = sand.u32 %s260, 1
        %s1739 = scalar_lea.sflag [#allocation4], %s1738
        %s1740 = sand.u32 %s260, 1
        %s1741 = smul.addr %s1740, 8
        %s1742 = scalar_lea.vmem [#allocation11], %s1741
        %s1743 = sand.u32 %s286, 1
        %s1744 = scalar_lea.sflag [#allocation13], %s1743
        %s1745 = sand.u32 %s286, 1
        %s1746 = smul.addr %s1745, 8
        %s1747 = scalar_lea.vmem [#allocation12], %s1746
        // Predicated region
        $region81: #{tpu_custom_call.1} parent=59 // pred_check
          %p1748 = pneg %p270
        $region82: #{tpu_custom_call.1} parent=59 // pred_check_branch
          %1750 = sbr.rel (%p1748) target = $region84
        $region83: #{tpu_custom_call.1} parent=59 // pred_region
          %s1752 = ssub.s32 128, 128
          %1753 = vsyncadd %s1739, %s1752
          %s1754 = smul.addr %s32, 128
          %s1755 = scalar_lea.hbm %s10, %s1754
          %s1757 = sshll.u32 %s1742, 4
          %s1758 = int_to_ptr.vmem [resolvable:$true] %s1757
          %1760 = dma.vmem_to_hbm [thread:$0]  %s1758, 128, %s1755, %s1739
        $region84: #{tpu_custom_call.1} parent=59 // pred_fallthru
          _
        // Predicated region
        $region85: #{tpu_custom_call.1} parent=59 // pred_check
          %p1761 = pneg %p296
        $region86: #{tpu_custom_call.1} parent=59 // pred_check_branch
          %1763 = sbr.rel (%p1761) target = $region88
        $region87: #{tpu_custom_call.1} parent=59 // pred_region
          %s1765 = ssub.s32 128, 128
          %1766 = vsyncadd %s1744, %s1765
          %s1767 = smul.addr %s32, 128
          %s1768 = scalar_lea.hbm %s11, %s1767
          %s1770 = sshll.u32 %s1747, 4
          %s1771 = int_to_ptr.vmem [resolvable:$true] %s1770
          %1773 = dma.vmem_to_hbm [thread:$0]  %s1771, 128, %s1768, %s1744
        $region88: #{tpu_custom_call.1} parent=59 // pred_fallthru
          _
      $region60: #{tpu_custom_call.1} parent=5 // pred_fallthru
        _
      %p1774 = scmp.le.s32.totalorder 2, %s27
      // Predicated region
      $region89: #{tpu_custom_call.1} parent=5 // pred_check
        %p1775 = pneg %p1774
      $region90: #{tpu_custom_call.1} parent=5 // pred_check_branch
        %1777 = sbr.rel (%p1775) target = $region92
      $region91: #{tpu_custom_call.1} parent=5 // pred_region
        %s1778 = ssub.s32 %s27, 2
        // Predicated region
        $region93: #{tpu_custom_call.1} parent=91 // pred_check
          %p1779 = pneg %p276
        $region94: #{tpu_custom_call.1} parent=91 // pred_check_branch
          %1781 = sbr.rel (%p1779) target = $region96
        $region95: #{tpu_custom_call.1} parent=91 // pred_region
          %s1782 = sand.u32 %s261, 1
          %s1783 = scalar_lea.sflag [#allocation4], %s1782
          %s1784 = sand.u32 %s261, 1
          %s1785 = smul.addr %s1784, 8
          %s1786 = scalar_lea.vmem [#allocation11], %s1785
          %1787 = dma.done %s1783, 128
        $region96: #{tpu_custom_call.1} parent=91 // pred_fallthru
          _
        // Predicated region
        $region97: #{tpu_custom_call.1} parent=91 // pred_check
          %p1788 = pneg %p302
        $region98: #{tpu_custom_call.1} parent=91 // pred_check_branch
          %1790 = sbr.rel (%p1788) target = $region100
        $region99: #{tpu_custom_call.1} parent=91 // pred_region
          %s1791 = sand.u32 %s287, 1
          %s1792 = scalar_lea.sflag [#allocation13], %s1791
          %s1793 = sand.u32 %s287, 1
          %s1794 = smul.addr %s1793, 8
          %s1795 = scalar_lea.vmem [#allocation12], %s1794
          %1796 = dma.done %s1792, 128
        $region100: #{tpu_custom_call.1} parent=91 // pred_fallthru
          _
      $region92: #{tpu_custom_call.1} parent=5 // pred_fallthru
        _
    $region6: #{tpu_custom_call.1} parent=1 // loop_footer
      %s31 = sadd.s32 1, %s27
    $region7: #{tpu_custom_call.1} parent=1 // loop_footer_branch
      %26 = sbr.rel target = $region3
    $region8: #{tpu_custom_call.1} parent=1 // loop_exit
      _
    %1797 = vsyncpa [#allocation3], 1
    %s1798 = scalar_lea.sflag [#allocation3], 1
    %1799 = vsyncpa %s1798, 1
    %1800 = vsyncpa [#allocation6], 1
    %1801 = vsyncpa [#allocation9], 1
    %1802 = vsyncpa [#allocation4], 1
    %s1803 = scalar_lea.sflag [#allocation4], 1
    %1804 = vsyncpa %s1803, 1
    %1805 = vsyncpa [#allocation13], 1
    %s1806 = scalar_lea.sflag [#allocation13], 1
    %1807 = vsyncpa %s1806, 1

</llo_original>
